<compile_context>
chip_gen: v7x
topology: tpu7x:2x2x1
jax: 0.10.0
libtpu: 0.0.40
codegen_flags: <defaults>
</compile_context>

<pallas_src>
import functools

import jax
import jax.numpy as jnp
from jax import lax
from jax.experimental import pallas as pl
from jax.experimental.pallas import tpu as pltpu


def _vmem():
    return pl.BlockSpec(memory_space=pltpu.MemorySpace.VMEM)


def _rnn_kernel(*refs, n_layers):
    # inputs : x (T,B,Cin), h0 (L,B,H), c0 (L,B,H),
    #          per layer: w_ih (Cin_l,4H), w_hh (H,4H), b (1,4H),
    #          w_fc (H,Cout), b_fc (1,Cout)
    # outputs: out (T,B,Cout), h_n (L,B,H), c_n (L,B,H)
    x_ref, h0_ref, c0_ref = refs[0:3]
    layer_refs = refs[3:3 + 3 * n_layers]
    w_fc_ref, b_fc_ref = refs[3 + 3 * n_layers:3 + 3 * n_layers + 2]
    out_ref, hn_ref, cn_ref = refs[3 + 3 * n_layers + 2:]

    T = x_ref.shape[0]
    H = hn_ref.shape[-1]

    # Load every weight once; they stay resident for the whole time loop.
    layers = []
    for l in range(n_layers):
        layers.append((layer_refs[3 * l][...],
                       layer_refs[3 * l + 1][...],
                       layer_refs[3 * l + 2][...]))
    w_fc = w_fc_ref[...]
    b_fc = b_fc_ref[...]

    def cell(x_t, h, c, w_ih, w_hh, b):
        # PyTorch gate order [i | f | g | o] along the lane axis (4H = 128 for H=32).
        gates = (jnp.dot(x_t, w_ih, preferred_element_type=jnp.float32)
                 + jnp.dot(h, w_hh, preferred_element_type=jnp.float32)
                 + b)
        i = jax.nn.sigmoid(gates[:, 0 * H:1 * H])
        f = jax.nn.sigmoid(gates[:, 1 * H:2 * H])
        g = jnp.tanh(gates[:, 2 * H:3 * H])
        o = jax.nn.sigmoid(gates[:, 3 * H:4 * H])
        c_new = f * c + i * g
        h_new = o * jnp.tanh(c_new)
        return h_new, c_new

    def step(t, carry):
        hs, cs = carry
        inp = x_ref[t]                                  # (B, Cin) of timestep t
        new_hs, new_cs = [], []
        for l in range(n_layers):                       # static Python loop over layers
            w_ih, w_hh, b = layers[l]
            h_new, c_new = cell(inp, hs[l], cs[l], w_ih, w_hh, b)
            new_hs.append(h_new)
            new_cs.append(c_new)
            inp = h_new
        out_ref[t] = jnp.dot(inp, w_fc, preferred_element_type=jnp.float32) + b_fc
        return (tuple(new_hs), tuple(new_cs))

    init = (tuple(h0_ref[l] for l in range(n_layers)),
            tuple(c0_ref[l] for l in range(n_layers)))
    hs, cs = lax.fori_loop(0, T, step, init, unroll=True)
    for l in range(n_layers):
        hn_ref[l] = hs[l]
        cn_ref[l] = cs[l]


def molecule_rnn_forward(params, x, hidden):
    """x: (B, T, chars), batch_first.  hidden = (h0, c0), each (n_layers, B, n_hidden)."""
    h0, c0 = hidden
    B, T, _ = x.shape
    n_layers = len(params["layers"])
    H = params["layers"][0]["w_hh"].shape[1]
    chars = params["fc_b"].shape[0]

    # Pack PyTorch-layout weights: (4H, Cin) -> (Cin, 4H) so 4H sits on lanes.
    packed = []
    for lyr in params["layers"]:
        packed.append(jnp.transpose(lyr["w_ih"]))                  # (Cin_l, 4H)
        packed.append(jnp.transpose(lyr["w_hh"]))                  # (H, 4H)
        packed.append((lyr["b_ih"] + lyr["b_hh"]).reshape(1, -1))  # (1, 4H)
    w_fc = jnp.transpose(params["fc_w"])                           # (H, chars)
    b_fc = params["fc_b"].reshape(1, -1)                           # (1, chars)

    x_tm = jnp.transpose(x, (1, 0, 2))                             # time-major (T, B, chars)

    n_in = 3 + 3 * n_layers + 2
    out_tm, h_n, c_n = pl.pallas_call(
        functools.partial(_rnn_kernel, n_layers=n_layers),
        out_shape=(
            jax.ShapeDtypeStruct((T, B, chars), jnp.float32),
            jax.ShapeDtypeStruct((n_layers, B, H), jnp.float32),
            jax.ShapeDtypeStruct((n_layers, B, H), jnp.float32),
        ),
        in_specs=[_vmem()] * n_in,
        out_specs=(_vmem(), _vmem(), _vmem()),
    )(x_tm, h0, c0, *packed, w_fc, b_fc)

    return jnp.transpose(out_tm, (1, 0, 2)), (h_n, c_n)


def init_hidden(batch, n_hidden, n_layers):
    z = jnp.zeros((n_layers, batch, n_hidden), jnp.float32)
    return (z, z)


def init_params(key, chars, n_hidden, n_layers):
    keys = jax.random.split(key, 4 * n_layers + 2)
    scale = 0.1
    layers = []
    k = 0
    for l in range(n_layers):
        in_dim = chars if l == 0 else n_hidden
        layers.append(dict(
            w_ih=scale * jax.random.normal(keys[k + 0], (4 * n_hidden, in_dim), jnp.float32),
            w_hh=scale * jax.random.normal(keys[k + 1], (4 * n_hidden, n_hidden), jnp.float32),
            b_ih=scale * jax.random.normal(keys[k + 2], (4 * n_hidden,), jnp.float32),
            b_hh=scale * jax.random.normal(keys[k + 3], (4 * n_hidden,), jnp.float32),
        ))
        k += 4
    fc_w = scale * jax.random.normal(keys[k], (chars, n_hidden), jnp.float32)
    fc_b = scale * jax.random.normal(keys[k + 1], (chars,), jnp.float32)
    return dict(layers=layers, fc_w=fc_w, fc_b=fc_b)


def _reference_forward(params, x, hidden):
    """Pure-JAX reference matching torch.nn.LSTM(batch_first=True) + Linear."""
    h0, c0 = hidden
    n_layers = len(params["layers"])

    def cell(x_t, h, c, lyr):
        gates = (x_t @ lyr["w_ih"].T + h @ lyr["w_hh"].T + lyr["b_ih"] + lyr["b_hh"])
        i, f, g, o = jnp.split(gates, 4, axis=-1)
        c_new = jax.nn.sigmoid(f) * c + jax.nn.sigmoid(i) * jnp.tanh(g)
        h_new = jax.nn.sigmoid(o) * jnp.tanh(c_new)
        return h_new, c_new

    def step(carry, x_t):
        hs, cs = carry
        inp = x_t
        new_hs, new_cs = [], []
        for l in range(n_layers):
            h_new, c_new = cell(inp, hs[l], cs[l], params["layers"][l])
            new_hs.append(h_new)
            new_cs.append(c_new)
            inp = h_new
        return (tuple(new_hs), tuple(new_cs)), inp

    init = (tuple(h0[l] for l in range(n_layers)),
            tuple(c0[l] for l in range(n_layers)))
    (hs, cs), ys = lax.scan(step, init, jnp.transpose(x, (1, 0, 2)))
    out = jnp.transpose(ys, (1, 0, 2)) @ params["fc_w"].T + params["fc_b"]
    return out, (jnp.stack(hs), jnp.stack(cs))


if __name__ == "__main__":
    CHARS, HIDDEN, LAYERS = 32, 32, 2   # small shapes consistent with the module
    B, T = 2, 8

    key = jax.random.PRNGKey(0)
    kx, kp = jax.random.split(key)
    params = init_params(kp, CHARS, HIDDEN, LAYERS)
    x = jax.random.normal(kx, (B, T, CHARS), jnp.float32)
    hidden = init_hidden(B, HIDDEN, LAYERS)

    out, (h_n, c_n) = jax.jit(molecule_rnn_forward)(params, x, hidden)
    out = jax.block_until_ready(out)

    assert out.shape == (B, T, CHARS)
    assert h_n.shape == (LAYERS, B, HIDDEN) and c_n.shape == (LAYERS, B, HIDDEN)
    assert bool(jnp.all(jnp.isfinite(out)))

    ref_out, (ref_h, ref_c) = _reference_forward(params, x, hidden)
    assert bool(jnp.allclose(out, ref_out, atol=1e-3, rtol=1e-3))
    assert bool(jnp.allclose(h_n, ref_h, atol=1e-3, rtol=1e-3))
    assert bool(jnp.allclose(c_n, ref_c, atol=1e-3, rtol=1e-3))

    print("KERNEL_OK")
</pallas_src>

<mosaic_0001>
module attributes {stable_mosaic.version = 11 : i64} {
  func.func @_rnn_kernel(%arg0: memref<8x2x32xf32, #tpu.memory_space<vmem>>, %arg1: memref<2x2x32xf32, #tpu.memory_space<vmem>>, %arg2: memref<2x2x32xf32, #tpu.memory_space<vmem>>, %arg3: memref<32x128xf32, #tpu.memory_space<vmem>>, %arg4: memref<32x128xf32, #tpu.memory_space<vmem>>, %arg5: memref<1x128xf32, #tpu.memory_space<vmem>>, %arg6: memref<32x128xf32, #tpu.memory_space<vmem>>, %arg7: memref<32x128xf32, #tpu.memory_space<vmem>>, %arg8: memref<1x128xf32, #tpu.memory_space<vmem>>, %arg9: memref<32x32xf32, #tpu.memory_space<vmem>>, %arg10: memref<1x32xf32, #tpu.memory_space<vmem>>, %arg11: memref<8x2x32xf32, #tpu.memory_space<vmem>>, %arg12: memref<2x2x32xf32, #tpu.memory_space<vmem>>, %arg13: memref<2x2x32xf32, #tpu.memory_space<vmem>>) attributes {dimension_semantics = [], scalar_prefetch = 0 : i64, scratch_operands = 0 : i64, tpu.core_type = #tpu.core_type<tc>} {
    %c0 = arith.constant 0 : index
    %c0_0 = arith.constant 0 : index
    %0 = vector.load %arg3[%c0, %c0_0] : memref<32x128xf32, #tpu.memory_space<vmem>>, vector<32x128xf32>
    %c0_1 = arith.constant 0 : index
    %c0_2 = arith.constant 0 : index
    %1 = vector.load %arg4[%c0_1, %c0_2] : memref<32x128xf32, #tpu.memory_space<vmem>>, vector<32x128xf32>
    %c0_3 = arith.constant 0 : index
    %c0_4 = arith.constant 0 : index
    %2 = vector.load %arg5[%c0_3, %c0_4] : memref<1x128xf32, #tpu.memory_space<vmem>>, vector<1x128xf32>
    %c0_5 = arith.constant 0 : index
    %c0_6 = arith.constant 0 : index
    %3 = vector.load %arg6[%c0_5, %c0_6] : memref<32x128xf32, #tpu.memory_space<vmem>>, vector<32x128xf32>
    %c0_7 = arith.constant 0 : index
    %c0_8 = arith.constant 0 : index
    %4 = vector.load %arg7[%c0_7, %c0_8] : memref<32x128xf32, #tpu.memory_space<vmem>>, vector<32x128xf32>
    %c0_9 = arith.constant 0 : index
    %c0_10 = arith.constant 0 : index
    %5 = vector.load %arg8[%c0_9, %c0_10] : memref<1x128xf32, #tpu.memory_space<vmem>>, vector<1x128xf32>
    %c0_11 = arith.constant 0 : index
    %c0_12 = arith.constant 0 : index
    %6 = vector.load %arg9[%c0_11, %c0_12] : memref<32x32xf32, #tpu.memory_space<vmem>>, vector<32x32xf32>
    %c0_13 = arith.constant 0 : index
    %c0_14 = arith.constant 0 : index
    %7 = vector.load %arg10[%c0_13, %c0_14] : memref<1x32xf32, #tpu.memory_space<vmem>>, vector<1x32xf32>
    %c0_15 = arith.constant 0 : index
    %c0_16 = arith.constant 0 : index
    %c0_17 = arith.constant 0 : index
    %8 = vector.load %arg1[%c0_15, %c0_16, %c0_17] : memref<2x2x32xf32, #tpu.memory_space<vmem>>, vector<1x2x32xf32>
    %9 = vector.shape_cast %8 : vector<1x2x32xf32> to vector<2x32xf32>
    %c1 = arith.constant 1 : index
    %c0_18 = arith.constant 0 : index
    %c0_19 = arith.constant 0 : index
    %10 = vector.load %arg1[%c1, %c0_18, %c0_19] : memref<2x2x32xf32, #tpu.memory_space<vmem>>, vector<1x2x32xf32>
    %11 = vector.shape_cast %10 : vector<1x2x32xf32> to vector<2x32xf32>
    %c0_20 = arith.constant 0 : index
    %c0_21 = arith.constant 0 : index
    %c0_22 = arith.constant 0 : index
    %12 = vector.load %arg2[%c0_20, %c0_21, %c0_22] : memref<2x2x32xf32, #tpu.memory_space<vmem>>, vector<1x2x32xf32>
    %13 = vector.shape_cast %12 : vector<1x2x32xf32> to vector<2x32xf32>
    %c1_23 = arith.constant 1 : index
    %c0_24 = arith.constant 0 : index
    %c0_25 = arith.constant 0 : index
    %14 = vector.load %arg2[%c1_23, %c0_24, %c0_25] : memref<2x2x32xf32, #tpu.memory_space<vmem>>, vector<1x2x32xf32>
    %15 = vector.shape_cast %14 : vector<1x2x32xf32> to vector<2x32xf32>
    %c0_i32 = arith.constant 0 : i32
    %16 = arith.index_cast %c0_i32 : i32 to index
    %c0_26 = arith.constant 0 : index
    %c0_27 = arith.constant 0 : index
    %17 = vector.load %arg0[%16, %c0_26, %c0_27] : memref<8x2x32xf32, #tpu.memory_space<vmem>>, vector<1x2x32xf32>
    %18 = vector.shape_cast %17 : vector<1x2x32xf32> to vector<2x32xf32>
    %cst = arith.constant dense<0.000000e+00> : vector<2x128xf32>
    %19 = tpu.matmul %18, %0, %cst {dimension_numbers = #tpu.dot_dimension_numbers<[1], [0], [0], [1], [0, 0, 1, 1], [], []>} : vector<2x32xf32>, vector<32x128xf32>, vector<2x128xf32> -> vector<2x128xf32>
    %cst_28 = arith.constant dense<0.000000e+00> : vector<2x128xf32>
    %20 = tpu.matmul %9, %1, %cst_28 {dimension_numbers = #tpu.dot_dimension_numbers<[1], [0], [0], [1], [0, 0, 1, 1], [], []>} : vector<2x32xf32>, vector<32x128xf32>, vector<2x128xf32> -> vector<2x128xf32>
    %21 = arith.addf %19, %20 : vector<2x128xf32>
    %22 = vector.broadcast %2 : vector<1x128xf32> to vector<2x128xf32>
    %23 = arith.addf %21, %22 : vector<2x128xf32>
    %24 = vector.extract_strided_slice %23 {offsets = [0, 0], sizes = [2, 32], strides = [1, 1]} : vector<2x128xf32> to vector<2x32xf32>
    %25 = arith.negf %24 : vector<2x32xf32>
    %26 = math.exp %25 : vector<2x32xf32>
    %cst_29 = arith.constant 1.000000e+00 : f32
    %27 = vector.broadcast %cst_29 : f32 to vector<2x32xf32>
    %28 = arith.addf %27, %26 : vector<2x32xf32>
    %29 = arith.divf %27, %28 : vector<2x32xf32>
    %30 = vector.extract_strided_slice %23 {offsets = [0, 32], sizes = [2, 32], strides = [1, 1]} : vector<2x128xf32> to vector<2x32xf32>
    %31 = arith.negf %30 : vector<2x32xf32>
    %32 = math.exp %31 : vector<2x32xf32>
    %cst_30 = arith.constant 1.000000e+00 : f32
    %33 = vector.broadcast %cst_30 : f32 to vector<2x32xf32>
    %34 = arith.addf %33, %32 : vector<2x32xf32>
    %35 = arith.divf %33, %34 : vector<2x32xf32>
    %36 = vector.extract_strided_slice %23 {offsets = [0, 64], sizes = [2, 32], strides = [1, 1]} : vector<2x128xf32> to vector<2x32xf32>
    %37 = math.tanh %36 : vector<2x32xf32>
    %38 = vector.extract_strided_slice %23 {offsets = [0, 96], sizes = [2, 32], strides = [1, 1]} : vector<2x128xf32> to vector<2x32xf32>
    %39 = arith.negf %38 : vector<2x32xf32>
    %40 = math.exp %39 : vector<2x32xf32>
    %cst_31 = arith.constant 1.000000e+00 : f32
    %41 = vector.broadcast %cst_31 : f32 to vector<2x32xf32>
    %42 = arith.addf %41, %40 : vector<2x32xf32>
    %43 = arith.divf %41, %42 : vector<2x32xf32>
    %44 = arith.mulf %35, %13 : vector<2x32xf32>
    %45 = arith.mulf %29, %37 : vector<2x32xf32>
    %46 = arith.addf %44, %45 : vector<2x32xf32>
    %47 = math.tanh %46 : vector<2x32xf32>
    %48 = arith.mulf %43, %47 : vector<2x32xf32>
    %cst_32 = arith.constant dense<0.000000e+00> : vector<2x128xf32>
    %49 = tpu.matmul %48, %3, %cst_32 {dimension_numbers = #tpu.dot_dimension_numbers<[1], [0], [0], [1], [0, 0, 1, 1], [], []>} : vector<2x32xf32>, vector<32x128xf32>, vector<2x128xf32> -> vector<2x128xf32>
    %cst_33 = arith.constant dense<0.000000e+00> : vector<2x128xf32>
    %50 = tpu.matmul %11, %4, %cst_33 {dimension_numbers = #tpu.dot_dimension_numbers<[1], [0], [0], [1], [0, 0, 1, 1], [], []>} : vector<2x32xf32>, vector<32x128xf32>, vector<2x128xf32> -> vector<2x128xf32>
    %51 = arith.addf %49, %50 : vector<2x128xf32>
    %52 = vector.broadcast %5 : vector<1x128xf32> to vector<2x128xf32>
    %53 = arith.addf %51, %52 : vector<2x128xf32>
    %54 = vector.extract_strided_slice %53 {offsets = [0, 0], sizes = [2, 32], strides = [1, 1]} : vector<2x128xf32> to vector<2x32xf32>
    %55 = arith.negf %54 : vector<2x32xf32>
    %56 = math.exp %55 : vector<2x32xf32>
    %cst_34 = arith.constant 1.000000e+00 : f32
    %57 = vector.broadcast %cst_34 : f32 to vector<2x32xf32>
    %58 = arith.addf %57, %56 : vector<2x32xf32>
    %59 = arith.divf %57, %58 : vector<2x32xf32>
    %60 = vector.extract_strided_slice %53 {offsets = [0, 32], sizes = [2, 32], strides = [1, 1]} : vector<2x128xf32> to vector<2x32xf32>
    %61 = arith.negf %60 : vector<2x32xf32>
    %62 = math.exp %61 : vector<2x32xf32>
    %cst_35 = arith.constant 1.000000e+00 : f32
    %63 = vector.broadcast %cst_35 : f32 to vector<2x32xf32>
    %64 = arith.addf %63, %62 : vector<2x32xf32>
    %65 = arith.divf %63, %64 : vector<2x32xf32>
    %66 = vector.extract_strided_slice %53 {offsets = [0, 64], sizes = [2, 32], strides = [1, 1]} : vector<2x128xf32> to vector<2x32xf32>
    %67 = math.tanh %66 : vector<2x32xf32>
    %68 = vector.extract_strided_slice %53 {offsets = [0, 96], sizes = [2, 32], strides = [1, 1]} : vector<2x128xf32> to vector<2x32xf32>
    %69 = arith.negf %68 : vector<2x32xf32>
    %70 = math.exp %69 : vector<2x32xf32>
    %cst_36 = arith.constant 1.000000e+00 : f32
    %71 = vector.broadcast %cst_36 : f32 to vector<2x32xf32>
    %72 = arith.addf %71, %70 : vector<2x32xf32>
    %73 = arith.divf %71, %72 : vector<2x32xf32>
    %74 = arith.mulf %65, %15 : vector<2x32xf32>
    %75 = arith.mulf %59, %67 : vector<2x32xf32>
    %76 = arith.addf %74, %75 : vector<2x32xf32>
    %77 = math.tanh %76 : vector<2x32xf32>
    %78 = arith.mulf %73, %77 : vector<2x32xf32>
    %cst_37 = arith.constant dense<0.000000e+00> : vector<2x32xf32>
    %79 = tpu.matmul %78, %6, %cst_37 {dimension_numbers = #tpu.dot_dimension_numbers<[1], [0], [0], [1], [0, 0, 1, 1], [], []>} : vector<2x32xf32>, vector<32x32xf32>, vector<2x32xf32> -> vector<2x32xf32>
    %80 = vector.broadcast %7 : vector<1x32xf32> to vector<2x32xf32>
    %81 = arith.addf %79, %80 : vector<2x32xf32>
    %82 = arith.index_cast %c0_i32 : i32 to index
    %c0_38 = arith.constant 0 : index
    %c0_39 = arith.constant 0 : index
    %83 = vector.load %arg11[%82, %c0_38, %c0_39] : memref<8x2x32xf32, #tpu.memory_space<vmem>>, vector<1x2x32xf32>
    %84 = vector.shape_cast %83 : vector<1x2x32xf32> to vector<2x32xf32>
    %85 = vector.shape_cast %81 : vector<2x32xf32> to vector<1x2x32xf32>
    tpu.vector_store %arg11[%82, %c0_38, %c0_39], %85 {strides = array<i32>} : memref<8x2x32xf32, #tpu.memory_space<vmem>>, vector<1x2x32xf32>,
    %c1_i32 = arith.constant 1 : i32
    %86 = arith.index_cast %c1_i32 : i32 to index
    %c0_40 = arith.constant 0 : index
    %c0_41 = arith.constant 0 : index
    %87 = vector.load %arg0[%86, %c0_40, %c0_41] : memref<8x2x32xf32, #tpu.memory_space<vmem>>, vector<1x2x32xf32>
    %88 = vector.shape_cast %87 : vector<1x2x32xf32> to vector<2x32xf32>
    %cst_42 = arith.constant dense<0.000000e+00> : vector<2x128xf32>
    %89 = tpu.matmul %88, %0, %cst_42 {dimension_numbers = #tpu.dot_dimension_numbers<[1], [0], [0], [1], [0, 0, 1, 1], [], []>} : vector<2x32xf32>, vector<32x128xf32>, vector<2x128xf32> -> vector<2x128xf32>
    %cst_43 = arith.constant dense<0.000000e+00> : vector<2x128xf32>
    %90 = tpu.matmul %48, %1, %cst_43 {dimension_numbers = #tpu.dot_dimension_numbers<[1], [0], [0], [1], [0, 0, 1, 1], [], []>} : vector<2x32xf32>, vector<32x128xf32>, vector<2x128xf32> -> vector<2x128xf32>
    %91 = arith.addf %89, %90 : vector<2x128xf32>
    %92 = vector.broadcast %2 : vector<1x128xf32> to vector<2x128xf32>
    %93 = arith.addf %91, %92 : vector<2x128xf32>
    %94 = vector.extract_strided_slice %93 {offsets = [0, 0], sizes = [2, 32], strides = [1, 1]} : vector<2x128xf32> to vector<2x32xf32>
    %95 = arith.negf %94 : vector<2x32xf32>
    %96 = math.exp %95 : vector<2x32xf32>
    %cst_44 = arith.constant 1.000000e+00 : f32
    %97 = vector.broadcast %cst_44 : f32 to vector<2x32xf32>
    %98 = arith.addf %97, %96 : vector<2x32xf32>
    %99 = arith.divf %97, %98 : vector<2x32xf32>
    %100 = vector.extract_strided_slice %93 {offsets = [0, 32], sizes = [2, 32], strides = [1, 1]} : vector<2x128xf32> to vector<2x32xf32>
    %101 = arith.negf %100 : vector<2x32xf32>
    %102 = math.exp %101 : vector<2x32xf32>
    %cst_45 = arith.constant 1.000000e+00 : f32
    %103 = vector.broadcast %cst_45 : f32 to vector<2x32xf32>
    %104 = arith.addf %103, %102 : vector<2x32xf32>
    %105 = arith.divf %103, %104 : vector<2x32xf32>
    %106 = vector.extract_strided_slice %93 {offsets = [0, 64], sizes = [2, 32], strides = [1, 1]} : vector<2x128xf32> to vector<2x32xf32>
    %107 = math.tanh %106 : vector<2x32xf32>
    %108 = vector.extract_strided_slice %93 {offsets = [0, 96], sizes = [2, 32], strides = [1, 1]} : vector<2x128xf32> to vector<2x32xf32>
    %109 = arith.negf %108 : vector<2x32xf32>
    %110 = math.exp %109 : vector<2x32xf32>
    %cst_46 = arith.constant 1.000000e+00 : f32
    %111 = vector.broadcast %cst_46 : f32 to vector<2x32xf32>
    %112 = arith.addf %111, %110 : vector<2x32xf32>
    %113 = arith.divf %111, %112 : vector<2x32xf32>
    %114 = arith.mulf %105, %46 : vector<2x32xf32>
    %115 = arith.mulf %99, %107 : vector<2x32xf32>
    %116 = arith.addf %114, %115 : vector<2x32xf32>
    %117 = math.tanh %116 : vector<2x32xf32>
    %118 = arith.mulf %113, %117 : vector<2x32xf32>
    %cst_47 = arith.constant dense<0.000000e+00> : vector<2x128xf32>
    %119 = tpu.matmul %118, %3, %cst_47 {dimension_numbers = #tpu.dot_dimension_numbers<[1], [0], [0], [1], [0, 0, 1, 1], [], []>} : vector<2x32xf32>, vector<32x128xf32>, vector<2x128xf32> -> vector<2x128xf32>
    %cst_48 = arith.constant dense<0.000000e+00> : vector<2x128xf32>
    %120 = tpu.matmul %78, %4, %cst_48 {dimension_numbers = #tpu.dot_dimension_numbers<[1], [0], [0], [1], [0, 0, 1, 1], [], []>} : vector<2x32xf32>, vector<32x128xf32>, vector<2x128xf32> -> vector<2x128xf32>
    %121 = arith.addf %119, %120 : vector<2x128xf32>
    %122 = vector.broadcast %5 : vector<1x128xf32> to vector<2x128xf32>
    %123 = arith.addf %121, %122 : vector<2x128xf32>
    %124 = vector.extract_strided_slice %123 {offsets = [0, 0], sizes = [2, 32], strides = [1, 1]} : vector<2x128xf32> to vector<2x32xf32>
    %125 = arith.negf %124 : vector<2x32xf32>
    %126 = math.exp %125 : vector<2x32xf32>
    %cst_49 = arith.constant 1.000000e+00 : f32
    %127 = vector.broadcast %cst_49 : f32 to vector<2x32xf32>
    %128 = arith.addf %127, %126 : vector<2x32xf32>
    %129 = arith.divf %127, %128 : vector<2x32xf32>
    %130 = vector.extract_strided_slice %123 {offsets = [0, 32], sizes = [2, 32], strides = [1, 1]} : vector<2x128xf32> to vector<2x32xf32>
    %131 = arith.negf %130 : vector<2x32xf32>
    %132 = math.exp %131 : vector<2x32xf32>
    %cst_50 = arith.constant 1.000000e+00 : f32
    %133 = vector.broadcast %cst_50 : f32 to vector<2x32xf32>
    %134 = arith.addf %133, %132 : vector<2x32xf32>
    %135 = arith.divf %133, %134 : vector<2x32xf32>
    %136 = vector.extract_strided_slice %123 {offsets = [0, 64], sizes = [2, 32], strides = [1, 1]} : vector<2x128xf32> to vector<2x32xf32>
    %137 = math.tanh %136 : vector<2x32xf32>
    %138 = vector.extract_strided_slice %123 {offsets = [0, 96], sizes = [2, 32], strides = [1, 1]} : vector<2x128xf32> to vector<2x32xf32>
    %139 = arith.negf %138 : vector<2x32xf32>
    %140 = math.exp %139 : vector<2x32xf32>
    %cst_51 = arith.constant 1.000000e+00 : f32
    %141 = vector.broadcast %cst_51 : f32 to vector<2x32xf32>
    %142 = arith.addf %141, %140 : vector<2x32xf32>
    %143 = arith.divf %141, %142 : vector<2x32xf32>
    %144 = arith.mulf %135, %76 : vector<2x32xf32>
    %145 = arith.mulf %129, %137 : vector<2x32xf32>
    %146 = arith.addf %144, %145 : vector<2x32xf32>
    %147 = math.tanh %146 : vector<2x32xf32>
    %148 = arith.mulf %143, %147 : vector<2x32xf32>
    %cst_52 = arith.constant dense<0.000000e+00> : vector<2x32xf32>
    %149 = tpu.matmul %148, %6, %cst_52 {dimension_numbers = #tpu.dot_dimension_numbers<[1], [0], [0], [1], [0, 0, 1, 1], [], []>} : vector<2x32xf32>, vector<32x32xf32>, vector<2x32xf32> -> vector<2x32xf32>
    %150 = vector.broadcast %7 : vector<1x32xf32> to vector<2x32xf32>
    %151 = arith.addf %149, %150 : vector<2x32xf32>
    %152 = arith.index_cast %c1_i32 : i32 to index
    %c0_53 = arith.constant 0 : index
    %c0_54 = arith.constant 0 : index
    %153 = vector.load %arg11[%152, %c0_53, %c0_54] : memref<8x2x32xf32, #tpu.memory_space<vmem>>, vector<1x2x32xf32>
    %154 = vector.shape_cast %153 : vector<1x2x32xf32> to vector<2x32xf32>
    %155 = vector.shape_cast %151 : vector<2x32xf32> to vector<1x2x32xf32>
    tpu.vector_store %arg11[%152, %c0_53, %c0_54], %155 {strides = array<i32>} : memref<8x2x32xf32, #tpu.memory_space<vmem>>, vector<1x2x32xf32>,
    %c2_i32 = arith.constant 2 : i32
    %156 = arith.index_cast %c2_i32 : i32 to index
    %c0_55 = arith.constant 0 : index
    %c0_56 = arith.constant 0 : index
    %157 = vector.load %arg0[%156, %c0_55, %c0_56] : memref<8x2x32xf32, #tpu.memory_space<vmem>>, vector<1x2x32xf32>
    %158 = vector.shape_cast %157 : vector<1x2x32xf32> to vector<2x32xf32>
    %cst_57 = arith.constant dense<0.000000e+00> : vector<2x128xf32>
    %159 = tpu.matmul %158, %0, %cst_57 {dimension_numbers = #tpu.dot_dimension_numbers<[1], [0], [0], [1], [0, 0, 1, 1], [], []>} : vector<2x32xf32>, vector<32x128xf32>, vector<2x128xf32> -> vector<2x128xf32>
    %cst_58 = arith.constant dense<0.000000e+00> : vector<2x128xf32>
    %160 = tpu.matmul %118, %1, %cst_58 {dimension_numbers = #tpu.dot_dimension_numbers<[1], [0], [0], [1], [0, 0, 1, 1], [], []>} : vector<2x32xf32>, vector<32x128xf32>, vector<2x128xf32> -> vector<2x128xf32>
    %161 = arith.addf %159, %160 : vector<2x128xf32>
    %162 = vector.broadcast %2 : vector<1x128xf32> to vector<2x128xf32>
    %163 = arith.addf %161, %162 : vector<2x128xf32>
    %164 = vector.extract_strided_slice %163 {offsets = [0, 0], sizes = [2, 32], strides = [1, 1]} : vector<2x128xf32> to vector<2x32xf32>
    %165 = arith.negf %164 : vector<2x32xf32>
    %166 = math.exp %165 : vector<2x32xf32>
    %cst_59 = arith.constant 1.000000e+00 : f32
    %167 = vector.broadcast %cst_59 : f32 to vector<2x32xf32>
    %168 = arith.addf %167, %166 : vector<2x32xf32>
    %169 = arith.divf %167, %168 : vector<2x32xf32>
    %170 = vector.extract_strided_slice %163 {offsets = [0, 32], sizes = [2, 32], strides = [1, 1]} : vector<2x128xf32> to vector<2x32xf32>
    %171 = arith.negf %170 : vector<2x32xf32>
    %172 = math.exp %171 : vector<2x32xf32>
    %cst_60 = arith.constant 1.000000e+00 : f32
    %173 = vector.broadcast %cst_60 : f32 to vector<2x32xf32>
    %174 = arith.addf %173, %172 : vector<2x32xf32>
    %175 = arith.divf %173, %174 : vector<2x32xf32>
    %176 = vector.extract_strided_slice %163 {offsets = [0, 64], sizes = [2, 32], strides = [1, 1]} : vector<2x128xf32> to vector<2x32xf32>
    %177 = math.tanh %176 : vector<2x32xf32>
    %178 = vector.extract_strided_slice %163 {offsets = [0, 96], sizes = [2, 32], strides = [1, 1]} : vector<2x128xf32> to vector<2x32xf32>
    %179 = arith.negf %178 : vector<2x32xf32>
    %180 = math.exp %179 : vector<2x32xf32>
    %cst_61 = arith.constant 1.000000e+00 : f32
    %181 = vector.broadcast %cst_61 : f32 to vector<2x32xf32>
    %182 = arith.addf %181, %180 : vector<2x32xf32>
    %183 = arith.divf %181, %182 : vector<2x32xf32>
    %184 = arith.mulf %175, %116 : vector<2x32xf32>
    %185 = arith.mulf %169, %177 : vector<2x32xf32>
    %186 = arith.addf %184, %185 : vector<2x32xf32>
    %187 = math.tanh %186 : vector<2x32xf32>
    %188 = arith.mulf %183, %187 : vector<2x32xf32>
    %cst_62 = arith.constant dense<0.000000e+00> : vector<2x128xf32>
    %189 = tpu.matmul %188, %3, %cst_62 {dimension_numbers = #tpu.dot_dimension_numbers<[1], [0], [0], [1], [0, 0, 1, 1], [], []>} : vector<2x32xf32>, vector<32x128xf32>, vector<2x128xf32> -> vector<2x128xf32>
    %cst_63 = arith.constant dense<0.000000e+00> : vector<2x128xf32>
    %190 = tpu.matmul %148, %4, %cst_63 {dimension_numbers = #tpu.dot_dimension_numbers<[1], [0], [0], [1], [0, 0, 1, 1], [], []>} : vector<2x32xf32>, vector<32x128xf32>, vector<2x128xf32> -> vector<2x128xf32>
    %191 = arith.addf %189, %190 : vector<2x128xf32>
    %192 = vector.broadcast %5 : vector<1x128xf32> to vector<2x128xf32>
    %193 = arith.addf %191, %192 : vector<2x128xf32>
    %194 = vector.extract_strided_slice %193 {offsets = [0, 0], sizes = [2, 32], strides = [1, 1]} : vector<2x128xf32> to vector<2x32xf32>
    %195 = arith.negf %194 : vector<2x32xf32>
    %196 = math.exp %195 : vector<2x32xf32>
    %cst_64 = arith.constant 1.000000e+00 : f32
    %197 = vector.broadcast %cst_64 : f32 to vector<2x32xf32>
    %198 = arith.addf %197, %196 : vector<2x32xf32>
    %199 = arith.divf %197, %198 : vector<2x32xf32>
    %200 = vector.extract_strided_slice %193 {offsets = [0, 32], sizes = [2, 32], strides = [1, 1]} : vector<2x128xf32> to vector<2x32xf32>
    %201 = arith.negf %200 : vector<2x32xf32>
    %202 = math.exp %201 : vector<2x32xf32>
    %cst_65 = arith.constant 1.000000e+00 : f32
    %203 = vector.broadcast %cst_65 : f32 to vector<2x32xf32>
    %204 = arith.addf %203, %202 : vector<2x32xf32>
    %205 = arith.divf %203, %204 : vector<2x32xf32>
    %206 = vector.extract_strided_slice %193 {offsets = [0, 64], sizes = [2, 32], strides = [1, 1]} : vector<2x128xf32> to vector<2x32xf32>
    %207 = math.tanh %206 : vector<2x32xf32>
    %208 = vector.extract_strided_slice %193 {offsets = [0, 96], sizes = [2, 32], strides = [1, 1]} : vector<2x128xf32> to vector<2x32xf32>
    %209 = arith.negf %208 : vector<2x32xf32>
    %210 = math.exp %209 : vector<2x32xf32>
    %cst_66 = arith.constant 1.000000e+00 : f32
    %211 = vector.broadcast %cst_66 : f32 to vector<2x32xf32>
    %212 = arith.addf %211, %210 : vector<2x32xf32>
    %213 = arith.divf %211, %212 : vector<2x32xf32>
    %214 = arith.mulf %205, %146 : vector<2x32xf32>
    %215 = arith.mulf %199, %207 : vector<2x32xf32>
    %216 = arith.addf %214, %215 : vector<2x32xf32>
    %217 = math.tanh %216 : vector<2x32xf32>
    %218 = arith.mulf %213, %217 : vector<2x32xf32>
    %cst_67 = arith.constant dense<0.000000e+00> : vector<2x32xf32>
    %219 = tpu.matmul %218, %6, %cst_67 {dimension_numbers = #tpu.dot_dimension_numbers<[1], [0], [0], [1], [0, 0, 1, 1], [], []>} : vector<2x32xf32>, vector<32x32xf32>, vector<2x32xf32> -> vector<2x32xf32>
    %220 = vector.broadcast %7 : vector<1x32xf32> to vector<2x32xf32>
    %221 = arith.addf %219, %220 : vector<2x32xf32>
    %222 = arith.index_cast %c2_i32 : i32 to index
    %c0_68 = arith.constant 0 : index
    %c0_69 = arith.constant 0 : index
    %223 = vector.load %arg11[%222, %c0_68, %c0_69] : memref<8x2x32xf32, #tpu.memory_space<vmem>>, vector<1x2x32xf32>
    %224 = vector.shape_cast %223 : vector<1x2x32xf32> to vector<2x32xf32>
    %225 = vector.shape_cast %221 : vector<2x32xf32> to vector<1x2x32xf32>
    tpu.vector_store %arg11[%222, %c0_68, %c0_69], %225 {strides = array<i32>} : memref<8x2x32xf32, #tpu.memory_space<vmem>>, vector<1x2x32xf32>,
    %c3_i32 = arith.constant 3 : i32
    %226 = arith.index_cast %c3_i32 : i32 to index
    %c0_70 = arith.constant 0 : index
    %c0_71 = arith.constant 0 : index
    %227 = vector.load %arg0[%226, %c0_70, %c0_71] : memref<8x2x32xf32, #tpu.memory_space<vmem>>, vector<1x2x32xf32>
    %228 = vector.shape_cast %227 : vector<1x2x32xf32> to vector<2x32xf32>
    %cst_72 = arith.constant dense<0.000000e+00> : vector<2x128xf32>
    %229 = tpu.matmul %228, %0, %cst_72 {dimension_numbers = #tpu.dot_dimension_numbers<[1], [0], [0], [1], [0, 0, 1, 1], [], []>} : vector<2x32xf32>, vector<32x128xf32>, vector<2x128xf32> -> vector<2x128xf32>
    %cst_73 = arith.constant dense<0.000000e+00> : vector<2x128xf32>
    %230 = tpu.matmul %188, %1, %cst_73 {dimension_numbers = #tpu.dot_dimension_numbers<[1], [0], [0], [1], [0, 0, 1, 1], [], []>} : vector<2x32xf32>, vector<32x128xf32>, vector<2x128xf32> -> vector<2x128xf32>
    %231 = arith.addf %229, %230 : vector<2x128xf32>
    %232 = vector.broadcast %2 : vector<1x128xf32> to vector<2x128xf32>
    %233 = arith.addf %231, %232 : vector<2x128xf32>
    %234 = vector.extract_strided_slice %233 {offsets = [0, 0], sizes = [2, 32], strides = [1, 1]} : vector<2x128xf32> to vector<2x32xf32>
    %235 = arith.negf %234 : vector<2x32xf32>
    %236 = math.exp %235 : vector<2x32xf32>
    %cst_74 = arith.constant 1.000000e+00 : f32
    %237 = vector.broadcast %cst_74 : f32 to vector<2x32xf32>
    %238 = arith.addf %237, %236 : vector<2x32xf32>
    %239 = arith.divf %237, %238 : vector<2x32xf32>
    %240 = vector.extract_strided_slice %233 {offsets = [0, 32], sizes = [2, 32], strides = [1, 1]} : vector<2x128xf32> to vector<2x32xf32>
    %241 = arith.negf %240 : vector<2x32xf32>
    %242 = math.exp %241 : vector<2x32xf32>
    %cst_75 = arith.constant 1.000000e+00 : f32
    %243 = vector.broadcast %cst_75 : f32 to vector<2x32xf32>
    %244 = arith.addf %243, %242 : vector<2x32xf32>
    %245 = arith.divf %243, %244 : vector<2x32xf32>
    %246 = vector.extract_strided_slice %233 {offsets = [0, 64], sizes = [2, 32], strides = [1, 1]} : vector<2x128xf32> to vector<2x32xf32>
    %247 = math.tanh %246 : vector<2x32xf32>
    %248 = vector.extract_strided_slice %233 {offsets = [0, 96], sizes = [2, 32], strides = [1, 1]} : vector<2x128xf32> to vector<2x32xf32>
    %249 = arith.negf %248 : vector<2x32xf32>
    %250 = math.exp %249 : vector<2x32xf32>
    %cst_76 = arith.constant 1.000000e+00 : f32
    %251 = vector.broadcast %cst_76 : f32 to vector<2x32xf32>
    %252 = arith.addf %251, %250 : vector<2x32xf32>
    %253 = arith.divf %251, %252 : vector<2x32xf32>
    %254 = arith.mulf %245, %186 : vector<2x32xf32>
    %255 = arith.mulf %239, %247 : vector<2x32xf32>
    %256 = arith.addf %254, %255 : vector<2x32xf32>
    %257 = math.tanh %256 : vector<2x32xf32>
    %258 = arith.mulf %253, %257 : vector<2x32xf32>
    %cst_77 = arith.constant dense<0.000000e+00> : vector<2x128xf32>
    %259 = tpu.matmul %258, %3, %cst_77 {dimension_numbers = #tpu.dot_dimension_numbers<[1], [0], [0], [1], [0, 0, 1, 1], [], []>} : vector<2x32xf32>, vector<32x128xf32>, vector<2x128xf32> -> vector<2x128xf32>
    %cst_78 = arith.constant dense<0.000000e+00> : vector<2x128xf32>
    %260 = tpu.matmul %218, %4, %cst_78 {dimension_numbers = #tpu.dot_dimension_numbers<[1], [0], [0], [1], [0, 0, 1, 1], [], []>} : vector<2x32xf32>, vector<32x128xf32>, vector<2x128xf32> -> vector<2x128xf32>
    %261 = arith.addf %259, %260 : vector<2x128xf32>
    %262 = vector.broadcast %5 : vector<1x128xf32> to vector<2x128xf32>
    %263 = arith.addf %261, %262 : vector<2x128xf32>
    %264 = vector.extract_strided_slice %263 {offsets = [0, 0], sizes = [2, 32], strides = [1, 1]} : vector<2x128xf32> to vector<2x32xf32>
    %265 = arith.negf %264 : vector<2x32xf32>
    %266 = math.exp %265 : vector<2x32xf32>
    %cst_79 = arith.constant 1.000000e+00 : f32
    %267 = vector.broadcast %cst_79 : f32 to vector<2x32xf32>
    %268 = arith.addf %267, %266 : vector<2x32xf32>
    %269 = arith.divf %267, %268 : vector<2x32xf32>
    %270 = vector.extract_strided_slice %263 {offsets = [0, 32], sizes = [2, 32], strides = [1, 1]} : vector<2x128xf32> to vector<2x32xf32>
    %271 = arith.negf %270 : vector<2x32xf32>
    %272 = math.exp %271 : vector<2x32xf32>
    %cst_80 = arith.constant 1.000000e+00 : f32
    %273 = vector.broadcast %cst_80 : f32 to vector<2x32xf32>
    %274 = arith.addf %273, %272 : vector<2x32xf32>
    %275 = arith.divf %273, %274 : vector<2x32xf32>
    %276 = vector.extract_strided_slice %263 {offsets = [0, 64], sizes = [2, 32], strides = [1, 1]} : vector<2x128xf32> to vector<2x32xf32>
    %277 = math.tanh %276 : vector<2x32xf32>
    %278 = vector.extract_strided_slice %263 {offsets = [0, 96], sizes = [2, 32], strides = [1, 1]} : vector<2x128xf32> to vector<2x32xf32>
    %279 = arith.negf %278 : vector<2x32xf32>
    %280 = math.exp %279 : vector<2x32xf32>
    %cst_81 = arith.constant 1.000000e+00 : f32
    %281 = vector.broadcast %cst_81 : f32 to vector<2x32xf32>
    %282 = arith.addf %281, %280 : vector<2x32xf32>
    %283 = arith.divf %281, %282 : vector<2x32xf32>
    %284 = arith.mulf %275, %216 : vector<2x32xf32>
    %285 = arith.mulf %269, %277 : vector<2x32xf32>
    %286 = arith.addf %284, %285 : vector<2x32xf32>
    %287 = math.tanh %286 : vector<2x32xf32>
    %288 = arith.mulf %283, %287 : vector<2x32xf32>
    %cst_82 = arith.constant dense<0.000000e+00> : vector<2x32xf32>
    %289 = tpu.matmul %288, %6, %cst_82 {dimension_numbers = #tpu.dot_dimension_numbers<[1], [0], [0], [1], [0, 0, 1, 1], [], []>} : vector<2x32xf32>, vector<32x32xf32>, vector<2x32xf32> -> vector<2x32xf32>
    %290 = vector.broadcast %7 : vector<1x32xf32> to vector<2x32xf32>
    %291 = arith.addf %289, %290 : vector<2x32xf32>
    %292 = arith.index_cast %c3_i32 : i32 to index
    %c0_83 = arith.constant 0 : index
    %c0_84 = arith.constant 0 : index
    %293 = vector.load %arg11[%292, %c0_83, %c0_84] : memref<8x2x32xf32, #tpu.memory_space<vmem>>, vector<1x2x32xf32>
    %294 = vector.shape_cast %293 : vector<1x2x32xf32> to vector<2x32xf32>
    %295 = vector.shape_cast %291 : vector<2x32xf32> to vector<1x2x32xf32>
    tpu.vector_store %arg11[%292, %c0_83, %c0_84], %295 {strides = array<i32>} : memref<8x2x32xf32, #tpu.memory_space<vmem>>, vector<1x2x32xf32>,
    %c4_i32 = arith.constant 4 : i32
    %296 = arith.index_cast %c4_i32 : i32 to index
    %c0_85 = arith.constant 0 : index
    %c0_86 = arith.constant 0 : index
    %297 = vector.load %arg0[%296, %c0_85, %c0_86] : memref<8x2x32xf32, #tpu.memory_space<vmem>>, vector<1x2x32xf32>
    %298 = vector.shape_cast %297 : vector<1x2x32xf32> to vector<2x32xf32>
    %cst_87 = arith.constant dense<0.000000e+00> : vector<2x128xf32>
    %299 = tpu.matmul %298, %0, %cst_87 {dimension_numbers = #tpu.dot_dimension_numbers<[1], [0], [0], [1], [0, 0, 1, 1], [], []>} : vector<2x32xf32>, vector<32x128xf32>, vector<2x128xf32> -> vector<2x128xf32>
    %cst_88 = arith.constant dense<0.000000e+00> : vector<2x128xf32>
    %300 = tpu.matmul %258, %1, %cst_88 {dimension_numbers = #tpu.dot_dimension_numbers<[1], [0], [0], [1], [0, 0, 1, 1], [], []>} : vector<2x32xf32>, vector<32x128xf32>, vector<2x128xf32> -> vector<2x128xf32>
    %301 = arith.addf %299, %300 : vector<2x128xf32>
    %302 = vector.broadcast %2 : vector<1x128xf32> to vector<2x128xf32>
    %303 = arith.addf %301, %302 : vector<2x128xf32>
    %304 = vector.extract_strided_slice %303 {offsets = [0, 0], sizes = [2, 32], strides = [1, 1]} : vector<2x128xf32> to vector<2x32xf32>
    %305 = arith.negf %304 : vector<2x32xf32>
    %306 = math.exp %305 : vector<2x32xf32>
    %cst_89 = arith.constant 1.000000e+00 : f32
    %307 = vector.broadcast %cst_89 : f32 to vector<2x32xf32>
    %308 = arith.addf %307, %306 : vector<2x32xf32>
    %309 = arith.divf %307, %308 : vector<2x32xf32>
    %310 = vector.extract_strided_slice %303 {offsets = [0, 32], sizes = [2, 32], strides = [1, 1]} : vector<2x128xf32> to vector<2x32xf32>
    %311 = arith.negf %310 : vector<2x32xf32>
    %312 = math.exp %311 : vector<2x32xf32>
    %cst_90 = arith.constant 1.000000e+00 : f32
    %313 = vector.broadcast %cst_90 : f32 to vector<2x32xf32>
    %314 = arith.addf %313, %312 : vector<2x32xf32>
    %315 = arith.divf %313, %314 : vector<2x32xf32>
    %316 = vector.extract_strided_slice %303 {offsets = [0, 64], sizes = [2, 32], strides = [1, 1]} : vector<2x128xf32> to vector<2x32xf32>
    %317 = math.tanh %316 : vector<2x32xf32>
    %318 = vector.extract_strided_slice %303 {offsets = [0, 96], sizes = [2, 32], strides = [1, 1]} : vector<2x128xf32> to vector<2x32xf32>
    %319 = arith.negf %318 : vector<2x32xf32>
    %320 = math.exp %319 : vector<2x32xf32>
    %cst_91 = arith.constant 1.000000e+00 : f32
    %321 = vector.broadcast %cst_91 : f32 to vector<2x32xf32>
    %322 = arith.addf %321, %320 : vector<2x32xf32>
    %323 = arith.divf %321, %322 : vector<2x32xf32>
    %324 = arith.mulf %315, %256 : vector<2x32xf32>
    %325 = arith.mulf %309, %317 : vector<2x32xf32>
    %326 = arith.addf %324, %325 : vector<2x32xf32>
    %327 = math.tanh %326 : vector<2x32xf32>
    %328 = arith.mulf %323, %327 : vector<2x32xf32>
    %cst_92 = arith.constant dense<0.000000e+00> : vector<2x128xf32>
    %329 = tpu.matmul %328, %3, %cst_92 {dimension_numbers = #tpu.dot_dimension_numbers<[1], [0], [0], [1], [0, 0, 1, 1], [], []>} : vector<2x32xf32>, vector<32x128xf32>, vector<2x128xf32> -> vector<2x128xf32>
    %cst_93 = arith.constant dense<0.000000e+00> : vector<2x128xf32>
    %330 = tpu.matmul %288, %4, %cst_93 {dimension_numbers = #tpu.dot_dimension_numbers<[1], [0], [0], [1], [0, 0, 1, 1], [], []>} : vector<2x32xf32>, vector<32x128xf32>, vector<2x128xf32> -> vector<2x128xf32>
    %331 = arith.addf %329, %330 : vector<2x128xf32>
    %332 = vector.broadcast %5 : vector<1x128xf32> to vector<2x128xf32>
    %333 = arith.addf %331, %332 : vector<2x128xf32>
    %334 = vector.extract_strided_slice %333 {offsets = [0, 0], sizes = [2, 32], strides = [1, 1]} : vector<2x128xf32> to vector<2x32xf32>
    %335 = arith.negf %334 : vector<2x32xf32>
    %336 = math.exp %335 : vector<2x32xf32>
    %cst_94 = arith.constant 1.000000e+00 : f32
    %337 = vector.broadcast %cst_94 : f32 to vector<2x32xf32>
    %338 = arith.addf %337, %336 : vector<2x32xf32>
    %339 = arith.divf %337, %338 : vector<2x32xf32>
    %340 = vector.extract_strided_slice %333 {offsets = [0, 32], sizes = [2, 32], strides = [1, 1]} : vector<2x128xf32> to vector<2x32xf32>
    %341 = arith.negf %340 : vector<2x32xf32>
    %342 = math.exp %341 : vector<2x32xf32>
    %cst_95 = arith.constant 1.000000e+00 : f32
    %343 = vector.broadcast %cst_95 : f32 to vector<2x32xf32>
    %344 = arith.addf %343, %342 : vector<2x32xf32>
    %345 = arith.divf %343, %344 : vector<2x32xf32>
    %346 = vector.extract_strided_slice %333 {offsets = [0, 64], sizes = [2, 32], strides = [1, 1]} : vector<2x128xf32> to vector<2x32xf32>
    %347 = math.tanh %346 : vector<2x32xf32>
    %348 = vector.extract_strided_slice %333 {offsets = [0, 96], sizes = [2, 32], strides = [1, 1]} : vector<2x128xf32> to vector<2x32xf32>
    %349 = arith.negf %348 : vector<2x32xf32>
    %350 = math.exp %349 : vector<2x32xf32>
    %cst_96 = arith.constant 1.000000e+00 : f32
    %351 = vector.broadcast %cst_96 : f32 to vector<2x32xf32>
    %352 = arith.addf %351, %350 : vector<2x32xf32>
    %353 = arith.divf %351, %352 : vector<2x32xf32>
    %354 = arith.mulf %345, %286 : vector<2x32xf32>
    %355 = arith.mulf %339, %347 : vector<2x32xf32>
    %356 = arith.addf %354, %355 : vector<2x32xf32>
    %357 = math.tanh %356 : vector<2x32xf32>
    %358 = arith.mulf %353, %357 : vector<2x32xf32>
    %cst_97 = arith.constant dense<0.000000e+00> : vector<2x32xf32>
    %359 = tpu.matmul %358, %6, %cst_97 {dimension_numbers = #tpu.dot_dimension_numbers<[1], [0], [0], [1], [0, 0, 1, 1], [], []>} : vector<2x32xf32>, vector<32x32xf32>, vector<2x32xf32> -> vector<2x32xf32>
    %360 = vector.broadcast %7 : vector<1x32xf32> to vector<2x32xf32>
    %361 = arith.addf %359, %360 : vector<2x32xf32>
    %362 = arith.index_cast %c4_i32 : i32 to index
    %c0_98 = arith.constant 0 : index
    %c0_99 = arith.constant 0 : index
    %363 = vector.load %arg11[%362, %c0_98, %c0_99] : memref<8x2x32xf32, #tpu.memory_space<vmem>>, vector<1x2x32xf32>
    %364 = vector.shape_cast %363 : vector<1x2x32xf32> to vector<2x32xf32>
    %365 = vector.shape_cast %361 : vector<2x32xf32> to vector<1x2x32xf32>
    tpu.vector_store %arg11[%362, %c0_98, %c0_99], %365 {strides = array<i32>} : memref<8x2x32xf32, #tpu.memory_space<vmem>>, vector<1x2x32xf32>,
    %c5_i32 = arith.constant 5 : i32
    %366 = arith.index_cast %c5_i32 : i32 to index
    %c0_100 = arith.constant 0 : index
    %c0_101 = arith.constant 0 : index
    %367 = vector.load %arg0[%366, %c0_100, %c0_101] : memref<8x2x32xf32, #tpu.memory_space<vmem>>, vector<1x2x32xf32>
    %368 = vector.shape_cast %367 : vector<1x2x32xf32> to vector<2x32xf32>
    %cst_102 = arith.constant dense<0.000000e+00> : vector<2x128xf32>
    %369 = tpu.matmul %368, %0, %cst_102 {dimension_numbers = #tpu.dot_dimension_numbers<[1], [0], [0], [1], [0, 0, 1, 1], [], []>} : vector<2x32xf32>, vector<32x128xf32>, vector<2x128xf32> -> vector<2x128xf32>
    %cst_103 = arith.constant dense<0.000000e+00> : vector<2x128xf32>
    %370 = tpu.matmul %328, %1, %cst_103 {dimension_numbers = #tpu.dot_dimension_numbers<[1], [0], [0], [1], [0, 0, 1, 1], [], []>} : vector<2x32xf32>, vector<32x128xf32>, vector<2x128xf32> -> vector<2x128xf32>
    %371 = arith.addf %369, %370 : vector<2x128xf32>
    %372 = vector.broadcast %2 : vector<1x128xf32> to vector<2x128xf32>
    %373 = arith.addf %371, %372 : vector<2x128xf32>
    %374 = vector.extract_strided_slice %373 {offsets = [0, 0], sizes = [2, 32], strides = [1, 1]} : vector<2x128xf32> to vector<2x32xf32>
    %375 = arith.negf %374 : vector<2x32xf32>
    %376 = math.exp %375 : vector<2x32xf32>
    %cst_104 = arith.constant 1.000000e+00 : f32
    %377 = vector.broadcast %cst_104 : f32 to vector<2x32xf32>
    %378 = arith.addf %377, %376 : vector<2x32xf32>
    %379 = arith.divf %377, %378 : vector<2x32xf32>
    %380 = vector.extract_strided_slice %373 {offsets = [0, 32], sizes = [2, 32], strides = [1, 1]} : vector<2x128xf32> to vector<2x32xf32>
    %381 = arith.negf %380 : vector<2x32xf32>
    %382 = math.exp %381 : vector<2x32xf32>
    %cst_105 = arith.constant 1.000000e+00 : f32
    %383 = vector.broadcast %cst_105 : f32 to vector<2x32xf32>
    %384 = arith.addf %383, %382 : vector<2x32xf32>
    %385 = arith.divf %383, %384 : vector<2x32xf32>
    %386 = vector.extract_strided_slice %373 {offsets = [0, 64], sizes = [2, 32], strides = [1, 1]} : vector<2x128xf32> to vector<2x32xf32>
    %387 = math.tanh %386 : vector<2x32xf32>
    %388 = vector.extract_strided_slice %373 {offsets = [0, 96], sizes = [2, 32], strides = [1, 1]} : vector<2x128xf32> to vector<2x32xf32>
    %389 = arith.negf %388 : vector<2x32xf32>
    %390 = math.exp %389 : vector<2x32xf32>
    %cst_106 = arith.constant 1.000000e+00 : f32
    %391 = vector.broadcast %cst_106 : f32 to vector<2x32xf32>
    %392 = arith.addf %391, %390 : vector<2x32xf32>
    %393 = arith.divf %391, %392 : vector<2x32xf32>
    %394 = arith.mulf %385, %326 : vector<2x32xf32>
    %395 = arith.mulf %379, %387 : vector<2x32xf32>
    %396 = arith.addf %394, %395 : vector<2x32xf32>
    %397 = math.tanh %396 : vector<2x32xf32>
    %398 = arith.mulf %393, %397 : vector<2x32xf32>
    %cst_107 = arith.constant dense<0.000000e+00> : vector<2x128xf32>
    %399 = tpu.matmul %398, %3, %cst_107 {dimension_numbers = #tpu.dot_dimension_numbers<[1], [0], [0], [1], [0, 0, 1, 1], [], []>} : vector<2x32xf32>, vector<32x128xf32>, vector<2x128xf32> -> vector<2x128xf32>
    %cst_108 = arith.constant dense<0.000000e+00> : vector<2x128xf32>
    %400 = tpu.matmul %358, %4, %cst_108 {dimension_numbers = #tpu.dot_dimension_numbers<[1], [0], [0], [1], [0, 0, 1, 1], [], []>} : vector<2x32xf32>, vector<32x128xf32>, vector<2x128xf32> -> vector<2x128xf32>
    %401 = arith.addf %399, %400 : vector<2x128xf32>
    %402 = vector.broadcast %5 : vector<1x128xf32> to vector<2x128xf32>
    %403 = arith.addf %401, %402 : vector<2x128xf32>
    %404 = vector.extract_strided_slice %403 {offsets = [0, 0], sizes = [2, 32], strides = [1, 1]} : vector<2x128xf32> to vector<2x32xf32>
    %405 = arith.negf %404 : vector<2x32xf32>
    %406 = math.exp %405 : vector<2x32xf32>
    %cst_109 = arith.constant 1.000000e+00 : f32
    %407 = vector.broadcast %cst_109 : f32 to vector<2x32xf32>
    %408 = arith.addf %407, %406 : vector<2x32xf32>
    %409 = arith.divf %407, %408 : vector<2x32xf32>
    %410 = vector.extract_strided_slice %403 {offsets = [0, 32], sizes = [2, 32], strides = [1, 1]} : vector<2x128xf32> to vector<2x32xf32>
    %411 = arith.negf %410 : vector<2x32xf32>
    %412 = math.exp %411 : vector<2x32xf32>
    %cst_110 = arith.constant 1.000000e+00 : f32
    %413 = vector.broadcast %cst_110 : f32 to vector<2x32xf32>
    %414 = arith.addf %413, %412 : vector<2x32xf32>
    %415 = arith.divf %413, %414 : vector<2x32xf32>
    %416 = vector.extract_strided_slice %403 {offsets = [0, 64], sizes = [2, 32], strides = [1, 1]} : vector<2x128xf32> to vector<2x32xf32>
    %417 = math.tanh %416 : vector<2x32xf32>
    %418 = vector.extract_strided_slice %403 {offsets = [0, 96], sizes = [2, 32], strides = [1, 1]} : vector<2x128xf32> to vector<2x32xf32>
    %419 = arith.negf %418 : vector<2x32xf32>
    %420 = math.exp %419 : vector<2x32xf32>
    %cst_111 = arith.constant 1.000000e+00 : f32
    %421 = vector.broadcast %cst_111 : f32 to vector<2x32xf32>
    %422 = arith.addf %421, %420 : vector<2x32xf32>
    %423 = arith.divf %421, %422 : vector<2x32xf32>
    %424 = arith.mulf %415, %356 : vector<2x32xf32>
    %425 = arith.mulf %409, %417 : vector<2x32xf32>
    %426 = arith.addf %424, %425 : vector<2x32xf32>
    %427 = math.tanh %426 : vector<2x32xf32>
    %428 = arith.mulf %423, %427 : vector<2x32xf32>
    %cst_112 = arith.constant dense<0.000000e+00> : vector<2x32xf32>
    %429 = tpu.matmul %428, %6, %cst_112 {dimension_numbers = #tpu.dot_dimension_numbers<[1], [0], [0], [1], [0, 0, 1, 1], [], []>} : vector<2x32xf32>, vector<32x32xf32>, vector<2x32xf32> -> vector<2x32xf32>
    %430 = vector.broadcast %7 : vector<1x32xf32> to vector<2x32xf32>
    %431 = arith.addf %429, %430 : vector<2x32xf32>
    %432 = arith.index_cast %c5_i32 : i32 to index
    %c0_113 = arith.constant 0 : index
    %c0_114 = arith.constant 0 : index
    %433 = vector.load %arg11[%432, %c0_113, %c0_114] : memref<8x2x32xf32, #tpu.memory_space<vmem>>, vector<1x2x32xf32>
    %434 = vector.shape_cast %433 : vector<1x2x32xf32> to vector<2x32xf32>
    %435 = vector.shape_cast %431 : vector<2x32xf32> to vector<1x2x32xf32>
    tpu.vector_store %arg11[%432, %c0_113, %c0_114], %435 {strides = array<i32>} : memref<8x2x32xf32, #tpu.memory_space<vmem>>, vector<1x2x32xf32>,
    %c6_i32 = arith.constant 6 : i32
    %436 = arith.index_cast %c6_i32 : i32 to index
    %c0_115 = arith.constant 0 : index
    %c0_116 = arith.constant 0 : index
    %437 = vector.load %arg0[%436, %c0_115, %c0_116] : memref<8x2x32xf32, #tpu.memory_space<vmem>>, vector<1x2x32xf32>
    %438 = vector.shape_cast %437 : vector<1x2x32xf32> to vector<2x32xf32>
    %cst_117 = arith.constant dense<0.000000e+00> : vector<2x128xf32>
    %439 = tpu.matmul %438, %0, %cst_117 {dimension_numbers = #tpu.dot_dimension_numbers<[1], [0], [0], [1], [0, 0, 1, 1], [], []>} : vector<2x32xf32>, vector<32x128xf32>, vector<2x128xf32> -> vector<2x128xf32>
    %cst_118 = arith.constant dense<0.000000e+00> : vector<2x128xf32>
    %440 = tpu.matmul %398, %1, %cst_118 {dimension_numbers = #tpu.dot_dimension_numbers<[1], [0], [0], [1], [0, 0, 1, 1], [], []>} : vector<2x32xf32>, vector<32x128xf32>, vector<2x128xf32> -> vector<2x128xf32>
    %441 = arith.addf %439, %440 : vector<2x128xf32>
    %442 = vector.broadcast %2 : vector<1x128xf32> to vector<2x128xf32>
    %443 = arith.addf %441, %442 : vector<2x128xf32>
    %444 = vector.extract_strided_slice %443 {offsets = [0, 0], sizes = [2, 32], strides = [1, 1]} : vector<2x128xf32> to vector<2x32xf32>
    %445 = arith.negf %444 : vector<2x32xf32>
    %446 = math.exp %445 : vector<2x32xf32>
    %cst_119 = arith.constant 1.000000e+00 : f32
    %447 = vector.broadcast %cst_119 : f32 to vector<2x32xf32>
    %448 = arith.addf %447, %446 : vector<2x32xf32>
    %449 = arith.divf %447, %448 : vector<2x32xf32>
    %450 = vector.extract_strided_slice %443 {offsets = [0, 32], sizes = [2, 32], strides = [1, 1]} : vector<2x128xf32> to vector<2x32xf32>
    %451 = arith.negf %450 : vector<2x32xf32>
    %452 = math.exp %451 : vector<2x32xf32>
    %cst_120 = arith.constant 1.000000e+00 : f32
    %453 = vector.broadcast %cst_120 : f32 to vector<2x32xf32>
    %454 = arith.addf %453, %452 : vector<2x32xf32>
    %455 = arith.divf %453, %454 : vector<2x32xf32>
    %456 = vector.extract_strided_slice %443 {offsets = [0, 64], sizes = [2, 32], strides = [1, 1]} : vector<2x128xf32> to vector<2x32xf32>
    %457 = math.tanh %456 : vector<2x32xf32>
    %458 = vector.extract_strided_slice %443 {offsets = [0, 96], sizes = [2, 32], strides = [1, 1]} : vector<2x128xf32> to vector<2x32xf32>
    %459 = arith.negf %458 : vector<2x32xf32>
    %460 = math.exp %459 : vector<2x32xf32>
    %cst_121 = arith.constant 1.000000e+00 : f32
    %461 = vector.broadcast %cst_121 : f32 to vector<2x32xf32>
    %462 = arith.addf %461, %460 : vector<2x32xf32>
    %463 = arith.divf %461, %462 : vector<2x32xf32>
    %464 = arith.mulf %455, %396 : vector<2x32xf32>
    %465 = arith.mulf %449, %457 : vector<2x32xf32>
    %466 = arith.addf %464, %465 : vector<2x32xf32>
    %467 = math.tanh %466 : vector<2x32xf32>
    %468 = arith.mulf %463, %467 : vector<2x32xf32>
    %cst_122 = arith.constant dense<0.000000e+00> : vector<2x128xf32>
    %469 = tpu.matmul %468, %3, %cst_122 {dimension_numbers = #tpu.dot_dimension_numbers<[1], [0], [0], [1], [0, 0, 1, 1], [], []>} : vector<2x32xf32>, vector<32x128xf32>, vector<2x128xf32> -> vector<2x128xf32>
    %cst_123 = arith.constant dense<0.000000e+00> : vector<2x128xf32>
    %470 = tpu.matmul %428, %4, %cst_123 {dimension_numbers = #tpu.dot_dimension_numbers<[1], [0], [0], [1], [0, 0, 1, 1], [], []>} : vector<2x32xf32>, vector<32x128xf32>, vector<2x128xf32> -> vector<2x128xf32>
    %471 = arith.addf %469, %470 : vector<2x128xf32>
    %472 = vector.broadcast %5 : vector<1x128xf32> to vector<2x128xf32>
    %473 = arith.addf %471, %472 : vector<2x128xf32>
    %474 = vector.extract_strided_slice %473 {offsets = [0, 0], sizes = [2, 32], strides = [1, 1]} : vector<2x128xf32> to vector<2x32xf32>
    %475 = arith.negf %474 : vector<2x32xf32>
    %476 = math.exp %475 : vector<2x32xf32>
    %cst_124 = arith.constant 1.000000e+00 : f32
    %477 = vector.broadcast %cst_124 : f32 to vector<2x32xf32>
    %478 = arith.addf %477, %476 : vector<2x32xf32>
    %479 = arith.divf %477, %478 : vector<2x32xf32>
    %480 = vector.extract_strided_slice %473 {offsets = [0, 32], sizes = [2, 32], strides = [1, 1]} : vector<2x128xf32> to vector<2x32xf32>
    %481 = arith.negf %480 : vector<2x32xf32>
    %482 = math.exp %481 : vector<2x32xf32>
    %cst_125 = arith.constant 1.000000e+00 : f32
    %483 = vector.broadcast %cst_125 : f32 to vector<2x32xf32>
    %484 = arith.addf %483, %482 : vector<2x32xf32>
    %485 = arith.divf %483, %484 : vector<2x32xf32>
    %486 = vector.extract_strided_slice %473 {offsets = [0, 64], sizes = [2, 32], strides = [1, 1]} : vector<2x128xf32> to vector<2x32xf32>
    %487 = math.tanh %486 : vector<2x32xf32>
    %488 = vector.extract_strided_slice %473 {offsets = [0, 96], sizes = [2, 32], strides = [1, 1]} : vector<2x128xf32> to vector<2x32xf32>
    %489 = arith.negf %488 : vector<2x32xf32>
    %490 = math.exp %489 : vector<2x32xf32>
    %cst_126 = arith.constant 1.000000e+00 : f32
    %491 = vector.broadcast %cst_126 : f32 to vector<2x32xf32>
    %492 = arith.addf %491, %490 : vector<2x32xf32>
    %493 = arith.divf %491, %492 : vector<2x32xf32>
    %494 = arith.mulf %485, %426 : vector<2x32xf32>
    %495 = arith.mulf %479, %487 : vector<2x32xf32>
    %496 = arith.addf %494, %495 : vector<2x32xf32>
    %497 = math.tanh %496 : vector<2x32xf32>
    %498 = arith.mulf %493, %497 : vector<2x32xf32>
    %cst_127 = arith.constant dense<0.000000e+00> : vector<2x32xf32>
    %499 = tpu.matmul %498, %6, %cst_127 {dimension_numbers = #tpu.dot_dimension_numbers<[1], [0], [0], [1], [0, 0, 1, 1], [], []>} : vector<2x32xf32>, vector<32x32xf32>, vector<2x32xf32> -> vector<2x32xf32>
    %500 = vector.broadcast %7 : vector<1x32xf32> to vector<2x32xf32>
    %501 = arith.addf %499, %500 : vector<2x32xf32>
    %502 = arith.index_cast %c6_i32 : i32 to index
    %c0_128 = arith.constant 0 : index
    %c0_129 = arith.constant 0 : index
    %503 = vector.load %arg11[%502, %c0_128, %c0_129] : memref<8x2x32xf32, #tpu.memory_space<vmem>>, vector<1x2x32xf32>
    %504 = vector.shape_cast %503 : vector<1x2x32xf32> to vector<2x32xf32>
    %505 = vector.shape_cast %501 : vector<2x32xf32> to vector<1x2x32xf32>
    tpu.vector_store %arg11[%502, %c0_128, %c0_129], %505 {strides = array<i32>} : memref<8x2x32xf32, #tpu.memory_space<vmem>>, vector<1x2x32xf32>,
    %c7_i32 = arith.constant 7 : i32
    %506 = arith.index_cast %c7_i32 : i32 to index
    %c0_130 = arith.constant 0 : index
    %c0_131 = arith.constant 0 : index
    %507 = vector.load %arg0[%506, %c0_130, %c0_131] : memref<8x2x32xf32, #tpu.memory_space<vmem>>, vector<1x2x32xf32>
    %508 = vector.shape_cast %507 : vector<1x2x32xf32> to vector<2x32xf32>
    %cst_132 = arith.constant dense<0.000000e+00> : vector<2x128xf32>
    %509 = tpu.matmul %508, %0, %cst_132 {dimension_numbers = #tpu.dot_dimension_numbers<[1], [0], [0], [1], [0, 0, 1, 1], [], []>} : vector<2x32xf32>, vector<32x128xf32>, vector<2x128xf32> -> vector<2x128xf32>
    %cst_133 = arith.constant dense<0.000000e+00> : vector<2x128xf32>
    %510 = tpu.matmul %468, %1, %cst_133 {dimension_numbers = #tpu.dot_dimension_numbers<[1], [0], [0], [1], [0, 0, 1, 1], [], []>} : vector<2x32xf32>, vector<32x128xf32>, vector<2x128xf32> -> vector<2x128xf32>
    %511 = arith.addf %509, %510 : vector<2x128xf32>
    %512 = vector.broadcast %2 : vector<1x128xf32> to vector<2x128xf32>
    %513 = arith.addf %511, %512 : vector<2x128xf32>
    %514 = vector.extract_strided_slice %513 {offsets = [0, 0], sizes = [2, 32], strides = [1, 1]} : vector<2x128xf32> to vector<2x32xf32>
    %515 = arith.negf %514 : vector<2x32xf32>
    %516 = math.exp %515 : vector<2x32xf32>
    %cst_134 = arith.constant 1.000000e+00 : f32
    %517 = vector.broadcast %cst_134 : f32 to vector<2x32xf32>
    %518 = arith.addf %517, %516 : vector<2x32xf32>
    %519 = arith.divf %517, %518 : vector<2x32xf32>
    %520 = vector.extract_strided_slice %513 {offsets = [0, 32], sizes = [2, 32], strides = [1, 1]} : vector<2x128xf32> to vector<2x32xf32>
    %521 = arith.negf %520 : vector<2x32xf32>
    %522 = math.exp %521 : vector<2x32xf32>
    %cst_135 = arith.constant 1.000000e+00 : f32
    %523 = vector.broadcast %cst_135 : f32 to vector<2x32xf32>
    %524 = arith.addf %523, %522 : vector<2x32xf32>
    %525 = arith.divf %523, %524 : vector<2x32xf32>
    %526 = vector.extract_strided_slice %513 {offsets = [0, 64], sizes = [2, 32], strides = [1, 1]} : vector<2x128xf32> to vector<2x32xf32>
    %527 = math.tanh %526 : vector<2x32xf32>
    %528 = vector.extract_strided_slice %513 {offsets = [0, 96], sizes = [2, 32], strides = [1, 1]} : vector<2x128xf32> to vector<2x32xf32>
    %529 = arith.negf %528 : vector<2x32xf32>
    %530 = math.exp %529 : vector<2x32xf32>
    %cst_136 = arith.constant 1.000000e+00 : f32
    %531 = vector.broadcast %cst_136 : f32 to vector<2x32xf32>
    %532 = arith.addf %531, %530 : vector<2x32xf32>
    %533 = arith.divf %531, %532 : vector<2x32xf32>
    %534 = arith.mulf %525, %466 : vector<2x32xf32>
    %535 = arith.mulf %519, %527 : vector<2x32xf32>
    %536 = arith.addf %534, %535 : vector<2x32xf32>
    %537 = math.tanh %536 : vector<2x32xf32>
    %538 = arith.mulf %533, %537 : vector<2x32xf32>
    %cst_137 = arith.constant dense<0.000000e+00> : vector<2x128xf32>
    %539 = tpu.matmul %538, %3, %cst_137 {dimension_numbers = #tpu.dot_dimension_numbers<[1], [0], [0], [1], [0, 0, 1, 1], [], []>} : vector<2x32xf32>, vector<32x128xf32>, vector<2x128xf32> -> vector<2x128xf32>
    %cst_138 = arith.constant dense<0.000000e+00> : vector<2x128xf32>
    %540 = tpu.matmul %498, %4, %cst_138 {dimension_numbers = #tpu.dot_dimension_numbers<[1], [0], [0], [1], [0, 0, 1, 1], [], []>} : vector<2x32xf32>, vector<32x128xf32>, vector<2x128xf32> -> vector<2x128xf32>
    %541 = arith.addf %539, %540 : vector<2x128xf32>
    %542 = vector.broadcast %5 : vector<1x128xf32> to vector<2x128xf32>
    %543 = arith.addf %541, %542 : vector<2x128xf32>
    %544 = vector.extract_strided_slice %543 {offsets = [0, 0], sizes = [2, 32], strides = [1, 1]} : vector<2x128xf32> to vector<2x32xf32>
    %545 = arith.negf %544 : vector<2x32xf32>
    %546 = math.exp %545 : vector<2x32xf32>
    %cst_139 = arith.constant 1.000000e+00 : f32
    %547 = vector.broadcast %cst_139 : f32 to vector<2x32xf32>
    %548 = arith.addf %547, %546 : vector<2x32xf32>
    %549 = arith.divf %547, %548 : vector<2x32xf32>
    %550 = vector.extract_strided_slice %543 {offsets = [0, 32], sizes = [2, 32], strides = [1, 1]} : vector<2x128xf32> to vector<2x32xf32>
    %551 = arith.negf %550 : vector<2x32xf32>
    %552 = math.exp %551 : vector<2x32xf32>
    %cst_140 = arith.constant 1.000000e+00 : f32
    %553 = vector.broadcast %cst_140 : f32 to vector<2x32xf32>
    %554 = arith.addf %553, %552 : vector<2x32xf32>
    %555 = arith.divf %553, %554 : vector<2x32xf32>
    %556 = vector.extract_strided_slice %543 {offsets = [0, 64], sizes = [2, 32], strides = [1, 1]} : vector<2x128xf32> to vector<2x32xf32>
    %557 = math.tanh %556 : vector<2x32xf32>
    %558 = vector.extract_strided_slice %543 {offsets = [0, 96], sizes = [2, 32], strides = [1, 1]} : vector<2x128xf32> to vector<2x32xf32>
    %559 = arith.negf %558 : vector<2x32xf32>
    %560 = math.exp %559 : vector<2x32xf32>
    %cst_141 = arith.constant 1.000000e+00 : f32
    %561 = vector.broadcast %cst_141 : f32 to vector<2x32xf32>
    %562 = arith.addf %561, %560 : vector<2x32xf32>
    %563 = arith.divf %561, %562 : vector<2x32xf32>
    %564 = arith.mulf %555, %496 : vector<2x32xf32>
    %565 = arith.mulf %549, %557 : vector<2x32xf32>
    %566 = arith.addf %564, %565 : vector<2x32xf32>
    %567 = math.tanh %566 : vector<2x32xf32>
    %568 = arith.mulf %563, %567 : vector<2x32xf32>
    %cst_142 = arith.constant dense<0.000000e+00> : vector<2x32xf32>
    %569 = tpu.matmul %568, %6, %cst_142 {dimension_numbers = #tpu.dot_dimension_numbers<[1], [0], [0], [1], [0, 0, 1, 1], [], []>} : vector<2x32xf32>, vector<32x32xf32>, vector<2x32xf32> -> vector<2x32xf32>
    %570 = vector.broadcast %7 : vector<1x32xf32> to vector<2x32xf32>
    %571 = arith.addf %569, %570 : vector<2x32xf32>
    %572 = arith.index_cast %c7_i32 : i32 to index
    %c0_143 = arith.constant 0 : index
    %c0_144 = arith.constant 0 : index
    %573 = vector.load %arg11[%572, %c0_143, %c0_144] : memref<8x2x32xf32, #tpu.memory_space<vmem>>, vector<1x2x32xf32>
    %574 = vector.shape_cast %573 : vector<1x2x32xf32> to vector<2x32xf32>
    %575 = vector.shape_cast %571 : vector<2x32xf32> to vector<1x2x32xf32>
    tpu.vector_store %arg11[%572, %c0_143, %c0_144], %575 {strides = array<i32>} : memref<8x2x32xf32, #tpu.memory_space<vmem>>, vector<1x2x32xf32>,
    %c8_i32 = arith.constant 8 : i32
    %c0_145 = arith.constant 0 : index
    %c0_146 = arith.constant 0 : index
    %c0_147 = arith.constant 0 : index
    %576 = vector.load %arg12[%c0_145, %c0_146, %c0_147] : memref<2x2x32xf32, #tpu.memory_space<vmem>>, vector<1x2x32xf32>
    %577 = vector.shape_cast %576 : vector<1x2x32xf32> to vector<2x32xf32>
    %578 = vector.shape_cast %538 : vector<2x32xf32> to vector<1x2x32xf32>
    tpu.vector_store %arg12[%c0_145, %c0_146, %c0_147], %578 {strides = array<i32>} : memref<2x2x32xf32, #tpu.memory_space<vmem>>, vector<1x2x32xf32>,
    %c0_148 = arith.constant 0 : index
    %c0_149 = arith.constant 0 : index
    %c0_150 = arith.constant 0 : index
    %579 = vector.load %arg13[%c0_148, %c0_149, %c0_150] : memref<2x2x32xf32, #tpu.memory_space<vmem>>, vector<1x2x32xf32>
    %580 = vector.shape_cast %579 : vector<1x2x32xf32> to vector<2x32xf32>
    %581 = vector.shape_cast %536 : vector<2x32xf32> to vector<1x2x32xf32>
    tpu.vector_store %arg13[%c0_148, %c0_149, %c0_150], %581 {strides = array<i32>} : memref<2x2x32xf32, #tpu.memory_space<vmem>>, vector<1x2x32xf32>,
    %c1_151 = arith.constant 1 : index
    %c0_152 = arith.constant 0 : index
    %c0_153 = arith.constant 0 : index
    %582 = vector.load %arg12[%c1_151, %c0_152, %c0_153] : memref<2x2x32xf32, #tpu.memory_space<vmem>>, vector<1x2x32xf32>
    %583 = vector.shape_cast %582 : vector<1x2x32xf32> to vector<2x32xf32>
    %584 = vector.shape_cast %568 : vector<2x32xf32> to vector<1x2x32xf32>
    tpu.vector_store %arg12[%c1_151, %c0_152, %c0_153], %584 {strides = array<i32>} : memref<2x2x32xf32, #tpu.memory_space<vmem>>, vector<1x2x32xf32>,
    %c1_154 = arith.constant 1 : index
    %c0_155 = arith.constant 0 : index
    %c0_156 = arith.constant 0 : index
    %585 = vector.load %arg13[%c1_154, %c0_155, %c0_156] : memref<2x2x32xf32, #tpu.memory_space<vmem>>, vector<1x2x32xf32>
    %586 = vector.shape_cast %585 : vector<1x2x32xf32> to vector<2x32xf32>
    %587 = vector.shape_cast %566 : vector<2x32xf32> to vector<1x2x32xf32>
    tpu.vector_store %arg13[%c1_154, %c0_155, %c0_156], %587 {strides = array<i32>} : memref<2x2x32xf32, #tpu.memory_space<vmem>>, vector<1x2x32xf32>,
    return
  }
}

</mosaic_0001>

<llo_original>
// kernel: molecule_rnn_forward.1
$region0: #{molecule_rnn_forward.1}
  #allocation0 [shape = 'u32[]', space=smem, size = 0x4, offset = 0x4, fixed_abs, tag = 'smem constant byte address 0x4 - core index']
  #allocation1 [shape = 'u32[144,128]{1,0:T(1,128)}', space=vmem, size = 0x12000, scoped, tag = 'internal scratch']
  %s0 = inlined_call_operand.vmem [shape: f32[8,2,32], index: 0, kind: input, shape index: {}]
  %s1 = inlined_call_operand.vmem [shape: f32[2,2,32], index: 1, kind: input, shape index: {}]
  %s2 = inlined_call_operand.vmem [shape: f32[2,2,32], index: 2, kind: input, shape index: {}]
  %s3 = inlined_call_operand.vmem [shape: f32[32,128], index: 3, kind: input, shape index: {}]
  %s4 = inlined_call_operand.vmem [shape: f32[32,128], index: 4, kind: input, shape index: {}]
  %s5 = inlined_call_operand.vmem [shape: f32[1,128], index: 5, kind: input, shape index: {}]
  %s6 = inlined_call_operand.vmem [shape: f32[32,128], index: 6, kind: input, shape index: {}]
  %s7 = inlined_call_operand.vmem [shape: f32[32,128], index: 7, kind: input, shape index: {}]
  %s8 = inlined_call_operand.vmem [shape: f32[1,128], index: 8, kind: input, shape index: {}]
  %s9 = inlined_call_operand.vmem [shape: f32[32,32], index: 9, kind: input, shape index: {}]
  %s10 = inlined_call_operand.vmem [shape: f32[1,32], index: 10, kind: input, shape index: {}]
  %s11 = inlined_call_operand.vmem [shape: f32[8,2,32], index: 11, kind: output, shape index: {0}]
  %s12 = inlined_call_operand.hbm [shape: f32[2,2,32], index: 12, kind: output, shape index: {1}]
  %s13 = inlined_call_operand.hbm [shape: f32[2,2,32], index: 13, kind: output, shape index: {2}]
  %14 = xla_tuple %s11, %s12, %s13
  %s15 = sld [smem:[#allocation0]]
  $region70: #{molecule_rnn_forward.1} parent=0
    _
  %s17 = ssub.s32 1, %s15
  %s18 = scalar_select 0, %s17, %s15
  $region1: #{molecule_rnn_forward.1} parent=0
    #allocation2 [shape = 'u8[2048]{0}', space=vmem, size = 0x800, scoped, tag = 'output window, operand 1, single buffered']
    #allocation3 [shape = 's32[1]{0}', space=sflag, size = 0x4, scoped, tag = 'scoped memory for molecule_rnn_forward.1']
    #allocation4 [shape = 'u8[2048]{0}', space=vmem, size = 0x800, scoped, tag = 'output window, operand 2, single buffered']
    #allocation5 [shape = 's32[1]{0}', space=sflag, size = 0x4, scoped, tag = 'scoped memory for molecule_rnn_forward.1']
    %19 = vsyncpa [#allocation3], 0
    %20 = vsyncpa [#allocation5], 0
    // Predicated region
    $region2: #{molecule_rnn_forward.1} parent=1 // pred_check
      _
    $region3: #{molecule_rnn_forward.1} parent=1 // pred_check_branch
      %22 = sbr.rel (0) target = $region5
    $region4: #{molecule_rnn_forward.1} parent=1 // pred_region
      _
    $region5: #{molecule_rnn_forward.1} parent=1 // pred_fallthru
      _
    // Predicated region
    $region6: #{molecule_rnn_forward.1} parent=1 // pred_check
      _
    $region7: #{molecule_rnn_forward.1} parent=1 // pred_check_branch
      %24 = sbr.rel (0) target = $region9
    $region8: #{molecule_rnn_forward.1} parent=1 // pred_region
      _
    $region9: #{molecule_rnn_forward.1} parent=1 // pred_fallthru
      _
    // Predicated region
    $region10: #{molecule_rnn_forward.1} parent=1 // pred_check
      _
    $region11: #{molecule_rnn_forward.1} parent=1 // pred_check_branch
      %26 = sbr.rel (0) target = $region13
    $region12: #{molecule_rnn_forward.1} parent=1 // pred_region
      _
    $region13: #{molecule_rnn_forward.1} parent=1 // pred_fallthru
      _
    // Predicated region
    $region14: #{molecule_rnn_forward.1} parent=1 // pred_check
      _
    $region15: #{molecule_rnn_forward.1} parent=1 // pred_check_branch
      %28 = sbr.rel (0) target = $region17
    $region16: #{molecule_rnn_forward.1} parent=1 // pred_region
      _
    $region17: #{molecule_rnn_forward.1} parent=1 // pred_fallthru
      _
    // Predicated region
    $region18: #{molecule_rnn_forward.1} parent=1 // pred_check
      _
    $region19: #{molecule_rnn_forward.1} parent=1 // pred_check_branch
      %30 = sbr.rel (0) target = $region21
    $region20: #{molecule_rnn_forward.1} parent=1 // pred_region
      _
    $region21: #{molecule_rnn_forward.1} parent=1 // pred_fallthru
      _
    // Predicated region
    $region22: #{molecule_rnn_forward.1} parent=1 // pred_check
      _
    $region23: #{molecule_rnn_forward.1} parent=1 // pred_check_branch
      %32 = sbr.rel (0) target = $region25
    $region24: #{molecule_rnn_forward.1} parent=1 // pred_region
      _
    $region25: #{molecule_rnn_forward.1} parent=1 // pred_fallthru
      _
    // Predicated region
    $region26: #{molecule_rnn_forward.1} parent=1 // pred_check
      _
    $region27: #{molecule_rnn_forward.1} parent=1 // pred_check_branch
      %34 = sbr.rel (0) target = $region29
    $region28: #{molecule_rnn_forward.1} parent=1 // pred_region
      _
    $region29: #{molecule_rnn_forward.1} parent=1 // pred_fallthru
      _
    // Predicated region
    $region30: #{molecule_rnn_forward.1} parent=1 // pred_check
      _
    $region31: #{molecule_rnn_forward.1} parent=1 // pred_check_branch
      %36 = sbr.rel (0) target = $region33
    $region32: #{molecule_rnn_forward.1} parent=1 // pred_region
      _
    $region33: #{molecule_rnn_forward.1} parent=1 // pred_fallthru
      _
    // Predicated region
    $region34: #{molecule_rnn_forward.1} parent=1 // pred_check
      _
    $region35: #{molecule_rnn_forward.1} parent=1 // pred_check_branch
      %38 = sbr.rel (0) target = $region37
    $region36: #{molecule_rnn_forward.1} parent=1 // pred_region
      _
    $region37: #{molecule_rnn_forward.1} parent=1 // pred_fallthru
      _
    // Predicated region
    $region38: #{molecule_rnn_forward.1} parent=1 // pred_check
      _
    $region39: #{molecule_rnn_forward.1} parent=1 // pred_check_branch
      %40 = sbr.rel (0) target = $region41
    $region40: #{molecule_rnn_forward.1} parent=1 // pred_region
      _
    $region41: #{molecule_rnn_forward.1} parent=1 // pred_fallthru
      _
    // Predicated region
    $region42: #{molecule_rnn_forward.1} parent=1 // pred_check
      _
    $region43: #{molecule_rnn_forward.1} parent=1 // pred_check_branch
      %42 = sbr.rel (0) target = $region45
    $region44: #{molecule_rnn_forward.1} parent=1 // pred_region
      _
    $region45: #{molecule_rnn_forward.1} parent=1 // pred_fallthru
      _
    %v43 = vld [vmem:[%s3] sm:$0xff]
    %v44 = vld [vmem:[%s3 + $0x8] sm:$0xff]
    %v45 = vld [vmem:[%s3 + $0x10] sm:$0xff]
    %v46 = vld [vmem:[%s3 + $0x18] sm:$0xff]
    %v47 = vld [vmem:[%s4] sm:$0xff]
    %v48 = vld [vmem:[%s4 + $0x8] sm:$0xff]
    %v49 = vld [vmem:[%s4 + $0x10] sm:$0xff]
    %v50 = vld [vmem:[%s4 + $0x18] sm:$0xff]
    %v51 = vld [vmem:[%s5] sm:$0x1]
    %v52 = vld [vmem:[%s6] sm:$0xff]
    %v53 = vld [vmem:[%s6 + $0x8] sm:$0xff]
    %v54 = vld [vmem:[%s6 + $0x10] sm:$0xff]
    %v55 = vld [vmem:[%s6 + $0x18] sm:$0xff]
    %v56 = vld [vmem:[%s7] sm:$0xff]
    %v57 = vld [vmem:[%s7 + $0x8] sm:$0xff]
    %v58 = vld [vmem:[%s7 + $0x10] sm:$0xff]
    %v59 = vld [vmem:[%s7 + $0x18] sm:$0xff]
    %v60 = vld [vmem:[%s8] sm:$0x1]
    %v61 = vld [vmem:[%s9] sm:$0xff]
    %v62 = vld [vmem:[%s9 + $0x8] sm:$0xff]
    %v63 = vld [vmem:[%s9 + $0x10] sm:$0xff]
    %v64 = vld [vmem:[%s9 + $0x18] sm:$0xff]
    %v65 = vld [vmem:[%s10] sm:$0x1]
    %v66 = vld [vmem:[%s1] sm:$0x3]
    %s67 = scalar_lea.vmem %s1, 2
    %v68 = vld [vmem:[%s67] sm:$0x3]
    %v69 = vld [vmem:[%s2] sm:$0x3]
    %s70 = scalar_lea.vmem %s2, 2
    %v71 = vld [vmem:[%s70] sm:$0x3]
    %v72 = vld [vmem:[%s0] sm:$0x3]
    %vm73 = vcmask 261120
    %v75 = vsel %vm73, %v66, 0
    %77 = vmatprep.subr.mxu0 0.0
    %78 = vmatpush1.msra.mxu0 %v47
    %79 = vmatprep.subr.mxu0 0.0
    %80 = vmatpush1.msra.mxu0 %v48
    %81 = vmatprep.subr.mxu0 0.0
    %82 = vmatpush1.msra.mxu0 %v49
    %83 = vmatprep.subr.mxu0 0.0
    %84 = vmatpush1.msra.mxu0 %v50
    %85 = vmatprep.subr.mxu0 0.0
    %86 = vmatpush1.msra.mxu0 0.0
    %87 = vmatprep.subr.mxu0 0.0
    %88 = vmatpush1.msra.mxu0 0.0
    %89 = vmatprep.subr.mxu0 0.0
    %90 = vmatpush1.msra.mxu0 0.0
    %91 = vmatprep.subr.mxu0 0.0
    %92 = vmatpush1.msra.mxu0 0.0
    %93 = vmatprep.subr.mxu0 0.0
    %94 = vmatpush1.msra.mxu0 0.0
    %95 = vmatprep.subr.mxu0 0.0
    %96 = vmatpush1.msra.mxu0 0.0
    %97 = vmatprep.subr.mxu0 0.0
    %98 = vmatpush1.msra.mxu0 0.0
    %99 = vmatprep.subr.mxu0 0.0
    %100 = vmatpush1.msra.mxu0 0.0
    %101 = vmatprep.subr.mxu0 0.0
    %102 = vmatpush1.msra.mxu0 0.0
    %103 = vmatprep.subr.mxu0 0.0
    %104 = vmatpush1.msra.mxu0 0.0
    %105 = vmatprep.subr.mxu0 0.0
    %106 = vmatpush1.msra.mxu0 0.0
    %107 = vmatprep.subr.mxu0 0.0
    %108 = vmatpush1.msra.mxu0 0.0
    %109 = vmatprep.subr.mxu0 0.0
    %110 = vmatpush1.msra.mxu0 0.0
    %111 = vmatprep.subr.mxu0 0.0
    %112 = vmatpush1.msra.mxu0 0.0
    %113 = vmatprep.subr.mxu0 0.0
    %114 = vmatpush1.msra.mxu0 0.0
    %115 = vmatprep.subr.mxu0 0.0
    %116 = vmatpush1.msra.mxu0 0.0
    %117 = vmatprep.subr.mxu0 0.0
    %118 = vmatpush1.msra.mxu0 0.0
    %119 = vmatprep.subr.mxu0 0.0
    %120 = vmatpush1.msra.mxu0 0.0
    %121 = vmatprep.subr.mxu0 0.0
    %122 = vmatpush1.msra.mxu0 0.0
    %123 = vmatprep.subr.mxu0 0.0
    %124 = vmatpush1.msra.mxu0 0.0
    %125 = vmatprep.subr.mxu0 0.0
    %126 = vmatpush1.msra.mxu0 0.0
    %127 = vmatprep.subr.mxu0 0.0
    %128 = vmatpush1.msra.mxu0 0.0
    %129 = vmatprep.subr.mxu0 0.0
    %130 = vmatpush1.msra.mxu0 0.0
    %131 = vmatprep.subr.mxu0 0.0
    %132 = vmatpush1.msra.mxu0 0.0
    %133 = vmatprep.subr.mxu0 0.0
    %134 = vmatpush1.msra.mxu0 0.0
    %135 = vmatprep.subr.mxu0 0.0
    %136 = vmatpush1.msra.mxu0 0.0
    %137 = vmatprep.subr.mxu0 0.0
    %138 = vmatpush1.msra.mxu0 0.0
    %139 = vmatprep.subr.mxu0 0.0
    %140 = vmatpush1.msra.mxu0 0.0
    %141 = vmatprep.mubr.f32.mxu0 0.0
    %142 = vmatmul.mubr.f32.gmra.mrb[0].mxu0 %v75
    %v143 = vpop.f32.mrb[0].mxu0
    %v144 = vadd.f32 0.0, %v143
    %v145 = vpop.f32.mrb[0].mxu0
    %146 = vdwg.mxu0
    %v148 = vsel %vm73, %v72, 0
    %150 = vmatprep.subr.mxu0 0.0
    %151 = vmatpush1.msra.mxu0 %v43
    %152 = vmatprep.subr.mxu0 0.0
    %153 = vmatpush1.msra.mxu0 %v44
    %154 = vmatprep.subr.mxu0 0.0
    %155 = vmatpush1.msra.mxu0 %v45
    %156 = vmatprep.subr.mxu0 0.0
    %157 = vmatpush1.msra.mxu0 %v46
    %158 = vmatprep.subr.mxu0 0.0
    %159 = vmatpush1.msra.mxu0 0.0
    %160 = vmatprep.subr.mxu0 0.0
    %161 = vmatpush1.msra.mxu0 0.0
    %162 = vmatprep.subr.mxu0 0.0
    %163 = vmatpush1.msra.mxu0 0.0
    %164 = vmatprep.subr.mxu0 0.0
    %165 = vmatpush1.msra.mxu0 0.0
    %166 = vmatprep.subr.mxu0 0.0
    %167 = vmatpush1.msra.mxu0 0.0
    %168 = vmatprep.subr.mxu0 0.0
    %169 = vmatpush1.msra.mxu0 0.0
    %170 = vmatprep.subr.mxu0 0.0
    %171 = vmatpush1.msra.mxu0 0.0
    %172 = vmatprep.subr.mxu0 0.0
    %173 = vmatpush1.msra.mxu0 0.0
    %174 = vmatprep.subr.mxu0 0.0
    %175 = vmatpush1.msra.mxu0 0.0
    %176 = vmatprep.subr.mxu0 0.0
    %177 = vmatpush1.msra.mxu0 0.0
    %178 = vmatprep.subr.mxu0 0.0
    %179 = vmatpush1.msra.mxu0 0.0
    %180 = vmatprep.subr.mxu0 0.0
    %181 = vmatpush1.msra.mxu0 0.0
    %182 = vmatprep.subr.mxu0 0.0
    %183 = vmatpush1.msra.mxu0 0.0
    %184 = vmatprep.subr.mxu0 0.0
    %185 = vmatpush1.msra.mxu0 0.0
    %186 = vmatprep.subr.mxu0 0.0
    %187 = vmatpush1.msra.mxu0 0.0
    %188 = vmatprep.subr.mxu0 0.0
    %189 = vmatpush1.msra.mxu0 0.0
    %190 = vmatprep.subr.mxu0 0.0
    %191 = vmatpush1.msra.mxu0 0.0
    %192 = vmatprep.subr.mxu0 0.0
    %193 = vmatpush1.msra.mxu0 0.0
    %194 = vmatprep.subr.mxu0 0.0
    %195 = vmatpush1.msra.mxu0 0.0
    %196 = vmatprep.subr.mxu0 0.0
    %197 = vmatpush1.msra.mxu0 0.0
    %198 = vmatprep.subr.mxu0 0.0
    %199 = vmatpush1.msra.mxu0 0.0
    %200 = vmatprep.subr.mxu0 0.0
    %201 = vmatpush1.msra.mxu0 0.0
    %202 = vmatprep.subr.mxu0 0.0
    %203 = vmatpush1.msra.mxu0 0.0
    %204 = vmatprep.subr.mxu0 0.0
    %205 = vmatpush1.msra.mxu0 0.0
    %206 = vmatprep.subr.mxu0 0.0
    %207 = vmatpush1.msra.mxu0 0.0
    %208 = vmatprep.subr.mxu0 0.0
    %209 = vmatpush1.msra.mxu0 0.0
    %210 = vmatprep.subr.mxu0 0.0
    %211 = vmatpush1.msra.mxu0 0.0
    %212 = vmatprep.subr.mxu0 0.0
    %213 = vmatpush1.msra.mxu0 0.0
    %214 = vmatprep.mubr.f32.mxu0 0.0
    %215 = vmatmul.mubr.f32.gmra.mrb[0].mxu0 %v148
    %v216 = vpop.f32.mrb[0].mxu0
    %v217 = vadd.f32 %v144, %v216
    %v218 = vpop.f32.mrb[0].mxu0
    %219 = vdwg.mxu0
    %v221 = vlaneseq
    %v222 = vshrl.u32 %v221, 7
    %v223 = vsub.s32 0, %v222
    %v224 = vrot.slane %v51, %v223
    %v226 = vadd.f32 %v217, %v224
    %v227 = vxor.u32 %v226, 2147483648
    %v228 = vmul.f32 %v227, 1.442695
    %v229 = vpow.pop %v228
    %v230 = vadd.f32 %v229, 1.0
    %v231 = vrcp.pop %v230
    %v232 = vmul.f32 1.0, %v231
    %v233 = vtanh.pop %v226
    %235 = vrot.lane.b32.xlu0 %v69, 32
    %v236 = vpop.permute.xlu0 %235
    %v238 = vmul.f32 %v232, %v236
    %240 = vrot.lane.b32.xlu0 %v233, 64
    %v241 = vpop.permute.xlu0 %240
    %v243 = vmul.f32 %v232, %v241
    %245 = vrot.lane.b32.xlu0 %v243, 32
    %v246 = vpop.permute.xlu0 %245
    %v248 = vadd.f32 %v238, %v246
    %v249 = vtanh.pop %v248
    %251 = vrot.lane.b32.xlu0 %v249, 64
    %v252 = vpop.permute.xlu0 %251
    %v254 = vmul.f32 %v232, %v252
    %v256 = vsel %vm73, %v68, 0
    %258 = vmatprep.subr.mxu0 0.0
    %259 = vmatpush1.msra.mxu0 %v56
    %260 = vmatprep.subr.mxu0 0.0
    %261 = vmatpush1.msra.mxu0 %v57
    %262 = vmatprep.subr.mxu0 0.0
    %263 = vmatpush1.msra.mxu0 %v58
    %264 = vmatprep.subr.mxu0 0.0
    %265 = vmatpush1.msra.mxu0 %v59
    %266 = vmatprep.subr.mxu0 0.0
    %267 = vmatpush1.msra.mxu0 0.0
    %268 = vmatprep.subr.mxu0 0.0
    %269 = vmatpush1.msra.mxu0 0.0
    %270 = vmatprep.subr.mxu0 0.0
    %271 = vmatpush1.msra.mxu0 0.0
    %272 = vmatprep.subr.mxu0 0.0
    %273 = vmatpush1.msra.mxu0 0.0
    %274 = vmatprep.subr.mxu0 0.0
    %275 = vmatpush1.msra.mxu0 0.0
    %276 = vmatprep.subr.mxu0 0.0
    %277 = vmatpush1.msra.mxu0 0.0
    %278 = vmatprep.subr.mxu0 0.0
    %279 = vmatpush1.msra.mxu0 0.0
    %280 = vmatprep.subr.mxu0 0.0
    %281 = vmatpush1.msra.mxu0 0.0
    %282 = vmatprep.subr.mxu0 0.0
    %283 = vmatpush1.msra.mxu0 0.0
    %284 = vmatprep.subr.mxu0 0.0
    %285 = vmatpush1.msra.mxu0 0.0
    %286 = vmatprep.subr.mxu0 0.0
    %287 = vmatpush1.msra.mxu0 0.0
    %288 = vmatprep.subr.mxu0 0.0
    %289 = vmatpush1.msra.mxu0 0.0
    %290 = vmatprep.subr.mxu0 0.0
    %291 = vmatpush1.msra.mxu0 0.0
    %292 = vmatprep.subr.mxu0 0.0
    %293 = vmatpush1.msra.mxu0 0.0
    %294 = vmatprep.subr.mxu0 0.0
    %295 = vmatpush1.msra.mxu0 0.0
    %296 = vmatprep.subr.mxu0 0.0
    %297 = vmatpush1.msra.mxu0 0.0
    %298 = vmatprep.subr.mxu0 0.0
    %299 = vmatpush1.msra.mxu0 0.0
    %300 = vmatprep.subr.mxu0 0.0
    %301 = vmatpush1.msra.mxu0 0.0
    %302 = vmatprep.subr.mxu0 0.0
    %303 = vmatpush1.msra.mxu0 0.0
    %304 = vmatprep.subr.mxu0 0.0
    %305 = vmatpush1.msra.mxu0 0.0
    %306 = vmatprep.subr.mxu0 0.0
    %307 = vmatpush1.msra.mxu0 0.0
    %308 = vmatprep.subr.mxu0 0.0
    %309 = vmatpush1.msra.mxu0 0.0
    %310 = vmatprep.subr.mxu0 0.0
    %311 = vmatpush1.msra.mxu0 0.0
    %312 = vmatprep.subr.mxu0 0.0
    %313 = vmatpush1.msra.mxu0 0.0
    %314 = vmatprep.subr.mxu0 0.0
    %315 = vmatpush1.msra.mxu0 0.0
    %316 = vmatprep.subr.mxu0 0.0
    %317 = vmatpush1.msra.mxu0 0.0
    %318 = vmatprep.subr.mxu0 0.0
    %319 = vmatpush1.msra.mxu0 0.0
    %320 = vmatprep.subr.mxu0 0.0
    %321 = vmatpush1.msra.mxu0 0.0
    %322 = vmatprep.mubr.f32.mxu0 0.0
    %323 = vmatmul.mubr.f32.gmra.mrb[0].mxu0 %v256
    %v324 = vpop.f32.mrb[0].mxu0
    %v325 = vadd.f32 0.0, %v324
    %v326 = vpop.f32.mrb[0].mxu0
    %327 = vdwg.mxu0
    %329 = vrot.lane.b32.xlu0 %v254, 32
    %v330 = vpop.permute.xlu0 %329
    %v331 = vsel %vm73, %v330, 0
    %333 = vmatprep.subr.mxu0 0.0
    %334 = vmatpush1.msra.mxu0 %v52
    %335 = vmatprep.subr.mxu0 0.0
    %336 = vmatpush1.msra.mxu0 %v53
    %337 = vmatprep.subr.mxu0 0.0
    %338 = vmatpush1.msra.mxu0 %v54
    %339 = vmatprep.subr.mxu0 0.0
    %340 = vmatpush1.msra.mxu0 %v55
    %341 = vmatprep.subr.mxu0 0.0
    %342 = vmatpush1.msra.mxu0 0.0
    %343 = vmatprep.subr.mxu0 0.0
    %344 = vmatpush1.msra.mxu0 0.0
    %345 = vmatprep.subr.mxu0 0.0
    %346 = vmatpush1.msra.mxu0 0.0
    %347 = vmatprep.subr.mxu0 0.0
    %348 = vmatpush1.msra.mxu0 0.0
    %349 = vmatprep.subr.mxu0 0.0
    %350 = vmatpush1.msra.mxu0 0.0
    %351 = vmatprep.subr.mxu0 0.0
    %352 = vmatpush1.msra.mxu0 0.0
    %353 = vmatprep.subr.mxu0 0.0
    %354 = vmatpush1.msra.mxu0 0.0
    %355 = vmatprep.subr.mxu0 0.0
    %356 = vmatpush1.msra.mxu0 0.0
    %357 = vmatprep.subr.mxu0 0.0
    %358 = vmatpush1.msra.mxu0 0.0
    %359 = vmatprep.subr.mxu0 0.0
    %360 = vmatpush1.msra.mxu0 0.0
    %361 = vmatprep.subr.mxu0 0.0
    %362 = vmatpush1.msra.mxu0 0.0
    %363 = vmatprep.subr.mxu0 0.0
    %364 = vmatpush1.msra.mxu0 0.0
    %365 = vmatprep.subr.mxu0 0.0
    %366 = vmatpush1.msra.mxu0 0.0
    %367 = vmatprep.subr.mxu0 0.0
    %368 = vmatpush1.msra.mxu0 0.0
    %369 = vmatprep.subr.mxu0 0.0
    %370 = vmatpush1.msra.mxu0 0.0
    %371 = vmatprep.subr.mxu0 0.0
    %372 = vmatpush1.msra.mxu0 0.0
    %373 = vmatprep.subr.mxu0 0.0
    %374 = vmatpush1.msra.mxu0 0.0
    %375 = vmatprep.subr.mxu0 0.0
    %376 = vmatpush1.msra.mxu0 0.0
    %377 = vmatprep.subr.mxu0 0.0
    %378 = vmatpush1.msra.mxu0 0.0
    %379 = vmatprep.subr.mxu0 0.0
    %380 = vmatpush1.msra.mxu0 0.0
    %381 = vmatprep.subr.mxu0 0.0
    %382 = vmatpush1.msra.mxu0 0.0
    %383 = vmatprep.subr.mxu0 0.0
    %384 = vmatpush1.msra.mxu0 0.0
    %385 = vmatprep.subr.mxu0 0.0
    %386 = vmatpush1.msra.mxu0 0.0
    %387 = vmatprep.subr.mxu0 0.0
    %388 = vmatpush1.msra.mxu0 0.0
    %389 = vmatprep.subr.mxu0 0.0
    %390 = vmatpush1.msra.mxu0 0.0
    %391 = vmatprep.subr.mxu0 0.0
    %392 = vmatpush1.msra.mxu0 0.0
    %393 = vmatprep.subr.mxu0 0.0
    %394 = vmatpush1.msra.mxu0 0.0
    %395 = vmatprep.subr.mxu0 0.0
    %396 = vmatpush1.msra.mxu0 0.0
    %397 = vmatprep.mubr.f32.mxu0 0.0
    %398 = vmatmul.mubr.f32.gmra.mrb[0].mxu0 %v331
    %v399 = vpop.f32.mrb[0].mxu0
    %v400 = vadd.f32 %v325, %v399
    %v401 = vpop.f32.mrb[0].mxu0
    %402 = vdwg.mxu0
    %v404 = vlaneseq
    %v405 = vshrl.u32 %v404, 7
    %v406 = vsub.s32 0, %v405
    %v407 = vrot.slane %v60, %v406
    %v409 = vadd.f32 %v400, %v407
    %v410 = vxor.u32 %v409, 2147483648
    %v411 = vmul.f32 %v410, 1.442695
    %v412 = vpow.pop %v411
    %v413 = vadd.f32 %v412, 1.0
    %v414 = vrcp.pop %v413
    %v415 = vmul.f32 1.0, %v414
    %v416 = vtanh.pop %v409
    %418 = vrot.lane.b32.xlu0 %v71, 32
    %v419 = vpop.permute.xlu0 %418
    %v421 = vmul.f32 %v415, %v419
    %423 = vrot.lane.b32.xlu0 %v416, 64
    %v424 = vpop.permute.xlu0 %423
    %v426 = vmul.f32 %v415, %v424
    %428 = vrot.lane.b32.xlu0 %v426, 32
    %v429 = vpop.permute.xlu0 %428
    %v431 = vadd.f32 %v421, %v429
    %v432 = vtanh.pop %v431
    %434 = vrot.lane.b32.xlu0 %v432, 64
    %v435 = vpop.permute.xlu0 %434
    %v437 = vmul.f32 %v415, %v435
    %v439 = vlaneseq
    %v440 = vshrl.u32 %v439, 7
    %v441 = vsub.s32 0, %v440
    %v442 = vrot.slane %v65, %v441
    %445 = vrot.lane.b32.xlu0 %v437, 32
    %v446 = vpop.permute.xlu0 %445
    %v447 = vsel %vm73, %v446, 0
    %449 = vmatprep.subr.mxu0 0.0
    %450 = vmatpush1.msra.mxu0 %v61
    %451 = vmatprep.subr.mxu0 0.0
    %452 = vmatpush1.msra.mxu0 %v62
    %453 = vmatprep.subr.mxu0 0.0
    %454 = vmatpush1.msra.mxu0 %v63
    %455 = vmatprep.subr.mxu0 0.0
    %456 = vmatpush1.msra.mxu0 %v64
    %457 = vmatprep.subr.mxu0 0.0
    %458 = vmatpush1.msra.mxu0 0.0
    %459 = vmatprep.subr.mxu0 0.0
    %460 = vmatpush1.msra.mxu0 0.0
    %461 = vmatprep.subr.mxu0 0.0
    %462 = vmatpush1.msra.mxu0 0.0
    %463 = vmatprep.subr.mxu0 0.0
    %464 = vmatpush1.msra.mxu0 0.0
    %465 = vmatprep.subr.mxu0 0.0
    %466 = vmatpush1.msra.mxu0 0.0
    %467 = vmatprep.subr.mxu0 0.0
    %468 = vmatpush1.msra.mxu0 0.0
    %469 = vmatprep.subr.mxu0 0.0
    %470 = vmatpush1.msra.mxu0 0.0
    %471 = vmatprep.subr.mxu0 0.0
    %472 = vmatpush1.msra.mxu0 0.0
    %473 = vmatprep.subr.mxu0 0.0
    %474 = vmatpush1.msra.mxu0 0.0
    %475 = vmatprep.subr.mxu0 0.0
    %476 = vmatpush1.msra.mxu0 0.0
    %477 = vmatprep.subr.mxu0 0.0
    %478 = vmatpush1.msra.mxu0 0.0
    %479 = vmatprep.subr.mxu0 0.0
    %480 = vmatpush1.msra.mxu0 0.0
    %481 = vmatprep.subr.mxu0 0.0
    %482 = vmatpush1.msra.mxu0 0.0
    %483 = vmatprep.subr.mxu0 0.0
    %484 = vmatpush1.msra.mxu0 0.0
    %485 = vmatprep.subr.mxu0 0.0
    %486 = vmatpush1.msra.mxu0 0.0
    %487 = vmatprep.subr.mxu0 0.0
    %488 = vmatpush1.msra.mxu0 0.0
    %489 = vmatprep.subr.mxu0 0.0
    %490 = vmatpush1.msra.mxu0 0.0
    %491 = vmatprep.subr.mxu0 0.0
    %492 = vmatpush1.msra.mxu0 0.0
    %493 = vmatprep.subr.mxu0 0.0
    %494 = vmatpush1.msra.mxu0 0.0
    %495 = vmatprep.subr.mxu0 0.0
    %496 = vmatpush1.msra.mxu0 0.0
    %497 = vmatprep.subr.mxu0 0.0
    %498 = vmatpush1.msra.mxu0 0.0
    %499 = vmatprep.subr.mxu0 0.0
    %500 = vmatpush1.msra.mxu0 0.0
    %501 = vmatprep.subr.mxu0 0.0
    %502 = vmatpush1.msra.mxu0 0.0
    %503 = vmatprep.subr.mxu0 0.0
    %504 = vmatpush1.msra.mxu0 0.0
    %505 = vmatprep.subr.mxu0 0.0
    %506 = vmatpush1.msra.mxu0 0.0
    %507 = vmatprep.subr.mxu0 0.0
    %508 = vmatpush1.msra.mxu0 0.0
    %509 = vmatprep.subr.mxu0 0.0
    %510 = vmatpush1.msra.mxu0 0.0
    %511 = vmatprep.subr.mxu0 0.0
    %512 = vmatpush1.msra.mxu0 0.0
    %513 = vmatprep.mubr.f32.mxu0 0.0
    %514 = vmatmul.mubr.f32.gmra.mrb[0].mxu0 %v447
    %v515 = vpop.f32.mrb[0].mxu0
    %v516 = vadd.f32 %v442, %v515
    %v517 = vpop.f32.mrb[0].mxu0
    %518 = vdwg.mxu0
    %vm519 = vcmask 254976
    %520 = vst.msk [vmem:[%s11] sm:$0x3] %vm519, %v516
    %s521 = scalar_lea.vmem %s0, 2
    %v522 = vld [vmem:[%s521] sm:$0x3]
    %523 = vmatprep.subr.mxu0 0.0
    %524 = vmatpush1.msra.mxu0 %v47
    %525 = vmatprep.subr.mxu0 0.0
    %526 = vmatpush1.msra.mxu0 %v48
    %527 = vmatprep.subr.mxu0 0.0
    %528 = vmatpush1.msra.mxu0 %v49
    %529 = vmatprep.subr.mxu0 0.0
    %530 = vmatpush1.msra.mxu0 %v50
    %531 = vmatprep.subr.mxu0 0.0
    %532 = vmatpush1.msra.mxu0 0.0
    %533 = vmatprep.subr.mxu0 0.0
    %534 = vmatpush1.msra.mxu0 0.0
    %535 = vmatprep.subr.mxu0 0.0
    %536 = vmatpush1.msra.mxu0 0.0
    %537 = vmatprep.subr.mxu0 0.0
    %538 = vmatpush1.msra.mxu0 0.0
    %539 = vmatprep.subr.mxu0 0.0
    %540 = vmatpush1.msra.mxu0 0.0
    %541 = vmatprep.subr.mxu0 0.0
    %542 = vmatpush1.msra.mxu0 0.0
    %543 = vmatprep.subr.mxu0 0.0
    %544 = vmatpush1.msra.mxu0 0.0
    %545 = vmatprep.subr.mxu0 0.0
    %546 = vmatpush1.msra.mxu0 0.0
    %547 = vmatprep.subr.mxu0 0.0
    %548 = vmatpush1.msra.mxu0 0.0
    %549 = vmatprep.subr.mxu0 0.0
    %550 = vmatpush1.msra.mxu0 0.0
    %551 = vmatprep.subr.mxu0 0.0
    %552 = vmatpush1.msra.mxu0 0.0
    %553 = vmatprep.subr.mxu0 0.0
    %554 = vmatpush1.msra.mxu0 0.0
    %555 = vmatprep.subr.mxu0 0.0
    %556 = vmatpush1.msra.mxu0 0.0
    %557 = vmatprep.subr.mxu0 0.0
    %558 = vmatpush1.msra.mxu0 0.0
    %559 = vmatprep.subr.mxu0 0.0
    %560 = vmatpush1.msra.mxu0 0.0
    %561 = vmatprep.subr.mxu0 0.0
    %562 = vmatpush1.msra.mxu0 0.0
    %563 = vmatprep.subr.mxu0 0.0
    %564 = vmatpush1.msra.mxu0 0.0
    %565 = vmatprep.subr.mxu0 0.0
    %566 = vmatpush1.msra.mxu0 0.0
    %567 = vmatprep.subr.mxu0 0.0
    %568 = vmatpush1.msra.mxu0 0.0
    %569 = vmatprep.subr.mxu0 0.0
    %570 = vmatpush1.msra.mxu0 0.0
    %571 = vmatprep.subr.mxu0 0.0
    %572 = vmatpush1.msra.mxu0 0.0
    %573 = vmatprep.subr.mxu0 0.0
    %574 = vmatpush1.msra.mxu0 0.0
    %575 = vmatprep.subr.mxu0 0.0
    %576 = vmatpush1.msra.mxu0 0.0
    %577 = vmatprep.subr.mxu0 0.0
    %578 = vmatpush1.msra.mxu0 0.0
    %579 = vmatprep.subr.mxu0 0.0
    %580 = vmatpush1.msra.mxu0 0.0
    %581 = vmatprep.subr.mxu0 0.0
    %582 = vmatpush1.msra.mxu0 0.0
    %583 = vmatprep.subr.mxu0 0.0
    %584 = vmatpush1.msra.mxu0 0.0
    %585 = vmatprep.subr.mxu0 0.0
    %586 = vmatpush1.msra.mxu0 0.0
    %587 = vmatprep.mubr.f32.mxu0 0.0
    %588 = vmatmul.mubr.f32.gmra.mrb[0].mxu0 %v331
    %v589 = vpop.f32.mrb[0].mxu0
    %v590 = vadd.f32 0.0, %v589
    %v591 = vpop.f32.mrb[0].mxu0
    %592 = vdwg.mxu0
    %v594 = vsel %vm73, %v522, 0
    %596 = vmatprep.subr.mxu0 0.0
    %597 = vmatpush1.msra.mxu0 %v43
    %598 = vmatprep.subr.mxu0 0.0
    %599 = vmatpush1.msra.mxu0 %v44
    %600 = vmatprep.subr.mxu0 0.0
    %601 = vmatpush1.msra.mxu0 %v45
    %602 = vmatprep.subr.mxu0 0.0
    %603 = vmatpush1.msra.mxu0 %v46
    %604 = vmatprep.subr.mxu0 0.0
    %605 = vmatpush1.msra.mxu0 0.0
    %606 = vmatprep.subr.mxu0 0.0
    %607 = vmatpush1.msra.mxu0 0.0
    %608 = vmatprep.subr.mxu0 0.0
    %609 = vmatpush1.msra.mxu0 0.0
    %610 = vmatprep.subr.mxu0 0.0
    %611 = vmatpush1.msra.mxu0 0.0
    %612 = vmatprep.subr.mxu0 0.0
    %613 = vmatpush1.msra.mxu0 0.0
    %614 = vmatprep.subr.mxu0 0.0
    %615 = vmatpush1.msra.mxu0 0.0
    %616 = vmatprep.subr.mxu0 0.0
    %617 = vmatpush1.msra.mxu0 0.0
    %618 = vmatprep.subr.mxu0 0.0
    %619 = vmatpush1.msra.mxu0 0.0
    %620 = vmatprep.subr.mxu0 0.0
    %621 = vmatpush1.msra.mxu0 0.0
    %622 = vmatprep.subr.mxu0 0.0
    %623 = vmatpush1.msra.mxu0 0.0
    %624 = vmatprep.subr.mxu0 0.0
    %625 = vmatpush1.msra.mxu0 0.0
    %626 = vmatprep.subr.mxu0 0.0
    %627 = vmatpush1.msra.mxu0 0.0
    %628 = vmatprep.subr.mxu0 0.0
    %629 = vmatpush1.msra.mxu0 0.0
    %630 = vmatprep.subr.mxu0 0.0
    %631 = vmatpush1.msra.mxu0 0.0
    %632 = vmatprep.subr.mxu0 0.0
    %633 = vmatpush1.msra.mxu0 0.0
    %634 = vmatprep.subr.mxu0 0.0
    %635 = vmatpush1.msra.mxu0 0.0
    %636 = vmatprep.subr.mxu0 0.0
    %637 = vmatpush1.msra.mxu0 0.0
    %638 = vmatprep.subr.mxu0 0.0
    %639 = vmatpush1.msra.mxu0 0.0
    %640 = vmatprep.subr.mxu0 0.0
    %641 = vmatpush1.msra.mxu0 0.0
    %642 = vmatprep.subr.mxu0 0.0
    %643 = vmatpush1.msra.mxu0 0.0
    %644 = vmatprep.subr.mxu0 0.0
    %645 = vmatpush1.msra.mxu0 0.0
    %646 = vmatprep.subr.mxu0 0.0
    %647 = vmatpush1.msra.mxu0 0.0
    %648 = vmatprep.subr.mxu0 0.0
    %649 = vmatpush1.msra.mxu0 0.0
    %650 = vmatprep.subr.mxu0 0.0
    %651 = vmatpush1.msra.mxu0 0.0
    %652 = vmatprep.subr.mxu0 0.0
    %653 = vmatpush1.msra.mxu0 0.0
    %654 = vmatprep.subr.mxu0 0.0
    %655 = vmatpush1.msra.mxu0 0.0
    %656 = vmatprep.subr.mxu0 0.0
    %657 = vmatpush1.msra.mxu0 0.0
    %658 = vmatprep.subr.mxu0 0.0
    %659 = vmatpush1.msra.mxu0 0.0
    %660 = vmatprep.mubr.f32.mxu0 0.0
    %661 = vmatmul.mubr.f32.gmra.mrb[0].mxu0 %v594
    %v662 = vpop.f32.mrb[0].mxu0
    %v663 = vadd.f32 %v590, %v662
    %v664 = vpop.f32.mrb[0].mxu0
    %665 = vdwg.mxu0
    %v666 = vadd.f32 %v663, %v224
    %v667 = vxor.u32 %v666, 2147483648
    %v668 = vmul.f32 %v667, 1.442695
    %v669 = vpow.pop %v668
    %v670 = vadd.f32 %v669, 1.0
    %v671 = vrcp.pop %v670
    %v672 = vmul.f32 1.0, %v671
    %v673 = vtanh.pop %v666
    %v674 = vmul.f32 %v672, %v248
    %676 = vrot.lane.b32.xlu0 %v673, 64
    %v677 = vpop.permute.xlu0 %676
    %v679 = vmul.f32 %v672, %v677
    %681 = vrot.lane.b32.xlu0 %v679, 32
    %v682 = vpop.permute.xlu0 %681
    %v684 = vadd.f32 %v674, %v682
    %v685 = vtanh.pop %v684
    %687 = vrot.lane.b32.xlu0 %v685, 64
    %v688 = vpop.permute.xlu0 %687
    %v690 = vmul.f32 %v672, %v688
    %691 = vmatprep.subr.mxu0 0.0
    %692 = vmatpush1.msra.mxu0 %v56
    %693 = vmatprep.subr.mxu0 0.0
    %694 = vmatpush1.msra.mxu0 %v57
    %695 = vmatprep.subr.mxu0 0.0
    %696 = vmatpush1.msra.mxu0 %v58
    %697 = vmatprep.subr.mxu0 0.0
    %698 = vmatpush1.msra.mxu0 %v59
    %699 = vmatprep.subr.mxu0 0.0
    %700 = vmatpush1.msra.mxu0 0.0
    %701 = vmatprep.subr.mxu0 0.0
    %702 = vmatpush1.msra.mxu0 0.0
    %703 = vmatprep.subr.mxu0 0.0
    %704 = vmatpush1.msra.mxu0 0.0
    %705 = vmatprep.subr.mxu0 0.0
    %706 = vmatpush1.msra.mxu0 0.0
    %707 = vmatprep.subr.mxu0 0.0
    %708 = vmatpush1.msra.mxu0 0.0
    %709 = vmatprep.subr.mxu0 0.0
    %710 = vmatpush1.msra.mxu0 0.0
    %711 = vmatprep.subr.mxu0 0.0
    %712 = vmatpush1.msra.mxu0 0.0
    %713 = vmatprep.subr.mxu0 0.0
    %714 = vmatpush1.msra.mxu0 0.0
    %715 = vmatprep.subr.mxu0 0.0
    %716 = vmatpush1.msra.mxu0 0.0
    %717 = vmatprep.subr.mxu0 0.0
    %718 = vmatpush1.msra.mxu0 0.0
    %719 = vmatprep.subr.mxu0 0.0
    %720 = vmatpush1.msra.mxu0 0.0
    %721 = vmatprep.subr.mxu0 0.0
    %722 = vmatpush1.msra.mxu0 0.0
    %723 = vmatprep.subr.mxu0 0.0
    %724 = vmatpush1.msra.mxu0 0.0
    %725 = vmatprep.subr.mxu0 0.0
    %726 = vmatpush1.msra.mxu0 0.0
    %727 = vmatprep.subr.mxu0 0.0
    %728 = vmatpush1.msra.mxu0 0.0
    %729 = vmatprep.subr.mxu0 0.0
    %730 = vmatpush1.msra.mxu0 0.0
    %731 = vmatprep.subr.mxu0 0.0
    %732 = vmatpush1.msra.mxu0 0.0
    %733 = vmatprep.subr.mxu0 0.0
    %734 = vmatpush1.msra.mxu0 0.0
    %735 = vmatprep.subr.mxu0 0.0
    %736 = vmatpush1.msra.mxu0 0.0
    %737 = vmatprep.subr.mxu0 0.0
    %738 = vmatpush1.msra.mxu0 0.0
    %739 = vmatprep.subr.mxu0 0.0
    %740 = vmatpush1.msra.mxu0 0.0
    %741 = vmatprep.subr.mxu0 0.0
    %742 = vmatpush1.msra.mxu0 0.0
    %743 = vmatprep.subr.mxu0 0.0
    %744 = vmatpush1.msra.mxu0 0.0
    %745 = vmatprep.subr.mxu0 0.0
    %746 = vmatpush1.msra.mxu0 0.0
    %747 = vmatprep.subr.mxu0 0.0
    %748 = vmatpush1.msra.mxu0 0.0
    %749 = vmatprep.subr.mxu0 0.0
    %750 = vmatpush1.msra.mxu0 0.0
    %751 = vmatprep.subr.mxu0 0.0
    %752 = vmatpush1.msra.mxu0 0.0
    %753 = vmatprep.subr.mxu0 0.0
    %754 = vmatpush1.msra.mxu0 0.0
    %755 = vmatprep.mubr.f32.mxu0 0.0
    %756 = vmatmul.mubr.f32.gmra.mrb[0].mxu0 %v447
    %v757 = vpop.f32.mrb[0].mxu0
    %v758 = vadd.f32 0.0, %v757
    %v759 = vpop.f32.mrb[0].mxu0
    %760 = vdwg.mxu0
    %762 = vrot.lane.b32.xlu0 %v690, 32
    %v763 = vpop.permute.xlu0 %762
    %v764 = vsel %vm73, %v763, 0
    %766 = vmatprep.subr.mxu0 0.0
    %767 = vmatpush1.msra.mxu0 %v52
    %768 = vmatprep.subr.mxu0 0.0
    %769 = vmatpush1.msra.mxu0 %v53
    %770 = vmatprep.subr.mxu0 0.0
    %771 = vmatpush1.msra.mxu0 %v54
    %772 = vmatprep.subr.mxu0 0.0
    %773 = vmatpush1.msra.mxu0 %v55
    %774 = vmatprep.subr.mxu0 0.0
    %775 = vmatpush1.msra.mxu0 0.0
    %776 = vmatprep.subr.mxu0 0.0
    %777 = vmatpush1.msra.mxu0 0.0
    %778 = vmatprep.subr.mxu0 0.0
    %779 = vmatpush1.msra.mxu0 0.0
    %780 = vmatprep.subr.mxu0 0.0
    %781 = vmatpush1.msra.mxu0 0.0
    %782 = vmatprep.subr.mxu0 0.0
    %783 = vmatpush1.msra.mxu0 0.0
    %784 = vmatprep.subr.mxu0 0.0
    %785 = vmatpush1.msra.mxu0 0.0
    %786 = vmatprep.subr.mxu0 0.0
    %787 = vmatpush1.msra.mxu0 0.0
    %788 = vmatprep.subr.mxu0 0.0
    %789 = vmatpush1.msra.mxu0 0.0
    %790 = vmatprep.subr.mxu0 0.0
    %791 = vmatpush1.msra.mxu0 0.0
    %792 = vmatprep.subr.mxu0 0.0
    %793 = vmatpush1.msra.mxu0 0.0
    %794 = vmatprep.subr.mxu0 0.0
    %795 = vmatpush1.msra.mxu0 0.0
    %796 = vmatprep.subr.mxu0 0.0
    %797 = vmatpush1.msra.mxu0 0.0
    %798 = vmatprep.subr.mxu0 0.0
    %799 = vmatpush1.msra.mxu0 0.0
    %800 = vmatprep.subr.mxu0 0.0
    %801 = vmatpush1.msra.mxu0 0.0
    %802 = vmatprep.subr.mxu0 0.0
    %803 = vmatpush1.msra.mxu0 0.0
    %804 = vmatprep.subr.mxu0 0.0
    %805 = vmatpush1.msra.mxu0 0.0
    %806 = vmatprep.subr.mxu0 0.0
    %807 = vmatpush1.msra.mxu0 0.0
    %808 = vmatprep.subr.mxu0 0.0
    %809 = vmatpush1.msra.mxu0 0.0
    %810 = vmatprep.subr.mxu0 0.0
    %811 = vmatpush1.msra.mxu0 0.0
    %812 = vmatprep.subr.mxu0 0.0
    %813 = vmatpush1.msra.mxu0 0.0
    %814 = vmatprep.subr.mxu0 0.0
    %815 = vmatpush1.msra.mxu0 0.0
    %816 = vmatprep.subr.mxu0 0.0
    %817 = vmatpush1.msra.mxu0 0.0
    %818 = vmatprep.subr.mxu0 0.0
    %819 = vmatpush1.msra.mxu0 0.0
    %820 = vmatprep.subr.mxu0 0.0
    %821 = vmatpush1.msra.mxu0 0.0
    %822 = vmatprep.subr.mxu0 0.0
    %823 = vmatpush1.msra.mxu0 0.0
    %824 = vmatprep.subr.mxu0 0.0
    %825 = vmatpush1.msra.mxu0 0.0
    %826 = vmatprep.subr.mxu0 0.0
    %827 = vmatpush1.msra.mxu0 0.0
    %828 = vmatprep.subr.mxu0 0.0
    %829 = vmatpush1.msra.mxu0 0.0
    %830 = vmatprep.mubr.f32.mxu0 0.0
    %831 = vmatmul.mubr.f32.gmra.mrb[0].mxu0 %v764
    %v832 = vpop.f32.mrb[0].mxu0
    %v833 = vadd.f32 %v758, %v832
    %v834 = vpop.f32.mrb[0].mxu0
    %835 = vdwg.mxu0
    %v836 = vadd.f32 %v833, %v407
    %v837 = vxor.u32 %v836, 2147483648
    %v838 = vmul.f32 %v837, 1.442695
    %v839 = vpow.pop %v838
    %v840 = vadd.f32 %v839, 1.0
    %v841 = vrcp.pop %v840
    %v842 = vmul.f32 1.0, %v841
    %v843 = vtanh.pop %v836
    %v844 = vmul.f32 %v842, %v431
    %846 = vrot.lane.b32.xlu0 %v843, 64
    %v847 = vpop.permute.xlu0 %846
    %v849 = vmul.f32 %v842, %v847
    %851 = vrot.lane.b32.xlu0 %v849, 32
    %v852 = vpop.permute.xlu0 %851
    %v854 = vadd.f32 %v844, %v852
    %v855 = vtanh.pop %v854
    %857 = vrot.lane.b32.xlu0 %v855, 64
    %v858 = vpop.permute.xlu0 %857
    %v860 = vmul.f32 %v842, %v858
    %862 = vrot.lane.b32.xlu0 %v860, 32
    %v863 = vpop.permute.xlu0 %862
    %v864 = vsel %vm73, %v863, 0
    %866 = vmatprep.subr.mxu0 0.0
    %867 = vmatpush1.msra.mxu0 %v61
    %868 = vmatprep.subr.mxu0 0.0
    %869 = vmatpush1.msra.mxu0 %v62
    %870 = vmatprep.subr.mxu0 0.0
    %871 = vmatpush1.msra.mxu0 %v63
    %872 = vmatprep.subr.mxu0 0.0
    %873 = vmatpush1.msra.mxu0 %v64
    %874 = vmatprep.subr.mxu0 0.0
    %875 = vmatpush1.msra.mxu0 0.0
    %876 = vmatprep.subr.mxu0 0.0
    %877 = vmatpush1.msra.mxu0 0.0
    %878 = vmatprep.subr.mxu0 0.0
    %879 = vmatpush1.msra.mxu0 0.0
    %880 = vmatprep.subr.mxu0 0.0
    %881 = vmatpush1.msra.mxu0 0.0
    %882 = vmatprep.subr.mxu0 0.0
    %883 = vmatpush1.msra.mxu0 0.0
    %884 = vmatprep.subr.mxu0 0.0
    %885 = vmatpush1.msra.mxu0 0.0
    %886 = vmatprep.subr.mxu0 0.0
    %887 = vmatpush1.msra.mxu0 0.0
    %888 = vmatprep.subr.mxu0 0.0
    %889 = vmatpush1.msra.mxu0 0.0
    %890 = vmatprep.subr.mxu0 0.0
    %891 = vmatpush1.msra.mxu0 0.0
    %892 = vmatprep.subr.mxu0 0.0
    %893 = vmatpush1.msra.mxu0 0.0
    %894 = vmatprep.subr.mxu0 0.0
    %895 = vmatpush1.msra.mxu0 0.0
    %896 = vmatprep.subr.mxu0 0.0
    %897 = vmatpush1.msra.mxu0 0.0
    %898 = vmatprep.subr.mxu0 0.0
    %899 = vmatpush1.msra.mxu0 0.0
    %900 = vmatprep.subr.mxu0 0.0
    %901 = vmatpush1.msra.mxu0 0.0
    %902 = vmatprep.subr.mxu0 0.0
    %903 = vmatpush1.msra.mxu0 0.0
    %904 = vmatprep.subr.mxu0 0.0
    %905 = vmatpush1.msra.mxu0 0.0
    %906 = vmatprep.subr.mxu0 0.0
    %907 = vmatpush1.msra.mxu0 0.0
    %908 = vmatprep.subr.mxu0 0.0
    %909 = vmatpush1.msra.mxu0 0.0
    %910 = vmatprep.subr.mxu0 0.0
    %911 = vmatpush1.msra.mxu0 0.0
    %912 = vmatprep.subr.mxu0 0.0
    %913 = vmatpush1.msra.mxu0 0.0
    %914 = vmatprep.subr.mxu0 0.0
    %915 = vmatpush1.msra.mxu0 0.0
    %916 = vmatprep.subr.mxu0 0.0
    %917 = vmatpush1.msra.mxu0 0.0
    %918 = vmatprep.subr.mxu0 0.0
    %919 = vmatpush1.msra.mxu0 0.0
    %920 = vmatprep.subr.mxu0 0.0
    %921 = vmatpush1.msra.mxu0 0.0
    %922 = vmatprep.subr.mxu0 0.0
    %923 = vmatpush1.msra.mxu0 0.0
    %924 = vmatprep.subr.mxu0 0.0
    %925 = vmatpush1.msra.mxu0 0.0
    %926 = vmatprep.subr.mxu0 0.0
    %927 = vmatpush1.msra.mxu0 0.0
    %928 = vmatprep.subr.mxu0 0.0
    %929 = vmatpush1.msra.mxu0 0.0
    %930 = vmatprep.mubr.f32.mxu0 0.0
    %931 = vmatmul.mubr.f32.gmra.mrb[0].mxu0 %v864
    %v932 = vpop.f32.mrb[0].mxu0
    %v933 = vadd.f32 %v442, %v932
    %v934 = vpop.f32.mrb[0].mxu0
    %935 = vdwg.mxu0
    %s936 = scalar_lea.vmem %s11, 2
    %937 = vst.msk [vmem:[%s936] sm:$0x3] %vm519, %v933
    %s938 = scalar_lea.vmem %s0, 4
    %v939 = vld [vmem:[%s938] sm:$0x3]
    %940 = vmatprep.subr.mxu0 0.0
    %941 = vmatpush1.msra.mxu0 %v47
    %942 = vmatprep.subr.mxu0 0.0
    %943 = vmatpush1.msra.mxu0 %v48
    %944 = vmatprep.subr.mxu0 0.0
    %945 = vmatpush1.msra.mxu0 %v49
    %946 = vmatprep.subr.mxu0 0.0
    %947 = vmatpush1.msra.mxu0 %v50
    %948 = vmatprep.subr.mxu0 0.0
    %949 = vmatpush1.msra.mxu0 0.0
    %950 = vmatprep.subr.mxu0 0.0
    %951 = vmatpush1.msra.mxu0 0.0
    %952 = vmatprep.subr.mxu0 0.0
    %953 = vmatpush1.msra.mxu0 0.0
    %954 = vmatprep.subr.mxu0 0.0
    %955 = vmatpush1.msra.mxu0 0.0
    %956 = vmatprep.subr.mxu0 0.0
    %957 = vmatpush1.msra.mxu0 0.0
    %958 = vmatprep.subr.mxu0 0.0
    %959 = vmatpush1.msra.mxu0 0.0
    %960 = vmatprep.subr.mxu0 0.0
    %961 = vmatpush1.msra.mxu0 0.0
    %962 = vmatprep.subr.mxu0 0.0
    %963 = vmatpush1.msra.mxu0 0.0
    %964 = vmatprep.subr.mxu0 0.0
    %965 = vmatpush1.msra.mxu0 0.0
    %966 = vmatprep.subr.mxu0 0.0
    %967 = vmatpush1.msra.mxu0 0.0
    %968 = vmatprep.subr.mxu0 0.0
    %969 = vmatpush1.msra.mxu0 0.0
    %970 = vmatprep.subr.mxu0 0.0
    %971 = vmatpush1.msra.mxu0 0.0
    %972 = vmatprep.subr.mxu0 0.0
    %973 = vmatpush1.msra.mxu0 0.0
    %974 = vmatprep.subr.mxu0 0.0
    %975 = vmatpush1.msra.mxu0 0.0
    %976 = vmatprep.subr.mxu0 0.0
    %977 = vmatpush1.msra.mxu0 0.0
    %978 = vmatprep.subr.mxu0 0.0
    %979 = vmatpush1.msra.mxu0 0.0
    %980 = vmatprep.subr.mxu0 0.0
    %981 = vmatpush1.msra.mxu0 0.0
    %982 = vmatprep.subr.mxu0 0.0
    %983 = vmatpush1.msra.mxu0 0.0
    %984 = vmatprep.subr.mxu0 0.0
    %985 = vmatpush1.msra.mxu0 0.0
    %986 = vmatprep.subr.mxu0 0.0
    %987 = vmatpush1.msra.mxu0 0.0
    %988 = vmatprep.subr.mxu0 0.0
    %989 = vmatpush1.msra.mxu0 0.0
    %990 = vmatprep.subr.mxu0 0.0
    %991 = vmatpush1.msra.mxu0 0.0
    %992 = vmatprep.subr.mxu0 0.0
    %993 = vmatpush1.msra.mxu0 0.0
    %994 = vmatprep.subr.mxu0 0.0
    %995 = vmatpush1.msra.mxu0 0.0
    %996 = vmatprep.subr.mxu0 0.0
    %997 = vmatpush1.msra.mxu0 0.0
    %998 = vmatprep.subr.mxu0 0.0
    %999 = vmatpush1.msra.mxu0 0.0
    %1000 = vmatprep.subr.mxu0 0.0
    %1001 = vmatpush1.msra.mxu0 0.0
    %1002 = vmatprep.subr.mxu0 0.0
    %1003 = vmatpush1.msra.mxu0 0.0
    %1004 = vmatprep.mubr.f32.mxu0 0.0
    %1005 = vmatmul.mubr.f32.gmra.mrb[0].mxu0 %v764
    %v1006 = vpop.f32.mrb[0].mxu0
    %v1007 = vadd.f32 0.0, %v1006
    %v1008 = vpop.f32.mrb[0].mxu0
    %1009 = vdwg.mxu0
    %v1011 = vsel %vm73, %v939, 0
    %1013 = vmatprep.subr.mxu0 0.0
    %1014 = vmatpush1.msra.mxu0 %v43
    %1015 = vmatprep.subr.mxu0 0.0
    %1016 = vmatpush1.msra.mxu0 %v44
    %1017 = vmatprep.subr.mxu0 0.0
    %1018 = vmatpush1.msra.mxu0 %v45
    %1019 = vmatprep.subr.mxu0 0.0
    %1020 = vmatpush1.msra.mxu0 %v46
    %1021 = vmatprep.subr.mxu0 0.0
    %1022 = vmatpush1.msra.mxu0 0.0
    %1023 = vmatprep.subr.mxu0 0.0
    %1024 = vmatpush1.msra.mxu0 0.0
    %1025 = vmatprep.subr.mxu0 0.0
    %1026 = vmatpush1.msra.mxu0 0.0
    %1027 = vmatprep.subr.mxu0 0.0
    %1028 = vmatpush1.msra.mxu0 0.0
    %1029 = vmatprep.subr.mxu0 0.0
    %1030 = vmatpush1.msra.mxu0 0.0
    %1031 = vmatprep.subr.mxu0 0.0
    %1032 = vmatpush1.msra.mxu0 0.0
    %1033 = vmatprep.subr.mxu0 0.0
    %1034 = vmatpush1.msra.mxu0 0.0
    %1035 = vmatprep.subr.mxu0 0.0
    %1036 = vmatpush1.msra.mxu0 0.0
    %1037 = vmatprep.subr.mxu0 0.0
    %1038 = vmatpush1.msra.mxu0 0.0
    %1039 = vmatprep.subr.mxu0 0.0
    %1040 = vmatpush1.msra.mxu0 0.0
    %1041 = vmatprep.subr.mxu0 0.0
    %1042 = vmatpush1.msra.mxu0 0.0
    %1043 = vmatprep.subr.mxu0 0.0
    %1044 = vmatpush1.msra.mxu0 0.0
    %1045 = vmatprep.subr.mxu0 0.0
    %1046 = vmatpush1.msra.mxu0 0.0
    %1047 = vmatprep.subr.mxu0 0.0
    %1048 = vmatpush1.msra.mxu0 0.0
    %1049 = vmatprep.subr.mxu0 0.0
    %1050 = vmatpush1.msra.mxu0 0.0
    %1051 = vmatprep.subr.mxu0 0.0
    %1052 = vmatpush1.msra.mxu0 0.0
    %1053 = vmatprep.subr.mxu0 0.0
    %1054 = vmatpush1.msra.mxu0 0.0
    %1055 = vmatprep.subr.mxu0 0.0
    %1056 = vmatpush1.msra.mxu0 0.0
    %1057 = vmatprep.subr.mxu0 0.0
    %1058 = vmatpush1.msra.mxu0 0.0
    %1059 = vmatprep.subr.mxu0 0.0
    %1060 = vmatpush1.msra.mxu0 0.0
    %1061 = vmatprep.subr.mxu0 0.0
    %1062 = vmatpush1.msra.mxu0 0.0
    %1063 = vmatprep.subr.mxu0 0.0
    %1064 = vmatpush1.msra.mxu0 0.0
    %1065 = vmatprep.subr.mxu0 0.0
    %1066 = vmatpush1.msra.mxu0 0.0
    %1067 = vmatprep.subr.mxu0 0.0
    %1068 = vmatpush1.msra.mxu0 0.0
    %1069 = vmatprep.subr.mxu0 0.0
    %1070 = vmatpush1.msra.mxu0 0.0
    %1071 = vmatprep.subr.mxu0 0.0
    %1072 = vmatpush1.msra.mxu0 0.0
    %1073 = vmatprep.subr.mxu0 0.0
    %1074 = vmatpush1.msra.mxu0 0.0
    %1075 = vmatprep.subr.mxu0 0.0
    %1076 = vmatpush1.msra.mxu0 0.0
    %1077 = vmatprep.mubr.f32.mxu0 0.0
    %1078 = vmatmul.mubr.f32.gmra.mrb[0].mxu0 %v1011
    %v1079 = vpop.f32.mrb[0].mxu0
    %v1080 = vadd.f32 %v1007, %v1079
    %v1081 = vpop.f32.mrb[0].mxu0
    %1082 = vdwg.mxu0
    %v1083 = vadd.f32 %v1080, %v224
    %v1084 = vxor.u32 %v1083, 2147483648
    %v1085 = vmul.f32 %v1084, 1.442695
    %v1086 = vpow.pop %v1085
    %v1087 = vadd.f32 %v1086, 1.0
    %v1088 = vrcp.pop %v1087
    %v1089 = vmul.f32 1.0, %v1088
    %v1090 = vtanh.pop %v1083
    %v1091 = vmul.f32 %v1089, %v684
    %1093 = vrot.lane.b32.xlu0 %v1090, 64
    %v1094 = vpop.permute.xlu0 %1093
    %v1096 = vmul.f32 %v1089, %v1094
    %1098 = vrot.lane.b32.xlu0 %v1096, 32
    %v1099 = vpop.permute.xlu0 %1098
    %v1101 = vadd.f32 %v1091, %v1099
    %v1102 = vtanh.pop %v1101
    %1104 = vrot.lane.b32.xlu0 %v1102, 64
    %v1105 = vpop.permute.xlu0 %1104
    %v1107 = vmul.f32 %v1089, %v1105
    %1108 = vmatprep.subr.mxu0 0.0
    %1109 = vmatpush1.msra.mxu0 %v56
    %1110 = vmatprep.subr.mxu0 0.0
    %1111 = vmatpush1.msra.mxu0 %v57
    %1112 = vmatprep.subr.mxu0 0.0
    %1113 = vmatpush1.msra.mxu0 %v58
    %1114 = vmatprep.subr.mxu0 0.0
    %1115 = vmatpush1.msra.mxu0 %v59
    %1116 = vmatprep.subr.mxu0 0.0
    %1117 = vmatpush1.msra.mxu0 0.0
    %1118 = vmatprep.subr.mxu0 0.0
    %1119 = vmatpush1.msra.mxu0 0.0
    %1120 = vmatprep.subr.mxu0 0.0
    %1121 = vmatpush1.msra.mxu0 0.0
    %1122 = vmatprep.subr.mxu0 0.0
    %1123 = vmatpush1.msra.mxu0 0.0
    %1124 = vmatprep.subr.mxu0 0.0
    %1125 = vmatpush1.msra.mxu0 0.0
    %1126 = vmatprep.subr.mxu0 0.0
    %1127 = vmatpush1.msra.mxu0 0.0
    %1128 = vmatprep.subr.mxu0 0.0
    %1129 = vmatpush1.msra.mxu0 0.0
    %1130 = vmatprep.subr.mxu0 0.0
    %1131 = vmatpush1.msra.mxu0 0.0
    %1132 = vmatprep.subr.mxu0 0.0
    %1133 = vmatpush1.msra.mxu0 0.0
    %1134 = vmatprep.subr.mxu0 0.0
    %1135 = vmatpush1.msra.mxu0 0.0
    %1136 = vmatprep.subr.mxu0 0.0
    %1137 = vmatpush1.msra.mxu0 0.0
    %1138 = vmatprep.subr.mxu0 0.0
    %1139 = vmatpush1.msra.mxu0 0.0
    %1140 = vmatprep.subr.mxu0 0.0
    %1141 = vmatpush1.msra.mxu0 0.0
    %1142 = vmatprep.subr.mxu0 0.0
    %1143 = vmatpush1.msra.mxu0 0.0
    %1144 = vmatprep.subr.mxu0 0.0
    %1145 = vmatpush1.msra.mxu0 0.0
    %1146 = vmatprep.subr.mxu0 0.0
    %1147 = vmatpush1.msra.mxu0 0.0
    %1148 = vmatprep.subr.mxu0 0.0
    %1149 = vmatpush1.msra.mxu0 0.0
    %1150 = vmatprep.subr.mxu0 0.0
    %1151 = vmatpush1.msra.mxu0 0.0
    %1152 = vmatprep.subr.mxu0 0.0
    %1153 = vmatpush1.msra.mxu0 0.0
    %1154 = vmatprep.subr.mxu0 0.0
    %1155 = vmatpush1.msra.mxu0 0.0
    %1156 = vmatprep.subr.mxu0 0.0
    %1157 = vmatpush1.msra.mxu0 0.0
    %1158 = vmatprep.subr.mxu0 0.0
    %1159 = vmatpush1.msra.mxu0 0.0
    %1160 = vmatprep.subr.mxu0 0.0
    %1161 = vmatpush1.msra.mxu0 0.0
    %1162 = vmatprep.subr.mxu0 0.0
    %1163 = vmatpush1.msra.mxu0 0.0
    %1164 = vmatprep.subr.mxu0 0.0
    %1165 = vmatpush1.msra.mxu0 0.0
    %1166 = vmatprep.subr.mxu0 0.0
    %1167 = vmatpush1.msra.mxu0 0.0
    %1168 = vmatprep.subr.mxu0 0.0
    %1169 = vmatpush1.msra.mxu0 0.0
    %1170 = vmatprep.subr.mxu0 0.0
    %1171 = vmatpush1.msra.mxu0 0.0
    %1172 = vmatprep.mubr.f32.mxu0 0.0
    %1173 = vmatmul.mubr.f32.gmra.mrb[0].mxu0 %v864
    %v1174 = vpop.f32.mrb[0].mxu0
    %v1175 = vadd.f32 0.0, %v1174
    %v1176 = vpop.f32.mrb[0].mxu0
    %1177 = vdwg.mxu0
    %1179 = vrot.lane.b32.xlu0 %v1107, 32
    %v1180 = vpop.permute.xlu0 %1179
    %v1181 = vsel %vm73, %v1180, 0
    %1183 = vmatprep.subr.mxu0 0.0
    %1184 = vmatpush1.msra.mxu0 %v52
    %1185 = vmatprep.subr.mxu0 0.0
    %1186 = vmatpush1.msra.mxu0 %v53
    %1187 = vmatprep.subr.mxu0 0.0
    %1188 = vmatpush1.msra.mxu0 %v54
    %1189 = vmatprep.subr.mxu0 0.0
    %1190 = vmatpush1.msra.mxu0 %v55
    %1191 = vmatprep.subr.mxu0 0.0
    %1192 = vmatpush1.msra.mxu0 0.0
    %1193 = vmatprep.subr.mxu0 0.0
    %1194 = vmatpush1.msra.mxu0 0.0
    %1195 = vmatprep.subr.mxu0 0.0
    %1196 = vmatpush1.msra.mxu0 0.0
    %1197 = vmatprep.subr.mxu0 0.0
    %1198 = vmatpush1.msra.mxu0 0.0
    %1199 = vmatprep.subr.mxu0 0.0
    %1200 = vmatpush1.msra.mxu0 0.0
    %1201 = vmatprep.subr.mxu0 0.0
    %1202 = vmatpush1.msra.mxu0 0.0
    %1203 = vmatprep.subr.mxu0 0.0
    %1204 = vmatpush1.msra.mxu0 0.0
    %1205 = vmatprep.subr.mxu0 0.0
    %1206 = vmatpush1.msra.mxu0 0.0
    %1207 = vmatprep.subr.mxu0 0.0
    %1208 = vmatpush1.msra.mxu0 0.0
    %1209 = vmatprep.subr.mxu0 0.0
    %1210 = vmatpush1.msra.mxu0 0.0
    %1211 = vmatprep.subr.mxu0 0.0
    %1212 = vmatpush1.msra.mxu0 0.0
    %1213 = vmatprep.subr.mxu0 0.0
    %1214 = vmatpush1.msra.mxu0 0.0
    %1215 = vmatprep.subr.mxu0 0.0
    %1216 = vmatpush1.msra.mxu0 0.0
    %1217 = vmatprep.subr.mxu0 0.0
    %1218 = vmatpush1.msra.mxu0 0.0
    %1219 = vmatprep.subr.mxu0 0.0
    %1220 = vmatpush1.msra.mxu0 0.0
    %1221 = vmatprep.subr.mxu0 0.0
    %1222 = vmatpush1.msra.mxu0 0.0
    %1223 = vmatprep.subr.mxu0 0.0
    %1224 = vmatpush1.msra.mxu0 0.0
    %1225 = vmatprep.subr.mxu0 0.0
    %1226 = vmatpush1.msra.mxu0 0.0
    %1227 = vmatprep.subr.mxu0 0.0
    %1228 = vmatpush1.msra.mxu0 0.0
    %1229 = vmatprep.subr.mxu0 0.0
    %1230 = vmatpush1.msra.mxu0 0.0
    %1231 = vmatprep.subr.mxu0 0.0
    %1232 = vmatpush1.msra.mxu0 0.0
    %1233 = vmatprep.subr.mxu0 0.0
    %1234 = vmatpush1.msra.mxu0 0.0
    %1235 = vmatprep.subr.mxu0 0.0
    %1236 = vmatpush1.msra.mxu0 0.0
    %1237 = vmatprep.subr.mxu0 0.0
    %1238 = vmatpush1.msra.mxu0 0.0
    %1239 = vmatprep.subr.mxu0 0.0
    %1240 = vmatpush1.msra.mxu0 0.0
    %1241 = vmatprep.subr.mxu0 0.0
    %1242 = vmatpush1.msra.mxu0 0.0
    %1243 = vmatprep.subr.mxu0 0.0
    %1244 = vmatpush1.msra.mxu0 0.0
    %1245 = vmatprep.subr.mxu0 0.0
    %1246 = vmatpush1.msra.mxu0 0.0
    %1247 = vmatprep.mubr.f32.mxu0 0.0
    %1248 = vmatmul.mubr.f32.gmra.mrb[0].mxu0 %v1181
    %v1249 = vpop.f32.mrb[0].mxu0
    %v1250 = vadd.f32 %v1175, %v1249
    %v1251 = vpop.f32.mrb[0].mxu0
    %1252 = vdwg.mxu0
    %v1253 = vadd.f32 %v1250, %v407
    %v1254 = vxor.u32 %v1253, 2147483648
    %v1255 = vmul.f32 %v1254, 1.442695
    %v1256 = vpow.pop %v1255
    %v1257 = vadd.f32 %v1256, 1.0
    %v1258 = vrcp.pop %v1257
    %v1259 = vmul.f32 1.0, %v1258
    %v1260 = vtanh.pop %v1253
    %v1261 = vmul.f32 %v1259, %v854
    %1263 = vrot.lane.b32.xlu0 %v1260, 64
    %v1264 = vpop.permute.xlu0 %1263
    %v1266 = vmul.f32 %v1259, %v1264
    %1268 = vrot.lane.b32.xlu0 %v1266, 32
    %v1269 = vpop.permute.xlu0 %1268
    %v1271 = vadd.f32 %v1261, %v1269
    %v1272 = vtanh.pop %v1271
    %1274 = vrot.lane.b32.xlu0 %v1272, 64
    %v1275 = vpop.permute.xlu0 %1274
    %v1277 = vmul.f32 %v1259, %v1275
    %1279 = vrot.lane.b32.xlu0 %v1277, 32
    %v1280 = vpop.permute.xlu0 %1279
    %v1281 = vsel %vm73, %v1280, 0
    %1283 = vmatprep.subr.mxu0 0.0
    %1284 = vmatpush1.msra.mxu0 %v61
    %1285 = vmatprep.subr.mxu0 0.0
    %1286 = vmatpush1.msra.mxu0 %v62
    %1287 = vmatprep.subr.mxu0 0.0
    %1288 = vmatpush1.msra.mxu0 %v63
    %1289 = vmatprep.subr.mxu0 0.0
    %1290 = vmatpush1.msra.mxu0 %v64
    %1291 = vmatprep.subr.mxu0 0.0
    %1292 = vmatpush1.msra.mxu0 0.0
    %1293 = vmatprep.subr.mxu0 0.0
    %1294 = vmatpush1.msra.mxu0 0.0
    %1295 = vmatprep.subr.mxu0 0.0
    %1296 = vmatpush1.msra.mxu0 0.0
    %1297 = vmatprep.subr.mxu0 0.0
    %1298 = vmatpush1.msra.mxu0 0.0
    %1299 = vmatprep.subr.mxu0 0.0
    %1300 = vmatpush1.msra.mxu0 0.0
    %1301 = vmatprep.subr.mxu0 0.0
    %1302 = vmatpush1.msra.mxu0 0.0
    %1303 = vmatprep.subr.mxu0 0.0
    %1304 = vmatpush1.msra.mxu0 0.0
    %1305 = vmatprep.subr.mxu0 0.0
    %1306 = vmatpush1.msra.mxu0 0.0
    %1307 = vmatprep.subr.mxu0 0.0
    %1308 = vmatpush1.msra.mxu0 0.0
    %1309 = vmatprep.subr.mxu0 0.0
    %1310 = vmatpush1.msra.mxu0 0.0
    %1311 = vmatprep.subr.mxu0 0.0
    %1312 = vmatpush1.msra.mxu0 0.0
    %1313 = vmatprep.subr.mxu0 0.0
    %1314 = vmatpush1.msra.mxu0 0.0
    %1315 = vmatprep.subr.mxu0 0.0
    %1316 = vmatpush1.msra.mxu0 0.0
    %1317 = vmatprep.subr.mxu0 0.0
    %1318 = vmatpush1.msra.mxu0 0.0
    %1319 = vmatprep.subr.mxu0 0.0
    %1320 = vmatpush1.msra.mxu0 0.0
    %1321 = vmatprep.subr.mxu0 0.0
    %1322 = vmatpush1.msra.mxu0 0.0
    %1323 = vmatprep.subr.mxu0 0.0
    %1324 = vmatpush1.msra.mxu0 0.0
    %1325 = vmatprep.subr.mxu0 0.0
    %1326 = vmatpush1.msra.mxu0 0.0
    %1327 = vmatprep.subr.mxu0 0.0
    %1328 = vmatpush1.msra.mxu0 0.0
    %1329 = vmatprep.subr.mxu0 0.0
    %1330 = vmatpush1.msra.mxu0 0.0
    %1331 = vmatprep.subr.mxu0 0.0
    %1332 = vmatpush1.msra.mxu0 0.0
    %1333 = vmatprep.subr.mxu0 0.0
    %1334 = vmatpush1.msra.mxu0 0.0
    %1335 = vmatprep.subr.mxu0 0.0
    %1336 = vmatpush1.msra.mxu0 0.0
    %1337 = vmatprep.subr.mxu0 0.0
    %1338 = vmatpush1.msra.mxu0 0.0
    %1339 = vmatprep.subr.mxu0 0.0
    %1340 = vmatpush1.msra.mxu0 0.0
    %1341 = vmatprep.subr.mxu0 0.0
    %1342 = vmatpush1.msra.mxu0 0.0
    %1343 = vmatprep.subr.mxu0 0.0
    %1344 = vmatpush1.msra.mxu0 0.0
    %1345 = vmatprep.subr.mxu0 0.0
    %1346 = vmatpush1.msra.mxu0 0.0
    %1347 = vmatprep.mubr.f32.mxu0 0.0
    %1348 = vmatmul.mubr.f32.gmra.mrb[0].mxu0 %v1281
    %v1349 = vpop.f32.mrb[0].mxu0
    %v1350 = vadd.f32 %v442, %v1349
    %v1351 = vpop.f32.mrb[0].mxu0
    %1352 = vdwg.mxu0
    %s1353 = scalar_lea.vmem %s11, 4
    %1354 = vst.msk [vmem:[%s1353] sm:$0x3] %vm519, %v1350
    %s1355 = scalar_lea.vmem %s0, 6
    %v1356 = vld [vmem:[%s1355] sm:$0x3]
    %1357 = vmatprep.subr.mxu0 0.0
    %1358 = vmatpush1.msra.mxu0 %v47
    %1359 = vmatprep.subr.mxu0 0.0
    %1360 = vmatpush1.msra.mxu0 %v48
    %1361 = vmatprep.subr.mxu0 0.0
    %1362 = vmatpush1.msra.mxu0 %v49
    %1363 = vmatprep.subr.mxu0 0.0
    %1364 = vmatpush1.msra.mxu0 %v50
    %1365 = vmatprep.subr.mxu0 0.0
    %1366 = vmatpush1.msra.mxu0 0.0
    %1367 = vmatprep.subr.mxu0 0.0
    %1368 = vmatpush1.msra.mxu0 0.0
    %1369 = vmatprep.subr.mxu0 0.0
    %1370 = vmatpush1.msra.mxu0 0.0
    %1371 = vmatprep.subr.mxu0 0.0
    %1372 = vmatpush1.msra.mxu0 0.0
    %1373 = vmatprep.subr.mxu0 0.0
    %1374 = vmatpush1.msra.mxu0 0.0
    %1375 = vmatprep.subr.mxu0 0.0
    %1376 = vmatpush1.msra.mxu0 0.0
    %1377 = vmatprep.subr.mxu0 0.0
    %1378 = vmatpush1.msra.mxu0 0.0
    %1379 = vmatprep.subr.mxu0 0.0
    %1380 = vmatpush1.msra.mxu0 0.0
    %1381 = vmatprep.subr.mxu0 0.0
    %1382 = vmatpush1.msra.mxu0 0.0
    %1383 = vmatprep.subr.mxu0 0.0
    %1384 = vmatpush1.msra.mxu0 0.0
    %1385 = vmatprep.subr.mxu0 0.0
    %1386 = vmatpush1.msra.mxu0 0.0
    %1387 = vmatprep.subr.mxu0 0.0
    %1388 = vmatpush1.msra.mxu0 0.0
    %1389 = vmatprep.subr.mxu0 0.0
    %1390 = vmatpush1.msra.mxu0 0.0
    %1391 = vmatprep.subr.mxu0 0.0
    %1392 = vmatpush1.msra.mxu0 0.0
    %1393 = vmatprep.subr.mxu0 0.0
    %1394 = vmatpush1.msra.mxu0 0.0
    %1395 = vmatprep.subr.mxu0 0.0
    %1396 = vmatpush1.msra.mxu0 0.0
    %1397 = vmatprep.subr.mxu0 0.0
    %1398 = vmatpush1.msra.mxu0 0.0
    %1399 = vmatprep.subr.mxu0 0.0
    %1400 = vmatpush1.msra.mxu0 0.0
    %1401 = vmatprep.subr.mxu0 0.0
    %1402 = vmatpush1.msra.mxu0 0.0
    %1403 = vmatprep.subr.mxu0 0.0
    %1404 = vmatpush1.msra.mxu0 0.0
    %1405 = vmatprep.subr.mxu0 0.0
    %1406 = vmatpush1.msra.mxu0 0.0
    %1407 = vmatprep.subr.mxu0 0.0
    %1408 = vmatpush1.msra.mxu0 0.0
    %1409 = vmatprep.subr.mxu0 0.0
    %1410 = vmatpush1.msra.mxu0 0.0
    %1411 = vmatprep.subr.mxu0 0.0
    %1412 = vmatpush1.msra.mxu0 0.0
    %1413 = vmatprep.subr.mxu0 0.0
    %1414 = vmatpush1.msra.mxu0 0.0
    %1415 = vmatprep.subr.mxu0 0.0
    %1416 = vmatpush1.msra.mxu0 0.0
    %1417 = vmatprep.subr.mxu0 0.0
    %1418 = vmatpush1.msra.mxu0 0.0
    %1419 = vmatprep.subr.mxu0 0.0
    %1420 = vmatpush1.msra.mxu0 0.0
    %1421 = vmatprep.mubr.f32.mxu0 0.0
    %1422 = vmatmul.mubr.f32.gmra.mrb[0].mxu0 %v1181
    %v1423 = vpop.f32.mrb[0].mxu0
    %v1424 = vadd.f32 0.0, %v1423
    %v1425 = vpop.f32.mrb[0].mxu0
    %1426 = vdwg.mxu0
    %v1428 = vsel %vm73, %v1356, 0
    %1430 = vmatprep.subr.mxu0 0.0
    %1431 = vmatpush1.msra.mxu0 %v43
    %1432 = vmatprep.subr.mxu0 0.0
    %1433 = vmatpush1.msra.mxu0 %v44
    %1434 = vmatprep.subr.mxu0 0.0
    %1435 = vmatpush1.msra.mxu0 %v45
    %1436 = vmatprep.subr.mxu0 0.0
    %1437 = vmatpush1.msra.mxu0 %v46
    %1438 = vmatprep.subr.mxu0 0.0
    %1439 = vmatpush1.msra.mxu0 0.0
    %1440 = vmatprep.subr.mxu0 0.0
    %1441 = vmatpush1.msra.mxu0 0.0
    %1442 = vmatprep.subr.mxu0 0.0
    %1443 = vmatpush1.msra.mxu0 0.0
    %1444 = vmatprep.subr.mxu0 0.0
    %1445 = vmatpush1.msra.mxu0 0.0
    %1446 = vmatprep.subr.mxu0 0.0
    %1447 = vmatpush1.msra.mxu0 0.0
    %1448 = vmatprep.subr.mxu0 0.0
    %1449 = vmatpush1.msra.mxu0 0.0
    %1450 = vmatprep.subr.mxu0 0.0
    %1451 = vmatpush1.msra.mxu0 0.0
    %1452 = vmatprep.subr.mxu0 0.0
    %1453 = vmatpush1.msra.mxu0 0.0
    %1454 = vmatprep.subr.mxu0 0.0
    %1455 = vmatpush1.msra.mxu0 0.0
    %1456 = vmatprep.subr.mxu0 0.0
    %1457 = vmatpush1.msra.mxu0 0.0
    %1458 = vmatprep.subr.mxu0 0.0
    %1459 = vmatpush1.msra.mxu0 0.0
    %1460 = vmatprep.subr.mxu0 0.0
    %1461 = vmatpush1.msra.mxu0 0.0
    %1462 = vmatprep.subr.mxu0 0.0
    %1463 = vmatpush1.msra.mxu0 0.0
    %1464 = vmatprep.subr.mxu0 0.0
    %1465 = vmatpush1.msra.mxu0 0.0
    %1466 = vmatprep.subr.mxu0 0.0
    %1467 = vmatpush1.msra.mxu0 0.0
    %1468 = vmatprep.subr.mxu0 0.0
    %1469 = vmatpush1.msra.mxu0 0.0
    %1470 = vmatprep.subr.mxu0 0.0
    %1471 = vmatpush1.msra.mxu0 0.0
    %1472 = vmatprep.subr.mxu0 0.0
    %1473 = vmatpush1.msra.mxu0 0.0
    %1474 = vmatprep.subr.mxu0 0.0
    %1475 = vmatpush1.msra.mxu0 0.0
    %1476 = vmatprep.subr.mxu0 0.0
    %1477 = vmatpush1.msra.mxu0 0.0
    %1478 = vmatprep.subr.mxu0 0.0
    %1479 = vmatpush1.msra.mxu0 0.0
    %1480 = vmatprep.subr.mxu0 0.0
    %1481 = vmatpush1.msra.mxu0 0.0
    %1482 = vmatprep.subr.mxu0 0.0
    %1483 = vmatpush1.msra.mxu0 0.0
    %1484 = vmatprep.subr.mxu0 0.0
    %1485 = vmatpush1.msra.mxu0 0.0
    %1486 = vmatprep.subr.mxu0 0.0
    %1487 = vmatpush1.msra.mxu0 0.0
    %1488 = vmatprep.subr.mxu0 0.0
    %1489 = vmatpush1.msra.mxu0 0.0
    %1490 = vmatprep.subr.mxu0 0.0
    %1491 = vmatpush1.msra.mxu0 0.0
    %1492 = vmatprep.subr.mxu0 0.0
    %1493 = vmatpush1.msra.mxu0 0.0
    %1494 = vmatprep.mubr.f32.mxu0 0.0
    %1495 = vmatmul.mubr.f32.gmra.mrb[0].mxu0 %v1428
    %v1496 = vpop.f32.mrb[0].mxu0
    %v1497 = vadd.f32 %v1424, %v1496
    %v1498 = vpop.f32.mrb[0].mxu0
    %1499 = vdwg.mxu0
    %v1500 = vadd.f32 %v1497, %v224
    %v1501 = vxor.u32 %v1500, 2147483648
    %v1502 = vmul.f32 %v1501, 1.442695
    %v1503 = vpow.pop %v1502
    %v1504 = vadd.f32 %v1503, 1.0
    %v1505 = vrcp.pop %v1504
    %v1506 = vmul.f32 1.0, %v1505
    %v1507 = vtanh.pop %v1500
    %v1508 = vmul.f32 %v1506, %v1101
    %1510 = vrot.lane.b32.xlu0 %v1507, 64
    %v1511 = vpop.permute.xlu0 %1510
    %v1513 = vmul.f32 %v1506, %v1511
    %1515 = vrot.lane.b32.xlu0 %v1513, 32
    %v1516 = vpop.permute.xlu0 %1515
    %v1518 = vadd.f32 %v1508, %v1516
    %v1519 = vtanh.pop %v1518
    %1521 = vrot.lane.b32.xlu0 %v1519, 64
    %v1522 = vpop.permute.xlu0 %1521
    %v1524 = vmul.f32 %v1506, %v1522
    %1525 = vmatprep.subr.mxu0 0.0
    %1526 = vmatpush1.msra.mxu0 %v56
    %1527 = vmatprep.subr.mxu0 0.0
    %1528 = vmatpush1.msra.mxu0 %v57
    %1529 = vmatprep.subr.mxu0 0.0
    %1530 = vmatpush1.msra.mxu0 %v58
    %1531 = vmatprep.subr.mxu0 0.0
    %1532 = vmatpush1.msra.mxu0 %v59
    %1533 = vmatprep.subr.mxu0 0.0
    %1534 = vmatpush1.msra.mxu0 0.0
    %1535 = vmatprep.subr.mxu0 0.0
    %1536 = vmatpush1.msra.mxu0 0.0
    %1537 = vmatprep.subr.mxu0 0.0
    %1538 = vmatpush1.msra.mxu0 0.0
    %1539 = vmatprep.subr.mxu0 0.0
    %1540 = vmatpush1.msra.mxu0 0.0
    %1541 = vmatprep.subr.mxu0 0.0
    %1542 = vmatpush1.msra.mxu0 0.0
    %1543 = vmatprep.subr.mxu0 0.0
    %1544 = vmatpush1.msra.mxu0 0.0
    %1545 = vmatprep.subr.mxu0 0.0
    %1546 = vmatpush1.msra.mxu0 0.0
    %1547 = vmatprep.subr.mxu0 0.0
    %1548 = vmatpush1.msra.mxu0 0.0
    %1549 = vmatprep.subr.mxu0 0.0
    %1550 = vmatpush1.msra.mxu0 0.0
    %1551 = vmatprep.subr.mxu0 0.0
    %1552 = vmatpush1.msra.mxu0 0.0
    %1553 = vmatprep.subr.mxu0 0.0
    %1554 = vmatpush1.msra.mxu0 0.0
    %1555 = vmatprep.subr.mxu0 0.0
    %1556 = vmatpush1.msra.mxu0 0.0
    %1557 = vmatprep.subr.mxu0 0.0
    %1558 = vmatpush1.msra.mxu0 0.0
    %1559 = vmatprep.subr.mxu0 0.0
    %1560 = vmatpush1.msra.mxu0 0.0
    %1561 = vmatprep.subr.mxu0 0.0
    %1562 = vmatpush1.msra.mxu0 0.0
    %1563 = vmatprep.subr.mxu0 0.0
    %1564 = vmatpush1.msra.mxu0 0.0
    %1565 = vmatprep.subr.mxu0 0.0
    %1566 = vmatpush1.msra.mxu0 0.0
    %1567 = vmatprep.subr.mxu0 0.0
    %1568 = vmatpush1.msra.mxu0 0.0
    %1569 = vmatprep.subr.mxu0 0.0
    %1570 = vmatpush1.msra.mxu0 0.0
    %1571 = vmatprep.subr.mxu0 0.0
    %1572 = vmatpush1.msra.mxu0 0.0
    %1573 = vmatprep.subr.mxu0 0.0
    %1574 = vmatpush1.msra.mxu0 0.0
    %1575 = vmatprep.subr.mxu0 0.0
    %1576 = vmatpush1.msra.mxu0 0.0
    %1577 = vmatprep.subr.mxu0 0.0
    %1578 = vmatpush1.msra.mxu0 0.0
    %1579 = vmatprep.subr.mxu0 0.0
    %1580 = vmatpush1.msra.mxu0 0.0
    %1581 = vmatprep.subr.mxu0 0.0
    %1582 = vmatpush1.msra.mxu0 0.0
    %1583 = vmatprep.subr.mxu0 0.0
    %1584 = vmatpush1.msra.mxu0 0.0
    %1585 = vmatprep.subr.mxu0 0.0
    %1586 = vmatpush1.msra.mxu0 0.0
    %1587 = vmatprep.subr.mxu0 0.0
    %1588 = vmatpush1.msra.mxu0 0.0
    %1589 = vmatprep.mubr.f32.mxu0 0.0
    %1590 = vmatmul.mubr.f32.gmra.mrb[0].mxu0 %v1281
    %v1591 = vpop.f32.mrb[0].mxu0
    %v1592 = vadd.f32 0.0, %v1591
    %v1593 = vpop.f32.mrb[0].mxu0
    %1594 = vdwg.mxu0
    %1596 = vrot.lane.b32.xlu0 %v1524, 32
    %v1597 = vpop.permute.xlu0 %1596
    %v1598 = vsel %vm73, %v1597, 0
    %1600 = vmatprep.subr.mxu0 0.0
    %1601 = vmatpush1.msra.mxu0 %v52
    %1602 = vmatprep.subr.mxu0 0.0
    %1603 = vmatpush1.msra.mxu0 %v53
    %1604 = vmatprep.subr.mxu0 0.0
    %1605 = vmatpush1.msra.mxu0 %v54
    %1606 = vmatprep.subr.mxu0 0.0
    %1607 = vmatpush1.msra.mxu0 %v55
    %1608 = vmatprep.subr.mxu0 0.0
    %1609 = vmatpush1.msra.mxu0 0.0
    %1610 = vmatprep.subr.mxu0 0.0
    %1611 = vmatpush1.msra.mxu0 0.0
    %1612 = vmatprep.subr.mxu0 0.0
    %1613 = vmatpush1.msra.mxu0 0.0
    %1614 = vmatprep.subr.mxu0 0.0
    %1615 = vmatpush1.msra.mxu0 0.0
    %1616 = vmatprep.subr.mxu0 0.0
    %1617 = vmatpush1.msra.mxu0 0.0
    %1618 = vmatprep.subr.mxu0 0.0
    %1619 = vmatpush1.msra.mxu0 0.0
    %1620 = vmatprep.subr.mxu0 0.0
    %1621 = vmatpush1.msra.mxu0 0.0
    %1622 = vmatprep.subr.mxu0 0.0
    %1623 = vmatpush1.msra.mxu0 0.0
    %1624 = vmatprep.subr.mxu0 0.0
    %1625 = vmatpush1.msra.mxu0 0.0
    %1626 = vmatprep.subr.mxu0 0.0
    %1627 = vmatpush1.msra.mxu0 0.0
    %1628 = vmatprep.subr.mxu0 0.0
    %1629 = vmatpush1.msra.mxu0 0.0
    %1630 = vmatprep.subr.mxu0 0.0
    %1631 = vmatpush1.msra.mxu0 0.0
    %1632 = vmatprep.subr.mxu0 0.0
    %1633 = vmatpush1.msra.mxu0 0.0
    %1634 = vmatprep.subr.mxu0 0.0
    %1635 = vmatpush1.msra.mxu0 0.0
    %1636 = vmatprep.subr.mxu0 0.0
    %1637 = vmatpush1.msra.mxu0 0.0
    %1638 = vmatprep.subr.mxu0 0.0
    %1639 = vmatpush1.msra.mxu0 0.0
    %1640 = vmatprep.subr.mxu0 0.0
    %1641 = vmatpush1.msra.mxu0 0.0
    %1642 = vmatprep.subr.mxu0 0.0
    %1643 = vmatpush1.msra.mxu0 0.0
    %1644 = vmatprep.subr.mxu0 0.0
    %1645 = vmatpush1.msra.mxu0 0.0
    %1646 = vmatprep.subr.mxu0 0.0
    %1647 = vmatpush1.msra.mxu0 0.0
    %1648 = vmatprep.subr.mxu0 0.0
    %1649 = vmatpush1.msra.mxu0 0.0
    %1650 = vmatprep.subr.mxu0 0.0
    %1651 = vmatpush1.msra.mxu0 0.0
    %1652 = vmatprep.subr.mxu0 0.0
    %1653 = vmatpush1.msra.mxu0 0.0
    %1654 = vmatprep.subr.mxu0 0.0
    %1655 = vmatpush1.msra.mxu0 0.0
    %1656 = vmatprep.subr.mxu0 0.0
    %1657 = vmatpush1.msra.mxu0 0.0
    %1658 = vmatprep.subr.mxu0 0.0
    %1659 = vmatpush1.msra.mxu0 0.0
    %1660 = vmatprep.subr.mxu0 0.0
    %1661 = vmatpush1.msra.mxu0 0.0
    %1662 = vmatprep.subr.mxu0 0.0
    %1663 = vmatpush1.msra.mxu0 0.0
    %1664 = vmatprep.mubr.f32.mxu0 0.0
    %1665 = vmatmul.mubr.f32.gmra.mrb[0].mxu0 %v1598
    %v1666 = vpop.f32.mrb[0].mxu0
    %v1667 = vadd.f32 %v1592, %v1666
    %v1668 = vpop.f32.mrb[0].mxu0
    %1669 = vdwg.mxu0
    %v1670 = vadd.f32 %v1667, %v407
    %v1671 = vxor.u32 %v1670, 2147483648
    %v1672 = vmul.f32 %v1671, 1.442695
    %v1673 = vpow.pop %v1672
    %v1674 = vadd.f32 %v1673, 1.0
    %v1675 = vrcp.pop %v1674
    %v1676 = vmul.f32 1.0, %v1675
    %v1677 = vtanh.pop %v1670
    %v1678 = vmul.f32 %v1676, %v1271
    %1680 = vrot.lane.b32.xlu0 %v1677, 64
    %v1681 = vpop.permute.xlu0 %1680
    %v1683 = vmul.f32 %v1676, %v1681
    %1685 = vrot.lane.b32.xlu0 %v1683, 32
    %v1686 = vpop.permute.xlu0 %1685
    %v1688 = vadd.f32 %v1678, %v1686
    %v1689 = vtanh.pop %v1688
    %1691 = vrot.lane.b32.xlu0 %v1689, 64
    %v1692 = vpop.permute.xlu0 %1691
    %v1694 = vmul.f32 %v1676, %v1692
    %1696 = vrot.lane.b32.xlu0 %v1694, 32
    %v1697 = vpop.permute.xlu0 %1696
    %v1698 = vsel %vm73, %v1697, 0
    %1700 = vmatprep.subr.mxu0 0.0
    %1701 = vmatpush1.msra.mxu0 %v61
    %1702 = vmatprep.subr.mxu0 0.0
    %1703 = vmatpush1.msra.mxu0 %v62
    %1704 = vmatprep.subr.mxu0 0.0
    %1705 = vmatpush1.msra.mxu0 %v63
    %1706 = vmatprep.subr.mxu0 0.0
    %1707 = vmatpush1.msra.mxu0 %v64
    %1708 = vmatprep.subr.mxu0 0.0
    %1709 = vmatpush1.msra.mxu0 0.0
    %1710 = vmatprep.subr.mxu0 0.0
    %1711 = vmatpush1.msra.mxu0 0.0
    %1712 = vmatprep.subr.mxu0 0.0
    %1713 = vmatpush1.msra.mxu0 0.0
    %1714 = vmatprep.subr.mxu0 0.0
    %1715 = vmatpush1.msra.mxu0 0.0
    %1716 = vmatprep.subr.mxu0 0.0
    %1717 = vmatpush1.msra.mxu0 0.0
    %1718 = vmatprep.subr.mxu0 0.0
    %1719 = vmatpush1.msra.mxu0 0.0
    %1720 = vmatprep.subr.mxu0 0.0
    %1721 = vmatpush1.msra.mxu0 0.0
    %1722 = vmatprep.subr.mxu0 0.0
    %1723 = vmatpush1.msra.mxu0 0.0
    %1724 = vmatprep.subr.mxu0 0.0
    %1725 = vmatpush1.msra.mxu0 0.0
    %1726 = vmatprep.subr.mxu0 0.0
    %1727 = vmatpush1.msra.mxu0 0.0
    %1728 = vmatprep.subr.mxu0 0.0
    %1729 = vmatpush1.msra.mxu0 0.0
    %1730 = vmatprep.subr.mxu0 0.0
    %1731 = vmatpush1.msra.mxu0 0.0
    %1732 = vmatprep.subr.mxu0 0.0
    %1733 = vmatpush1.msra.mxu0 0.0
    %1734 = vmatprep.subr.mxu0 0.0
    %1735 = vmatpush1.msra.mxu0 0.0
    %1736 = vmatprep.subr.mxu0 0.0
    %1737 = vmatpush1.msra.mxu0 0.0
    %1738 = vmatprep.subr.mxu0 0.0
    %1739 = vmatpush1.msra.mxu0 0.0
    %1740 = vmatprep.subr.mxu0 0.0
    %1741 = vmatpush1.msra.mxu0 0.0
    %1742 = vmatprep.subr.mxu0 0.0
    %1743 = vmatpush1.msra.mxu0 0.0
    %1744 = vmatprep.subr.mxu0 0.0
    %1745 = vmatpush1.msra.mxu0 0.0
    %1746 = vmatprep.subr.mxu0 0.0
    %1747 = vmatpush1.msra.mxu0 0.0
    %1748 = vmatprep.subr.mxu0 0.0
    %1749 = vmatpush1.msra.mxu0 0.0
    %1750 = vmatprep.subr.mxu0 0.0
    %1751 = vmatpush1.msra.mxu0 0.0
    %1752 = vmatprep.subr.mxu0 0.0
    %1753 = vmatpush1.msra.mxu0 0.0
    %1754 = vmatprep.subr.mxu0 0.0
    %1755 = vmatpush1.msra.mxu0 0.0
    %1756 = vmatprep.subr.mxu0 0.0
    %1757 = vmatpush1.msra.mxu0 0.0
    %1758 = vmatprep.subr.mxu0 0.0
    %1759 = vmatpush1.msra.mxu0 0.0
    %1760 = vmatprep.subr.mxu0 0.0
    %1761 = vmatpush1.msra.mxu0 0.0
    %1762 = vmatprep.subr.mxu0 0.0
    %1763 = vmatpush1.msra.mxu0 0.0
    %1764 = vmatprep.mubr.f32.mxu0 0.0
    %1765 = vmatmul.mubr.f32.gmra.mrb[0].mxu0 %v1698
    %v1766 = vpop.f32.mrb[0].mxu0
    %v1767 = vadd.f32 %v442, %v1766
    %v1768 = vpop.f32.mrb[0].mxu0
    %1769 = vdwg.mxu0
    %s1770 = scalar_lea.vmem %s11, 6
    %1771 = vst.msk [vmem:[%s1770] sm:$0x3] %vm519, %v1767
    %s1772 = scalar_lea.vmem %s0, 8
    %v1773 = vld [vmem:[%s1772] sm:$0x3]
    %1774 = vmatprep.subr.mxu0 0.0
    %1775 = vmatpush1.msra.mxu0 %v47
    %1776 = vmatprep.subr.mxu0 0.0
    %1777 = vmatpush1.msra.mxu0 %v48
    %1778 = vmatprep.subr.mxu0 0.0
    %1779 = vmatpush1.msra.mxu0 %v49
    %1780 = vmatprep.subr.mxu0 0.0
    %1781 = vmatpush1.msra.mxu0 %v50
    %1782 = vmatprep.subr.mxu0 0.0
    %1783 = vmatpush1.msra.mxu0 0.0
    %1784 = vmatprep.subr.mxu0 0.0
    %1785 = vmatpush1.msra.mxu0 0.0
    %1786 = vmatprep.subr.mxu0 0.0
    %1787 = vmatpush1.msra.mxu0 0.0
    %1788 = vmatprep.subr.mxu0 0.0
    %1789 = vmatpush1.msra.mxu0 0.0
    %1790 = vmatprep.subr.mxu0 0.0
    %1791 = vmatpush1.msra.mxu0 0.0
    %1792 = vmatprep.subr.mxu0 0.0
    %1793 = vmatpush1.msra.mxu0 0.0
    %1794 = vmatprep.subr.mxu0 0.0
    %1795 = vmatpush1.msra.mxu0 0.0
    %1796 = vmatprep.subr.mxu0 0.0
    %1797 = vmatpush1.msra.mxu0 0.0
    %1798 = vmatprep.subr.mxu0 0.0
    %1799 = vmatpush1.msra.mxu0 0.0
    %1800 = vmatprep.subr.mxu0 0.0
    %1801 = vmatpush1.msra.mxu0 0.0
    %1802 = vmatprep.subr.mxu0 0.0
    %1803 = vmatpush1.msra.mxu0 0.0
    %1804 = vmatprep.subr.mxu0 0.0
    %1805 = vmatpush1.msra.mxu0 0.0
    %1806 = vmatprep.subr.mxu0 0.0
    %1807 = vmatpush1.msra.mxu0 0.0
    %1808 = vmatprep.subr.mxu0 0.0
    %1809 = vmatpush1.msra.mxu0 0.0
    %1810 = vmatprep.subr.mxu0 0.0
    %1811 = vmatpush1.msra.mxu0 0.0
    %1812 = vmatprep.subr.mxu0 0.0
    %1813 = vmatpush1.msra.mxu0 0.0
    %1814 = vmatprep.subr.mxu0 0.0
    %1815 = vmatpush1.msra.mxu0 0.0
    %1816 = vmatprep.subr.mxu0 0.0
    %1817 = vmatpush1.msra.mxu0 0.0
    %1818 = vmatprep.subr.mxu0 0.0
    %1819 = vmatpush1.msra.mxu0 0.0
    %1820 = vmatprep.subr.mxu0 0.0
    %1821 = vmatpush1.msra.mxu0 0.0
    %1822 = vmatprep.subr.mxu0 0.0
    %1823 = vmatpush1.msra.mxu0 0.0
    %1824 = vmatprep.subr.mxu0 0.0
    %1825 = vmatpush1.msra.mxu0 0.0
    %1826 = vmatprep.subr.mxu0 0.0
    %1827 = vmatpush1.msra.mxu0 0.0
    %1828 = vmatprep.subr.mxu0 0.0
    %1829 = vmatpush1.msra.mxu0 0.0
    %1830 = vmatprep.subr.mxu0 0.0
    %1831 = vmatpush1.msra.mxu0 0.0
    %1832 = vmatprep.subr.mxu0 0.0
    %1833 = vmatpush1.msra.mxu0 0.0
    %1834 = vmatprep.subr.mxu0 0.0
    %1835 = vmatpush1.msra.mxu0 0.0
    %1836 = vmatprep.subr.mxu0 0.0
    %1837 = vmatpush1.msra.mxu0 0.0
    %1838 = vmatprep.mubr.f32.mxu0 0.0
    %1839 = vmatmul.mubr.f32.gmra.mrb[0].mxu0 %v1598
    %v1840 = vpop.f32.mrb[0].mxu0
    %v1841 = vadd.f32 0.0, %v1840
    %v1842 = vpop.f32.mrb[0].mxu0
    %1843 = vdwg.mxu0
    %v1845 = vsel %vm73, %v1773, 0
    %1847 = vmatprep.subr.mxu0 0.0
    %1848 = vmatpush1.msra.mxu0 %v43
    %1849 = vmatprep.subr.mxu0 0.0
    %1850 = vmatpush1.msra.mxu0 %v44
    %1851 = vmatprep.subr.mxu0 0.0
    %1852 = vmatpush1.msra.mxu0 %v45
    %1853 = vmatprep.subr.mxu0 0.0
    %1854 = vmatpush1.msra.mxu0 %v46
    %1855 = vmatprep.subr.mxu0 0.0
    %1856 = vmatpush1.msra.mxu0 0.0
    %1857 = vmatprep.subr.mxu0 0.0
    %1858 = vmatpush1.msra.mxu0 0.0
    %1859 = vmatprep.subr.mxu0 0.0
    %1860 = vmatpush1.msra.mxu0 0.0
    %1861 = vmatprep.subr.mxu0 0.0
    %1862 = vmatpush1.msra.mxu0 0.0
    %1863 = vmatprep.subr.mxu0 0.0
    %1864 = vmatpush1.msra.mxu0 0.0
    %1865 = vmatprep.subr.mxu0 0.0
    %1866 = vmatpush1.msra.mxu0 0.0
    %1867 = vmatprep.subr.mxu0 0.0
    %1868 = vmatpush1.msra.mxu0 0.0
    %1869 = vmatprep.subr.mxu0 0.0
    %1870 = vmatpush1.msra.mxu0 0.0
    %1871 = vmatprep.subr.mxu0 0.0
    %1872 = vmatpush1.msra.mxu0 0.0
    %1873 = vmatprep.subr.mxu0 0.0
    %1874 = vmatpush1.msra.mxu0 0.0
    %1875 = vmatprep.subr.mxu0 0.0
    %1876 = vmatpush1.msra.mxu0 0.0
    %1877 = vmatprep.subr.mxu0 0.0
    %1878 = vmatpush1.msra.mxu0 0.0
    %1879 = vmatprep.subr.mxu0 0.0
    %1880 = vmatpush1.msra.mxu0 0.0
    %1881 = vmatprep.subr.mxu0 0.0
    %1882 = vmatpush1.msra.mxu0 0.0
    %1883 = vmatprep.subr.mxu0 0.0
    %1884 = vmatpush1.msra.mxu0 0.0
    %1885 = vmatprep.subr.mxu0 0.0
    %1886 = vmatpush1.msra.mxu0 0.0
    %1887 = vmatprep.subr.mxu0 0.0
    %1888 = vmatpush1.msra.mxu0 0.0
    %1889 = vmatprep.subr.mxu0 0.0
    %1890 = vmatpush1.msra.mxu0 0.0
    %1891 = vmatprep.subr.mxu0 0.0
    %1892 = vmatpush1.msra.mxu0 0.0
    %1893 = vmatprep.subr.mxu0 0.0
    %1894 = vmatpush1.msra.mxu0 0.0
    %1895 = vmatprep.subr.mxu0 0.0
    %1896 = vmatpush1.msra.mxu0 0.0
    %1897 = vmatprep.subr.mxu0 0.0
    %1898 = vmatpush1.msra.mxu0 0.0
    %1899 = vmatprep.subr.mxu0 0.0
    %1900 = vmatpush1.msra.mxu0 0.0
    %1901 = vmatprep.subr.mxu0 0.0
    %1902 = vmatpush1.msra.mxu0 0.0
    %1903 = vmatprep.subr.mxu0 0.0
    %1904 = vmatpush1.msra.mxu0 0.0
    %1905 = vmatprep.subr.mxu0 0.0
    %1906 = vmatpush1.msra.mxu0 0.0
    %1907 = vmatprep.subr.mxu0 0.0
    %1908 = vmatpush1.msra.mxu0 0.0
    %1909 = vmatprep.subr.mxu0 0.0
    %1910 = vmatpush1.msra.mxu0 0.0
    %1911 = vmatprep.mubr.f32.mxu0 0.0
    %1912 = vmatmul.mubr.f32.gmra.mrb[0].mxu0 %v1845
    %v1913 = vpop.f32.mrb[0].mxu0
    %v1914 = vadd.f32 %v1841, %v1913
    %v1915 = vpop.f32.mrb[0].mxu0
    %1916 = vdwg.mxu0
    %v1917 = vadd.f32 %v1914, %v224
    %v1918 = vxor.u32 %v1917, 2147483648
    %v1919 = vmul.f32 %v1918, 1.442695
    %v1920 = vpow.pop %v1919
    %v1921 = vadd.f32 %v1920, 1.0
    %v1922 = vrcp.pop %v1921
    %v1923 = vmul.f32 1.0, %v1922
    %v1924 = vtanh.pop %v1917
    %v1925 = vmul.f32 %v1923, %v1518
    %1927 = vrot.lane.b32.xlu0 %v1924, 64
    %v1928 = vpop.permute.xlu0 %1927
    %v1930 = vmul.f32 %v1923, %v1928
    %1932 = vrot.lane.b32.xlu0 %v1930, 32
    %v1933 = vpop.permute.xlu0 %1932
    %v1935 = vadd.f32 %v1925, %v1933
    %v1936 = vtanh.pop %v1935
    %1938 = vrot.lane.b32.xlu0 %v1936, 64
    %v1939 = vpop.permute.xlu0 %1938
    %v1941 = vmul.f32 %v1923, %v1939
    %1942 = vmatprep.subr.mxu0 0.0
    %1943 = vmatpush1.msra.mxu0 %v56
    %1944 = vmatprep.subr.mxu0 0.0
    %1945 = vmatpush1.msra.mxu0 %v57
    %1946 = vmatprep.subr.mxu0 0.0
    %1947 = vmatpush1.msra.mxu0 %v58
    %1948 = vmatprep.subr.mxu0 0.0
    %1949 = vmatpush1.msra.mxu0 %v59
    %1950 = vmatprep.subr.mxu0 0.0
    %1951 = vmatpush1.msra.mxu0 0.0
    %1952 = vmatprep.subr.mxu0 0.0
    %1953 = vmatpush1.msra.mxu0 0.0
    %1954 = vmatprep.subr.mxu0 0.0
    %1955 = vmatpush1.msra.mxu0 0.0
    %1956 = vmatprep.subr.mxu0 0.0
    %1957 = vmatpush1.msra.mxu0 0.0
    %1958 = vmatprep.subr.mxu0 0.0
    %1959 = vmatpush1.msra.mxu0 0.0
    %1960 = vmatprep.subr.mxu0 0.0
    %1961 = vmatpush1.msra.mxu0 0.0
    %1962 = vmatprep.subr.mxu0 0.0
    %1963 = vmatpush1.msra.mxu0 0.0
    %1964 = vmatprep.subr.mxu0 0.0
    %1965 = vmatpush1.msra.mxu0 0.0
    %1966 = vmatprep.subr.mxu0 0.0
    %1967 = vmatpush1.msra.mxu0 0.0
    %1968 = vmatprep.subr.mxu0 0.0
    %1969 = vmatpush1.msra.mxu0 0.0
    %1970 = vmatprep.subr.mxu0 0.0
    %1971 = vmatpush1.msra.mxu0 0.0
    %1972 = vmatprep.subr.mxu0 0.0
    %1973 = vmatpush1.msra.mxu0 0.0
    %1974 = vmatprep.subr.mxu0 0.0
    %1975 = vmatpush1.msra.mxu0 0.0
    %1976 = vmatprep.subr.mxu0 0.0
    %1977 = vmatpush1.msra.mxu0 0.0
    %1978 = vmatprep.subr.mxu0 0.0
    %1979 = vmatpush1.msra.mxu0 0.0
    %1980 = vmatprep.subr.mxu0 0.0
    %1981 = vmatpush1.msra.mxu0 0.0
    %1982 = vmatprep.subr.mxu0 0.0
    %1983 = vmatpush1.msra.mxu0 0.0
    %1984 = vmatprep.subr.mxu0 0.0
    %1985 = vmatpush1.msra.mxu0 0.0
    %1986 = vmatprep.subr.mxu0 0.0
    %1987 = vmatpush1.msra.mxu0 0.0
    %1988 = vmatprep.subr.mxu0 0.0
    %1989 = vmatpush1.msra.mxu0 0.0
    %1990 = vmatprep.subr.mxu0 0.0
    %1991 = vmatpush1.msra.mxu0 0.0
    %1992 = vmatprep.subr.mxu0 0.0
    %1993 = vmatpush1.msra.mxu0 0.0
    %1994 = vmatprep.subr.mxu0 0.0
    %1995 = vmatpush1.msra.mxu0 0.0
    %1996 = vmatprep.subr.mxu0 0.0
    %1997 = vmatpush1.msra.mxu0 0.0
    %1998 = vmatprep.subr.mxu0 0.0
    %1999 = vmatpush1.msra.mxu0 0.0
    %2000 = vmatprep.subr.mxu0 0.0
    %2001 = vmatpush1.msra.mxu0 0.0
    %2002 = vmatprep.subr.mxu0 0.0
    %2003 = vmatpush1.msra.mxu0 0.0
    %2004 = vmatprep.subr.mxu0 0.0
    %2005 = vmatpush1.msra.mxu0 0.0
    %2006 = vmatprep.mubr.f32.mxu0 0.0
    %2007 = vmatmul.mubr.f32.gmra.mrb[0].mxu0 %v1698
    %v2008 = vpop.f32.mrb[0].mxu0
    %v2009 = vadd.f32 0.0, %v2008
    %v2010 = vpop.f32.mrb[0].mxu0
    %2011 = vdwg.mxu0
    %2013 = vrot.lane.b32.xlu0 %v1941, 32
    %v2014 = vpop.permute.xlu0 %2013
    %v2015 = vsel %vm73, %v2014, 0
    %2017 = vmatprep.subr.mxu0 0.0
    %2018 = vmatpush1.msra.mxu0 %v52
    %2019 = vmatprep.subr.mxu0 0.0
    %2020 = vmatpush1.msra.mxu0 %v53
    %2021 = vmatprep.subr.mxu0 0.0
    %2022 = vmatpush1.msra.mxu0 %v54
    %2023 = vmatprep.subr.mxu0 0.0
    %2024 = vmatpush1.msra.mxu0 %v55
    %2025 = vmatprep.subr.mxu0 0.0
    %2026 = vmatpush1.msra.mxu0 0.0
    %2027 = vmatprep.subr.mxu0 0.0
    %2028 = vmatpush1.msra.mxu0 0.0
    %2029 = vmatprep.subr.mxu0 0.0
    %2030 = vmatpush1.msra.mxu0 0.0
    %2031 = vmatprep.subr.mxu0 0.0
    %2032 = vmatpush1.msra.mxu0 0.0
    %2033 = vmatprep.subr.mxu0 0.0
    %2034 = vmatpush1.msra.mxu0 0.0
    %2035 = vmatprep.subr.mxu0 0.0
    %2036 = vmatpush1.msra.mxu0 0.0
    %2037 = vmatprep.subr.mxu0 0.0
    %2038 = vmatpush1.msra.mxu0 0.0
    %2039 = vmatprep.subr.mxu0 0.0
    %2040 = vmatpush1.msra.mxu0 0.0
    %2041 = vmatprep.subr.mxu0 0.0
    %2042 = vmatpush1.msra.mxu0 0.0
    %2043 = vmatprep.subr.mxu0 0.0
    %2044 = vmatpush1.msra.mxu0 0.0
    %2045 = vmatprep.subr.mxu0 0.0
    %2046 = vmatpush1.msra.mxu0 0.0
    %2047 = vmatprep.subr.mxu0 0.0
    %2048 = vmatpush1.msra.mxu0 0.0
    %2049 = vmatprep.subr.mxu0 0.0
    %2050 = vmatpush1.msra.mxu0 0.0
    %2051 = vmatprep.subr.mxu0 0.0
    %2052 = vmatpush1.msra.mxu0 0.0
    %2053 = vmatprep.subr.mxu0 0.0
    %2054 = vmatpush1.msra.mxu0 0.0
    %2055 = vmatprep.subr.mxu0 0.0
    %2056 = vmatpush1.msra.mxu0 0.0
    %2057 = vmatprep.subr.mxu0 0.0
    %2058 = vmatpush1.msra.mxu0 0.0
    %2059 = vmatprep.subr.mxu0 0.0
    %2060 = vmatpush1.msra.mxu0 0.0
    %2061 = vmatprep.subr.mxu0 0.0
    %2062 = vmatpush1.msra.mxu0 0.0
    %2063 = vmatprep.subr.mxu0 0.0
    %2064 = vmatpush1.msra.mxu0 0.0
    %2065 = vmatprep.subr.mxu0 0.0
    %2066 = vmatpush1.msra.mxu0 0.0
    %2067 = vmatprep.subr.mxu0 0.0
    %2068 = vmatpush1.msra.mxu0 0.0
    %2069 = vmatprep.subr.mxu0 0.0
    %2070 = vmatpush1.msra.mxu0 0.0
    %2071 = vmatprep.subr.mxu0 0.0
    %2072 = vmatpush1.msra.mxu0 0.0
    %2073 = vmatprep.subr.mxu0 0.0
    %2074 = vmatpush1.msra.mxu0 0.0
    %2075 = vmatprep.subr.mxu0 0.0
    %2076 = vmatpush1.msra.mxu0 0.0
    %2077 = vmatprep.subr.mxu0 0.0
    %2078 = vmatpush1.msra.mxu0 0.0
    %2079 = vmatprep.subr.mxu0 0.0
    %2080 = vmatpush1.msra.mxu0 0.0
    %2081 = vmatprep.mubr.f32.mxu0 0.0
    %2082 = vmatmul.mubr.f32.gmra.mrb[0].mxu0 %v2015
    %v2083 = vpop.f32.mrb[0].mxu0
    %v2084 = vadd.f32 %v2009, %v2083
    %v2085 = vpop.f32.mrb[0].mxu0
    %2086 = vdwg.mxu0
    %v2087 = vadd.f32 %v2084, %v407
    %v2088 = vxor.u32 %v2087, 2147483648
    %v2089 = vmul.f32 %v2088, 1.442695
    %v2090 = vpow.pop %v2089
    %v2091 = vadd.f32 %v2090, 1.0
    %v2092 = vrcp.pop %v2091
    %v2093 = vmul.f32 1.0, %v2092
    %v2094 = vtanh.pop %v2087
    %v2095 = vmul.f32 %v2093, %v1688
    %2097 = vrot.lane.b32.xlu0 %v2094, 64
    %v2098 = vpop.permute.xlu0 %2097
    %v2100 = vmul.f32 %v2093, %v2098
    %2102 = vrot.lane.b32.xlu0 %v2100, 32
    %v2103 = vpop.permute.xlu0 %2102
    %v2105 = vadd.f32 %v2095, %v2103
    %v2106 = vtanh.pop %v2105
    %2108 = vrot.lane.b32.xlu0 %v2106, 64
    %v2109 = vpop.permute.xlu0 %2108
    %v2111 = vmul.f32 %v2093, %v2109
    %2113 = vrot.lane.b32.xlu0 %v2111, 32
    %v2114 = vpop.permute.xlu0 %2113
    %v2115 = vsel %vm73, %v2114, 0
    %2117 = vmatprep.subr.mxu0 0.0
    %2118 = vmatpush1.msra.mxu0 %v61
    %2119 = vmatprep.subr.mxu0 0.0
    %2120 = vmatpush1.msra.mxu0 %v62
    %2121 = vmatprep.subr.mxu0 0.0
    %2122 = vmatpush1.msra.mxu0 %v63
    %2123 = vmatprep.subr.mxu0 0.0
    %2124 = vmatpush1.msra.mxu0 %v64
    %2125 = vmatprep.subr.mxu0 0.0
    %2126 = vmatpush1.msra.mxu0 0.0
    %2127 = vmatprep.subr.mxu0 0.0
    %2128 = vmatpush1.msra.mxu0 0.0
    %2129 = vmatprep.subr.mxu0 0.0
    %2130 = vmatpush1.msra.mxu0 0.0
    %2131 = vmatprep.subr.mxu0 0.0
    %2132 = vmatpush1.msra.mxu0 0.0
    %2133 = vmatprep.subr.mxu0 0.0
    %2134 = vmatpush1.msra.mxu0 0.0
    %2135 = vmatprep.subr.mxu0 0.0
    %2136 = vmatpush1.msra.mxu0 0.0
    %2137 = vmatprep.subr.mxu0 0.0
    %2138 = vmatpush1.msra.mxu0 0.0
    %2139 = vmatprep.subr.mxu0 0.0
    %2140 = vmatpush1.msra.mxu0 0.0
    %2141 = vmatprep.subr.mxu0 0.0
    %2142 = vmatpush1.msra.mxu0 0.0
    %2143 = vmatprep.subr.mxu0 0.0
    %2144 = vmatpush1.msra.mxu0 0.0
    %2145 = vmatprep.subr.mxu0 0.0
    %2146 = vmatpush1.msra.mxu0 0.0
    %2147 = vmatprep.subr.mxu0 0.0
    %2148 = vmatpush1.msra.mxu0 0.0
    %2149 = vmatprep.subr.mxu0 0.0
    %2150 = vmatpush1.msra.mxu0 0.0
    %2151 = vmatprep.subr.mxu0 0.0
    %2152 = vmatpush1.msra.mxu0 0.0
    %2153 = vmatprep.subr.mxu0 0.0
    %2154 = vmatpush1.msra.mxu0 0.0
    %2155 = vmatprep.subr.mxu0 0.0
    %2156 = vmatpush1.msra.mxu0 0.0
    %2157 = vmatprep.subr.mxu0 0.0
    %2158 = vmatpush1.msra.mxu0 0.0
    %2159 = vmatprep.subr.mxu0 0.0
    %2160 = vmatpush1.msra.mxu0 0.0
    %2161 = vmatprep.subr.mxu0 0.0
    %2162 = vmatpush1.msra.mxu0 0.0
    %2163 = vmatprep.subr.mxu0 0.0
    %2164 = vmatpush1.msra.mxu0 0.0
    %2165 = vmatprep.subr.mxu0 0.0
    %2166 = vmatpush1.msra.mxu0 0.0
    %2167 = vmatprep.subr.mxu0 0.0
    %2168 = vmatpush1.msra.mxu0 0.0
    %2169 = vmatprep.subr.mxu0 0.0
    %2170 = vmatpush1.msra.mxu0 0.0
    %2171 = vmatprep.subr.mxu0 0.0
    %2172 = vmatpush1.msra.mxu0 0.0
    %2173 = vmatprep.subr.mxu0 0.0
    %2174 = vmatpush1.msra.mxu0 0.0
    %2175 = vmatprep.subr.mxu0 0.0
    %2176 = vmatpush1.msra.mxu0 0.0
    %2177 = vmatprep.subr.mxu0 0.0
    %2178 = vmatpush1.msra.mxu0 0.0
    %2179 = vmatprep.subr.mxu0 0.0
    %2180 = vmatpush1.msra.mxu0 0.0
    %2181 = vmatprep.mubr.f32.mxu0 0.0
    %2182 = vmatmul.mubr.f32.gmra.mrb[0].mxu0 %v2115
    %v2183 = vpop.f32.mrb[0].mxu0
    %v2184 = vadd.f32 %v442, %v2183
    %v2185 = vpop.f32.mrb[0].mxu0
    %2186 = vdwg.mxu0
    %s2187 = scalar_lea.vmem %s11, 8
    %2188 = vst.msk [vmem:[%s2187] sm:$0x3] %vm519, %v2184
    %s2189 = scalar_lea.vmem %s0, 10
    %v2190 = vld [vmem:[%s2189] sm:$0x3]
    %2191 = vmatprep.subr.mxu0 0.0
    %2192 = vmatpush1.msra.mxu0 %v47
    %2193 = vmatprep.subr.mxu0 0.0
    %2194 = vmatpush1.msra.mxu0 %v48
    %2195 = vmatprep.subr.mxu0 0.0
    %2196 = vmatpush1.msra.mxu0 %v49
    %2197 = vmatprep.subr.mxu0 0.0
    %2198 = vmatpush1.msra.mxu0 %v50
    %2199 = vmatprep.subr.mxu0 0.0
    %2200 = vmatpush1.msra.mxu0 0.0
    %2201 = vmatprep.subr.mxu0 0.0
    %2202 = vmatpush1.msra.mxu0 0.0
    %2203 = vmatprep.subr.mxu0 0.0
    %2204 = vmatpush1.msra.mxu0 0.0
    %2205 = vmatprep.subr.mxu0 0.0
    %2206 = vmatpush1.msra.mxu0 0.0
    %2207 = vmatprep.subr.mxu0 0.0
    %2208 = vmatpush1.msra.mxu0 0.0
    %2209 = vmatprep.subr.mxu0 0.0
    %2210 = vmatpush1.msra.mxu0 0.0
    %2211 = vmatprep.subr.mxu0 0.0
    %2212 = vmatpush1.msra.mxu0 0.0
    %2213 = vmatprep.subr.mxu0 0.0
    %2214 = vmatpush1.msra.mxu0 0.0
    %2215 = vmatprep.subr.mxu0 0.0
    %2216 = vmatpush1.msra.mxu0 0.0
    %2217 = vmatprep.subr.mxu0 0.0
    %2218 = vmatpush1.msra.mxu0 0.0
    %2219 = vmatprep.subr.mxu0 0.0
    %2220 = vmatpush1.msra.mxu0 0.0
    %2221 = vmatprep.subr.mxu0 0.0
    %2222 = vmatpush1.msra.mxu0 0.0
    %2223 = vmatprep.subr.mxu0 0.0
    %2224 = vmatpush1.msra.mxu0 0.0
    %2225 = vmatprep.subr.mxu0 0.0
    %2226 = vmatpush1.msra.mxu0 0.0
    %2227 = vmatprep.subr.mxu0 0.0
    %2228 = vmatpush1.msra.mxu0 0.0
    %2229 = vmatprep.subr.mxu0 0.0
    %2230 = vmatpush1.msra.mxu0 0.0
    %2231 = vmatprep.subr.mxu0 0.0
    %2232 = vmatpush1.msra.mxu0 0.0
    %2233 = vmatprep.subr.mxu0 0.0
    %2234 = vmatpush1.msra.mxu0 0.0
    %2235 = vmatprep.subr.mxu0 0.0
    %2236 = vmatpush1.msra.mxu0 0.0
    %2237 = vmatprep.subr.mxu0 0.0
    %2238 = vmatpush1.msra.mxu0 0.0
    %2239 = vmatprep.subr.mxu0 0.0
    %2240 = vmatpush1.msra.mxu0 0.0
    %2241 = vmatprep.subr.mxu0 0.0
    %2242 = vmatpush1.msra.mxu0 0.0
    %2243 = vmatprep.subr.mxu0 0.0
    %2244 = vmatpush1.msra.mxu0 0.0
    %2245 = vmatprep.subr.mxu0 0.0
    %2246 = vmatpush1.msra.mxu0 0.0
    %2247 = vmatprep.subr.mxu0 0.0
    %2248 = vmatpush1.msra.mxu0 0.0
    %2249 = vmatprep.subr.mxu0 0.0
    %2250 = vmatpush1.msra.mxu0 0.0
    %2251 = vmatprep.subr.mxu0 0.0
    %2252 = vmatpush1.msra.mxu0 0.0
    %2253 = vmatprep.subr.mxu0 0.0
    %2254 = vmatpush1.msra.mxu0 0.0
    %2255 = vmatprep.mubr.f32.mxu0 0.0
    %2256 = vmatmul.mubr.f32.gmra.mrb[0].mxu0 %v2015
    %v2257 = vpop.f32.mrb[0].mxu0
    %v2258 = vadd.f32 0.0, %v2257
    %v2259 = vpop.f32.mrb[0].mxu0
    %2260 = vdwg.mxu0
    %v2262 = vsel %vm73, %v2190, 0
    %2264 = vmatprep.subr.mxu0 0.0
    %2265 = vmatpush1.msra.mxu0 %v43
    %2266 = vmatprep.subr.mxu0 0.0
    %2267 = vmatpush1.msra.mxu0 %v44
    %2268 = vmatprep.subr.mxu0 0.0
    %2269 = vmatpush1.msra.mxu0 %v45
    %2270 = vmatprep.subr.mxu0 0.0
    %2271 = vmatpush1.msra.mxu0 %v46
    %2272 = vmatprep.subr.mxu0 0.0
    %2273 = vmatpush1.msra.mxu0 0.0
    %2274 = vmatprep.subr.mxu0 0.0
    %2275 = vmatpush1.msra.mxu0 0.0
    %2276 = vmatprep.subr.mxu0 0.0
    %2277 = vmatpush1.msra.mxu0 0.0
    %2278 = vmatprep.subr.mxu0 0.0
    %2279 = vmatpush1.msra.mxu0 0.0
    %2280 = vmatprep.subr.mxu0 0.0
    %2281 = vmatpush1.msra.mxu0 0.0
    %2282 = vmatprep.subr.mxu0 0.0
    %2283 = vmatpush1.msra.mxu0 0.0
    %2284 = vmatprep.subr.mxu0 0.0
    %2285 = vmatpush1.msra.mxu0 0.0
    %2286 = vmatprep.subr.mxu0 0.0
    %2287 = vmatpush1.msra.mxu0 0.0
    %2288 = vmatprep.subr.mxu0 0.0
    %2289 = vmatpush1.msra.mxu0 0.0
    %2290 = vmatprep.subr.mxu0 0.0
    %2291 = vmatpush1.msra.mxu0 0.0
    %2292 = vmatprep.subr.mxu0 0.0
    %2293 = vmatpush1.msra.mxu0 0.0
    %2294 = vmatprep.subr.mxu0 0.0
    %2295 = vmatpush1.msra.mxu0 0.0
    %2296 = vmatprep.subr.mxu0 0.0
    %2297 = vmatpush1.msra.mxu0 0.0
    %2298 = vmatprep.subr.mxu0 0.0
    %2299 = vmatpush1.msra.mxu0 0.0
    %2300 = vmatprep.subr.mxu0 0.0
    %2301 = vmatpush1.msra.mxu0 0.0
    %2302 = vmatprep.subr.mxu0 0.0
    %2303 = vmatpush1.msra.mxu0 0.0
    %2304 = vmatprep.subr.mxu0 0.0
    %2305 = vmatpush1.msra.mxu0 0.0
    %2306 = vmatprep.subr.mxu0 0.0
    %2307 = vmatpush1.msra.mxu0 0.0
    %2308 = vmatprep.subr.mxu0 0.0
    %2309 = vmatpush1.msra.mxu0 0.0
    %2310 = vmatprep.subr.mxu0 0.0
    %2311 = vmatpush1.msra.mxu0 0.0
    %2312 = vmatprep.subr.mxu0 0.0
    %2313 = vmatpush1.msra.mxu0 0.0
    %2314 = vmatprep.subr.mxu0 0.0
    %2315 = vmatpush1.msra.mxu0 0.0
    %2316 = vmatprep.subr.mxu0 0.0
    %2317 = vmatpush1.msra.mxu0 0.0
    %2318 = vmatprep.subr.mxu0 0.0
    %2319 = vmatpush1.msra.mxu0 0.0
    %2320 = vmatprep.subr.mxu0 0.0
    %2321 = vmatpush1.msra.mxu0 0.0
    %2322 = vmatprep.subr.mxu0 0.0
    %2323 = vmatpush1.msra.mxu0 0.0
    %2324 = vmatprep.subr.mxu0 0.0
    %2325 = vmatpush1.msra.mxu0 0.0
    %2326 = vmatprep.subr.mxu0 0.0
    %2327 = vmatpush1.msra.mxu0 0.0
    %2328 = vmatprep.mubr.f32.mxu0 0.0
    %2329 = vmatmul.mubr.f32.gmra.mrb[0].mxu0 %v2262
    %v2330 = vpop.f32.mrb[0].mxu0
    %v2331 = vadd.f32 %v2258, %v2330
    %v2332 = vpop.f32.mrb[0].mxu0
    %2333 = vdwg.mxu0
    %v2334 = vadd.f32 %v2331, %v224
    %v2335 = vxor.u32 %v2334, 2147483648
    %v2336 = vmul.f32 %v2335, 1.442695
    %v2337 = vpow.pop %v2336
    %v2338 = vadd.f32 %v2337, 1.0
    %v2339 = vrcp.pop %v2338
    %v2340 = vmul.f32 1.0, %v2339
    %v2341 = vtanh.pop %v2334
    %v2342 = vmul.f32 %v2340, %v1935
    %2344 = vrot.lane.b32.xlu0 %v2341, 64
    %v2345 = vpop.permute.xlu0 %2344
    %v2347 = vmul.f32 %v2340, %v2345
    %2349 = vrot.lane.b32.xlu0 %v2347, 32
    %v2350 = vpop.permute.xlu0 %2349
    %v2352 = vadd.f32 %v2342, %v2350
    %v2353 = vtanh.pop %v2352
    %2355 = vrot.lane.b32.xlu0 %v2353, 64
    %v2356 = vpop.permute.xlu0 %2355
    %v2358 = vmul.f32 %v2340, %v2356
    %2359 = vmatprep.subr.mxu0 0.0
    %2360 = vmatpush1.msra.mxu0 %v56
    %2361 = vmatprep.subr.mxu0 0.0
    %2362 = vmatpush1.msra.mxu0 %v57
    %2363 = vmatprep.subr.mxu0 0.0
    %2364 = vmatpush1.msra.mxu0 %v58
    %2365 = vmatprep.subr.mxu0 0.0
    %2366 = vmatpush1.msra.mxu0 %v59
    %2367 = vmatprep.subr.mxu0 0.0
    %2368 = vmatpush1.msra.mxu0 0.0
    %2369 = vmatprep.subr.mxu0 0.0
    %2370 = vmatpush1.msra.mxu0 0.0
    %2371 = vmatprep.subr.mxu0 0.0
    %2372 = vmatpush1.msra.mxu0 0.0
    %2373 = vmatprep.subr.mxu0 0.0
    %2374 = vmatpush1.msra.mxu0 0.0
    %2375 = vmatprep.subr.mxu0 0.0
    %2376 = vmatpush1.msra.mxu0 0.0
    %2377 = vmatprep.subr.mxu0 0.0
    %2378 = vmatpush1.msra.mxu0 0.0
    %2379 = vmatprep.subr.mxu0 0.0
    %2380 = vmatpush1.msra.mxu0 0.0
    %2381 = vmatprep.subr.mxu0 0.0
    %2382 = vmatpush1.msra.mxu0 0.0
    %2383 = vmatprep.subr.mxu0 0.0
    %2384 = vmatpush1.msra.mxu0 0.0
    %2385 = vmatprep.subr.mxu0 0.0
    %2386 = vmatpush1.msra.mxu0 0.0
    %2387 = vmatprep.subr.mxu0 0.0
    %2388 = vmatpush1.msra.mxu0 0.0
    %2389 = vmatprep.subr.mxu0 0.0
    %2390 = vmatpush1.msra.mxu0 0.0
    %2391 = vmatprep.subr.mxu0 0.0
    %2392 = vmatpush1.msra.mxu0 0.0
    %2393 = vmatprep.subr.mxu0 0.0
    %2394 = vmatpush1.msra.mxu0 0.0
    %2395 = vmatprep.subr.mxu0 0.0
    %2396 = vmatpush1.msra.mxu0 0.0
    %2397 = vmatprep.subr.mxu0 0.0
    %2398 = vmatpush1.msra.mxu0 0.0
    %2399 = vmatprep.subr.mxu0 0.0
    %2400 = vmatpush1.msra.mxu0 0.0
    %2401 = vmatprep.subr.mxu0 0.0
    %2402 = vmatpush1.msra.mxu0 0.0
    %2403 = vmatprep.subr.mxu0 0.0
    %2404 = vmatpush1.msra.mxu0 0.0
    %2405 = vmatprep.subr.mxu0 0.0
    %2406 = vmatpush1.msra.mxu0 0.0
    %2407 = vmatprep.subr.mxu0 0.0
    %2408 = vmatpush1.msra.mxu0 0.0
    %2409 = vmatprep.subr.mxu0 0.0
    %2410 = vmatpush1.msra.mxu0 0.0
    %2411 = vmatprep.subr.mxu0 0.0
    %2412 = vmatpush1.msra.mxu0 0.0
    %2413 = vmatprep.subr.mxu0 0.0
    %2414 = vmatpush1.msra.mxu0 0.0
    %2415 = vmatprep.subr.mxu0 0.0
    %2416 = vmatpush1.msra.mxu0 0.0
    %2417 = vmatprep.subr.mxu0 0.0
    %2418 = vmatpush1.msra.mxu0 0.0
    %2419 = vmatprep.subr.mxu0 0.0
    %2420 = vmatpush1.msra.mxu0 0.0
    %2421 = vmatprep.subr.mxu0 0.0
    %2422 = vmatpush1.msra.mxu0 0.0
    %2423 = vmatprep.mubr.f32.mxu0 0.0
    %2424 = vmatmul.mubr.f32.gmra.mrb[0].mxu0 %v2115
    %v2425 = vpop.f32.mrb[0].mxu0
    %v2426 = vadd.f32 0.0, %v2425
    %v2427 = vpop.f32.mrb[0].mxu0
    %2428 = vdwg.mxu0
    %2430 = vrot.lane.b32.xlu0 %v2358, 32
    %v2431 = vpop.permute.xlu0 %2430
    %v2432 = vsel %vm73, %v2431, 0
    %2434 = vmatprep.subr.mxu0 0.0
    %2435 = vmatpush1.msra.mxu0 %v52
    %2436 = vmatprep.subr.mxu0 0.0
    %2437 = vmatpush1.msra.mxu0 %v53
    %2438 = vmatprep.subr.mxu0 0.0
    %2439 = vmatpush1.msra.mxu0 %v54
    %2440 = vmatprep.subr.mxu0 0.0
    %2441 = vmatpush1.msra.mxu0 %v55
    %2442 = vmatprep.subr.mxu0 0.0
    %2443 = vmatpush1.msra.mxu0 0.0
    %2444 = vmatprep.subr.mxu0 0.0
    %2445 = vmatpush1.msra.mxu0 0.0
    %2446 = vmatprep.subr.mxu0 0.0
    %2447 = vmatpush1.msra.mxu0 0.0
    %2448 = vmatprep.subr.mxu0 0.0
    %2449 = vmatpush1.msra.mxu0 0.0
    %2450 = vmatprep.subr.mxu0 0.0
    %2451 = vmatpush1.msra.mxu0 0.0
    %2452 = vmatprep.subr.mxu0 0.0
    %2453 = vmatpush1.msra.mxu0 0.0
    %2454 = vmatprep.subr.mxu0 0.0
    %2455 = vmatpush1.msra.mxu0 0.0
    %2456 = vmatprep.subr.mxu0 0.0
    %2457 = vmatpush1.msra.mxu0 0.0
    %2458 = vmatprep.subr.mxu0 0.0
    %2459 = vmatpush1.msra.mxu0 0.0
    %2460 = vmatprep.subr.mxu0 0.0
    %2461 = vmatpush1.msra.mxu0 0.0
    %2462 = vmatprep.subr.mxu0 0.0
    %2463 = vmatpush1.msra.mxu0 0.0
    %2464 = vmatprep.subr.mxu0 0.0
    %2465 = vmatpush1.msra.mxu0 0.0
    %2466 = vmatprep.subr.mxu0 0.0
    %2467 = vmatpush1.msra.mxu0 0.0
    %2468 = vmatprep.subr.mxu0 0.0
    %2469 = vmatpush1.msra.mxu0 0.0
    %2470 = vmatprep.subr.mxu0 0.0
    %2471 = vmatpush1.msra.mxu0 0.0
    %2472 = vmatprep.subr.mxu0 0.0
    %2473 = vmatpush1.msra.mxu0 0.0
    %2474 = vmatprep.subr.mxu0 0.0
    %2475 = vmatpush1.msra.mxu0 0.0
    %2476 = vmatprep.subr.mxu0 0.0
    %2477 = vmatpush1.msra.mxu0 0.0
    %2478 = vmatprep.subr.mxu0 0.0
    %2479 = vmatpush1.msra.mxu0 0.0
    %2480 = vmatprep.subr.mxu0 0.0
    %2481 = vmatpush1.msra.mxu0 0.0
    %2482 = vmatprep.subr.mxu0 0.0
    %2483 = vmatpush1.msra.mxu0 0.0
    %2484 = vmatprep.subr.mxu0 0.0
    %2485 = vmatpush1.msra.mxu0 0.0
    %2486 = vmatprep.subr.mxu0 0.0
    %2487 = vmatpush1.msra.mxu0 0.0
    %2488 = vmatprep.subr.mxu0 0.0
    %2489 = vmatpush1.msra.mxu0 0.0
    %2490 = vmatprep.subr.mxu0 0.0
    %2491 = vmatpush1.msra.mxu0 0.0
    %2492 = vmatprep.subr.mxu0 0.0
    %2493 = vmatpush1.msra.mxu0 0.0
    %2494 = vmatprep.subr.mxu0 0.0
    %2495 = vmatpush1.msra.mxu0 0.0
    %2496 = vmatprep.subr.mxu0 0.0
    %2497 = vmatpush1.msra.mxu0 0.0
    %2498 = vmatprep.mubr.f32.mxu0 0.0
    %2499 = vmatmul.mubr.f32.gmra.mrb[0].mxu0 %v2432
    %v2500 = vpop.f32.mrb[0].mxu0
    %v2501 = vadd.f32 %v2426, %v2500
    %v2502 = vpop.f32.mrb[0].mxu0
    %2503 = vdwg.mxu0
    %v2504 = vadd.f32 %v2501, %v407
    %v2505 = vxor.u32 %v2504, 2147483648
    %v2506 = vmul.f32 %v2505, 1.442695
    %v2507 = vpow.pop %v2506
    %v2508 = vadd.f32 %v2507, 1.0
    %v2509 = vrcp.pop %v2508
    %v2510 = vmul.f32 1.0, %v2509
    %v2511 = vtanh.pop %v2504
    %v2512 = vmul.f32 %v2510, %v2105
    %2514 = vrot.lane.b32.xlu0 %v2511, 64
    %v2515 = vpop.permute.xlu0 %2514
    %v2517 = vmul.f32 %v2510, %v2515
    %2519 = vrot.lane.b32.xlu0 %v2517, 32
    %v2520 = vpop.permute.xlu0 %2519
    %v2522 = vadd.f32 %v2512, %v2520
    %v2523 = vtanh.pop %v2522
    %2525 = vrot.lane.b32.xlu0 %v2523, 64
    %v2526 = vpop.permute.xlu0 %2525
    %v2528 = vmul.f32 %v2510, %v2526
    %2530 = vrot.lane.b32.xlu0 %v2528, 32
    %v2531 = vpop.permute.xlu0 %2530
    %v2532 = vsel %vm73, %v2531, 0
    %2534 = vmatprep.subr.mxu0 0.0
    %2535 = vmatpush1.msra.mxu0 %v61
    %2536 = vmatprep.subr.mxu0 0.0
    %2537 = vmatpush1.msra.mxu0 %v62
    %2538 = vmatprep.subr.mxu0 0.0
    %2539 = vmatpush1.msra.mxu0 %v63
    %2540 = vmatprep.subr.mxu0 0.0
    %2541 = vmatpush1.msra.mxu0 %v64
    %2542 = vmatprep.subr.mxu0 0.0
    %2543 = vmatpush1.msra.mxu0 0.0
    %2544 = vmatprep.subr.mxu0 0.0
    %2545 = vmatpush1.msra.mxu0 0.0
    %2546 = vmatprep.subr.mxu0 0.0
    %2547 = vmatpush1.msra.mxu0 0.0
    %2548 = vmatprep.subr.mxu0 0.0
    %2549 = vmatpush1.msra.mxu0 0.0
    %2550 = vmatprep.subr.mxu0 0.0
    %2551 = vmatpush1.msra.mxu0 0.0
    %2552 = vmatprep.subr.mxu0 0.0
    %2553 = vmatpush1.msra.mxu0 0.0
    %2554 = vmatprep.subr.mxu0 0.0
    %2555 = vmatpush1.msra.mxu0 0.0
    %2556 = vmatprep.subr.mxu0 0.0
    %2557 = vmatpush1.msra.mxu0 0.0
    %2558 = vmatprep.subr.mxu0 0.0
    %2559 = vmatpush1.msra.mxu0 0.0
    %2560 = vmatprep.subr.mxu0 0.0
    %2561 = vmatpush1.msra.mxu0 0.0
    %2562 = vmatprep.subr.mxu0 0.0
    %2563 = vmatpush1.msra.mxu0 0.0
    %2564 = vmatprep.subr.mxu0 0.0
    %2565 = vmatpush1.msra.mxu0 0.0
    %2566 = vmatprep.subr.mxu0 0.0
    %2567 = vmatpush1.msra.mxu0 0.0
    %2568 = vmatprep.subr.mxu0 0.0
    %2569 = vmatpush1.msra.mxu0 0.0
    %2570 = vmatprep.subr.mxu0 0.0
    %2571 = vmatpush1.msra.mxu0 0.0
    %2572 = vmatprep.subr.mxu0 0.0
    %2573 = vmatpush1.msra.mxu0 0.0
    %2574 = vmatprep.subr.mxu0 0.0
    %2575 = vmatpush1.msra.mxu0 0.0
    %2576 = vmatprep.subr.mxu0 0.0
    %2577 = vmatpush1.msra.mxu0 0.0
    %2578 = vmatprep.subr.mxu0 0.0
    %2579 = vmatpush1.msra.mxu0 0.0
    %2580 = vmatprep.subr.mxu0 0.0
    %2581 = vmatpush1.msra.mxu0 0.0
    %2582 = vmatprep.subr.mxu0 0.0
    %2583 = vmatpush1.msra.mxu0 0.0
    %2584 = vmatprep.subr.mxu0 0.0
    %2585 = vmatpush1.msra.mxu0 0.0
    %2586 = vmatprep.subr.mxu0 0.0
    %2587 = vmatpush1.msra.mxu0 0.0
    %2588 = vmatprep.subr.mxu0 0.0
    %2589 = vmatpush1.msra.mxu0 0.0
    %2590 = vmatprep.subr.mxu0 0.0
    %2591 = vmatpush1.msra.mxu0 0.0
    %2592 = vmatprep.subr.mxu0 0.0
    %2593 = vmatpush1.msra.mxu0 0.0
    %2594 = vmatprep.subr.mxu0 0.0
    %2595 = vmatpush1.msra.mxu0 0.0
    %2596 = vmatprep.subr.mxu0 0.0
    %2597 = vmatpush1.msra.mxu0 0.0
    %2598 = vmatprep.mubr.f32.mxu0 0.0
    %2599 = vmatmul.mubr.f32.gmra.mrb[0].mxu0 %v2532
    %v2600 = vpop.f32.mrb[0].mxu0
    %v2601 = vadd.f32 %v442, %v2600
    %v2602 = vpop.f32.mrb[0].mxu0
    %2603 = vdwg.mxu0
    %s2604 = scalar_lea.vmem %s11, 10
    %2605 = vst.msk [vmem:[%s2604] sm:$0x3] %vm519, %v2601
    %s2606 = scalar_lea.vmem %s0, 12
    %v2607 = vld [vmem:[%s2606] sm:$0x3]
    %2608 = vmatprep.subr.mxu0 0.0
    %2609 = vmatpush1.msra.mxu0 %v47
    %2610 = vmatprep.subr.mxu0 0.0
    %2611 = vmatpush1.msra.mxu0 %v48
    %2612 = vmatprep.subr.mxu0 0.0
    %2613 = vmatpush1.msra.mxu0 %v49
    %2614 = vmatprep.subr.mxu0 0.0
    %2615 = vmatpush1.msra.mxu0 %v50
    %2616 = vmatprep.subr.mxu0 0.0
    %2617 = vmatpush1.msra.mxu0 0.0
    %2618 = vmatprep.subr.mxu0 0.0
    %2619 = vmatpush1.msra.mxu0 0.0
    %2620 = vmatprep.subr.mxu0 0.0
    %2621 = vmatpush1.msra.mxu0 0.0
    %2622 = vmatprep.subr.mxu0 0.0
    %2623 = vmatpush1.msra.mxu0 0.0
    %2624 = vmatprep.subr.mxu0 0.0
    %2625 = vmatpush1.msra.mxu0 0.0
    %2626 = vmatprep.subr.mxu0 0.0
    %2627 = vmatpush1.msra.mxu0 0.0
    %2628 = vmatprep.subr.mxu0 0.0
    %2629 = vmatpush1.msra.mxu0 0.0
    %2630 = vmatprep.subr.mxu0 0.0
    %2631 = vmatpush1.msra.mxu0 0.0
    %2632 = vmatprep.subr.mxu0 0.0
    %2633 = vmatpush1.msra.mxu0 0.0
    %2634 = vmatprep.subr.mxu0 0.0
    %2635 = vmatpush1.msra.mxu0 0.0
    %2636 = vmatprep.subr.mxu0 0.0
    %2637 = vmatpush1.msra.mxu0 0.0
    %2638 = vmatprep.subr.mxu0 0.0
    %2639 = vmatpush1.msra.mxu0 0.0
    %2640 = vmatprep.subr.mxu0 0.0
    %2641 = vmatpush1.msra.mxu0 0.0
    %2642 = vmatprep.subr.mxu0 0.0
    %2643 = vmatpush1.msra.mxu0 0.0
    %2644 = vmatprep.subr.mxu0 0.0
    %2645 = vmatpush1.msra.mxu0 0.0
    %2646 = vmatprep.subr.mxu0 0.0
    %2647 = vmatpush1.msra.mxu0 0.0
    %2648 = vmatprep.subr.mxu0 0.0
    %2649 = vmatpush1.msra.mxu0 0.0
    %2650 = vmatprep.subr.mxu0 0.0
    %2651 = vmatpush1.msra.mxu0 0.0
    %2652 = vmatprep.subr.mxu0 0.0
    %2653 = vmatpush1.msra.mxu0 0.0
    %2654 = vmatprep.subr.mxu0 0.0
    %2655 = vmatpush1.msra.mxu0 0.0
    %2656 = vmatprep.subr.mxu0 0.0
    %2657 = vmatpush1.msra.mxu0 0.0
    %2658 = vmatprep.subr.mxu0 0.0
    %2659 = vmatpush1.msra.mxu0 0.0
    %2660 = vmatprep.subr.mxu0 0.0
    %2661 = vmatpush1.msra.mxu0 0.0
    %2662 = vmatprep.subr.mxu0 0.0
    %2663 = vmatpush1.msra.mxu0 0.0
    %2664 = vmatprep.subr.mxu0 0.0
    %2665 = vmatpush1.msra.mxu0 0.0
    %2666 = vmatprep.subr.mxu0 0.0
    %2667 = vmatpush1.msra.mxu0 0.0
    %2668 = vmatprep.subr.mxu0 0.0
    %2669 = vmatpush1.msra.mxu0 0.0
    %2670 = vmatprep.subr.mxu0 0.0
    %2671 = vmatpush1.msra.mxu0 0.0
    %2672 = vmatprep.mubr.f32.mxu0 0.0
    %2673 = vmatmul.mubr.f32.gmra.mrb[0].mxu0 %v2432
    %v2674 = vpop.f32.mrb[0].mxu0
    %v2675 = vadd.f32 0.0, %v2674
    %v2676 = vpop.f32.mrb[0].mxu0
    %2677 = vdwg.mxu0
    %v2679 = vsel %vm73, %v2607, 0
    %2681 = vmatprep.subr.mxu0 0.0
    %2682 = vmatpush1.msra.mxu0 %v43
    %2683 = vmatprep.subr.mxu0 0.0
    %2684 = vmatpush1.msra.mxu0 %v44
    %2685 = vmatprep.subr.mxu0 0.0
    %2686 = vmatpush1.msra.mxu0 %v45
    %2687 = vmatprep.subr.mxu0 0.0
    %2688 = vmatpush1.msra.mxu0 %v46
    %2689 = vmatprep.subr.mxu0 0.0
    %2690 = vmatpush1.msra.mxu0 0.0
    %2691 = vmatprep.subr.mxu0 0.0
    %2692 = vmatpush1.msra.mxu0 0.0
    %2693 = vmatprep.subr.mxu0 0.0
    %2694 = vmatpush1.msra.mxu0 0.0
    %2695 = vmatprep.subr.mxu0 0.0
    %2696 = vmatpush1.msra.mxu0 0.0
    %2697 = vmatprep.subr.mxu0 0.0
    %2698 = vmatpush1.msra.mxu0 0.0
    %2699 = vmatprep.subr.mxu0 0.0
    %2700 = vmatpush1.msra.mxu0 0.0
    %2701 = vmatprep.subr.mxu0 0.0
    %2702 = vmatpush1.msra.mxu0 0.0
    %2703 = vmatprep.subr.mxu0 0.0
    %2704 = vmatpush1.msra.mxu0 0.0
    %2705 = vmatprep.subr.mxu0 0.0
    %2706 = vmatpush1.msra.mxu0 0.0
    %2707 = vmatprep.subr.mxu0 0.0
    %2708 = vmatpush1.msra.mxu0 0.0
    %2709 = vmatprep.subr.mxu0 0.0
    %2710 = vmatpush1.msra.mxu0 0.0
    %2711 = vmatprep.subr.mxu0 0.0
    %2712 = vmatpush1.msra.mxu0 0.0
    %2713 = vmatprep.subr.mxu0 0.0
    %2714 = vmatpush1.msra.mxu0 0.0
    %2715 = vmatprep.subr.mxu0 0.0
    %2716 = vmatpush1.msra.mxu0 0.0
    %2717 = vmatprep.subr.mxu0 0.0
    %2718 = vmatpush1.msra.mxu0 0.0
    %2719 = vmatprep.subr.mxu0 0.0
    %2720 = vmatpush1.msra.mxu0 0.0
    %2721 = vmatprep.subr.mxu0 0.0
    %2722 = vmatpush1.msra.mxu0 0.0
    %2723 = vmatprep.subr.mxu0 0.0
    %2724 = vmatpush1.msra.mxu0 0.0
    %2725 = vmatprep.subr.mxu0 0.0
    %2726 = vmatpush1.msra.mxu0 0.0
    %2727 = vmatprep.subr.mxu0 0.0
    %2728 = vmatpush1.msra.mxu0 0.0
    %2729 = vmatprep.subr.mxu0 0.0
    %2730 = vmatpush1.msra.mxu0 0.0
    %2731 = vmatprep.subr.mxu0 0.0
    %2732 = vmatpush1.msra.mxu0 0.0
    %2733 = vmatprep.subr.mxu0 0.0
    %2734 = vmatpush1.msra.mxu0 0.0
    %2735 = vmatprep.subr.mxu0 0.0
    %2736 = vmatpush1.msra.mxu0 0.0
    %2737 = vmatprep.subr.mxu0 0.0
    %2738 = vmatpush1.msra.mxu0 0.0
    %2739 = vmatprep.subr.mxu0 0.0
    %2740 = vmatpush1.msra.mxu0 0.0
    %2741 = vmatprep.subr.mxu0 0.0
    %2742 = vmatpush1.msra.mxu0 0.0
    %2743 = vmatprep.subr.mxu0 0.0
    %2744 = vmatpush1.msra.mxu0 0.0
    %2745 = vmatprep.mubr.f32.mxu0 0.0
    %2746 = vmatmul.mubr.f32.gmra.mrb[0].mxu0 %v2679
    %v2747 = vpop.f32.mrb[0].mxu0
    %v2748 = vadd.f32 %v2675, %v2747
    %v2749 = vpop.f32.mrb[0].mxu0
    %2750 = vdwg.mxu0
    %v2751 = vadd.f32 %v2748, %v224
    %v2752 = vxor.u32 %v2751, 2147483648
    %v2753 = vmul.f32 %v2752, 1.442695
    %v2754 = vpow.pop %v2753
    %v2755 = vadd.f32 %v2754, 1.0
    %v2756 = vrcp.pop %v2755
    %v2757 = vmul.f32 1.0, %v2756
    %v2758 = vtanh.pop %v2751
    %v2759 = vmul.f32 %v2757, %v2352
    %2761 = vrot.lane.b32.xlu0 %v2758, 64
    %v2762 = vpop.permute.xlu0 %2761
    %v2764 = vmul.f32 %v2757, %v2762
    %2766 = vrot.lane.b32.xlu0 %v2764, 32
    %v2767 = vpop.permute.xlu0 %2766
    %v2769 = vadd.f32 %v2759, %v2767
    %v2770 = vtanh.pop %v2769
    %2772 = vrot.lane.b32.xlu0 %v2770, 64
    %v2773 = vpop.permute.xlu0 %2772
    %v2775 = vmul.f32 %v2757, %v2773
    %2776 = vmatprep.subr.mxu0 0.0
    %2777 = vmatpush1.msra.mxu0 %v56
    %2778 = vmatprep.subr.mxu0 0.0
    %2779 = vmatpush1.msra.mxu0 %v57
    %2780 = vmatprep.subr.mxu0 0.0
    %2781 = vmatpush1.msra.mxu0 %v58
    %2782 = vmatprep.subr.mxu0 0.0
    %2783 = vmatpush1.msra.mxu0 %v59
    %2784 = vmatprep.subr.mxu0 0.0
    %2785 = vmatpush1.msra.mxu0 0.0
    %2786 = vmatprep.subr.mxu0 0.0
    %2787 = vmatpush1.msra.mxu0 0.0
    %2788 = vmatprep.subr.mxu0 0.0
    %2789 = vmatpush1.msra.mxu0 0.0
    %2790 = vmatprep.subr.mxu0 0.0
    %2791 = vmatpush1.msra.mxu0 0.0
    %2792 = vmatprep.subr.mxu0 0.0
    %2793 = vmatpush1.msra.mxu0 0.0
    %2794 = vmatprep.subr.mxu0 0.0
    %2795 = vmatpush1.msra.mxu0 0.0
    %2796 = vmatprep.subr.mxu0 0.0
    %2797 = vmatpush1.msra.mxu0 0.0
    %2798 = vmatprep.subr.mxu0 0.0
    %2799 = vmatpush1.msra.mxu0 0.0
    %2800 = vmatprep.subr.mxu0 0.0
    %2801 = vmatpush1.msra.mxu0 0.0
    %2802 = vmatprep.subr.mxu0 0.0
    %2803 = vmatpush1.msra.mxu0 0.0
    %2804 = vmatprep.subr.mxu0 0.0
    %2805 = vmatpush1.msra.mxu0 0.0
    %2806 = vmatprep.subr.mxu0 0.0
    %2807 = vmatpush1.msra.mxu0 0.0
    %2808 = vmatprep.subr.mxu0 0.0
    %2809 = vmatpush1.msra.mxu0 0.0
    %2810 = vmatprep.subr.mxu0 0.0
    %2811 = vmatpush1.msra.mxu0 0.0
    %2812 = vmatprep.subr.mxu0 0.0
    %2813 = vmatpush1.msra.mxu0 0.0
    %2814 = vmatprep.subr.mxu0 0.0
    %2815 = vmatpush1.msra.mxu0 0.0
    %2816 = vmatprep.subr.mxu0 0.0
    %2817 = vmatpush1.msra.mxu0 0.0
    %2818 = vmatprep.subr.mxu0 0.0
    %2819 = vmatpush1.msra.mxu0 0.0
    %2820 = vmatprep.subr.mxu0 0.0
    %2821 = vmatpush1.msra.mxu0 0.0
    %2822 = vmatprep.subr.mxu0 0.0
    %2823 = vmatpush1.msra.mxu0 0.0
    %2824 = vmatprep.subr.mxu0 0.0
    %2825 = vmatpush1.msra.mxu0 0.0
    %2826 = vmatprep.subr.mxu0 0.0
    %2827 = vmatpush1.msra.mxu0 0.0
    %2828 = vmatprep.subr.mxu0 0.0
    %2829 = vmatpush1.msra.mxu0 0.0
    %2830 = vmatprep.subr.mxu0 0.0
    %2831 = vmatpush1.msra.mxu0 0.0
    %2832 = vmatprep.subr.mxu0 0.0
    %2833 = vmatpush1.msra.mxu0 0.0
    %2834 = vmatprep.subr.mxu0 0.0
    %2835 = vmatpush1.msra.mxu0 0.0
    %2836 = vmatprep.subr.mxu0 0.0
    %2837 = vmatpush1.msra.mxu0 0.0
    %2838 = vmatprep.subr.mxu0 0.0
    %2839 = vmatpush1.msra.mxu0 0.0
    %2840 = vmatprep.mubr.f32.mxu0 0.0
    %2841 = vmatmul.mubr.f32.gmra.mrb[0].mxu0 %v2532
    %v2842 = vpop.f32.mrb[0].mxu0
    %v2843 = vadd.f32 0.0, %v2842
    %v2844 = vpop.f32.mrb[0].mxu0
    %2845 = vdwg.mxu0
    %2847 = vrot.lane.b32.xlu0 %v2775, 32
    %v2848 = vpop.permute.xlu0 %2847
    %v2849 = vsel %vm73, %v2848, 0
    %2851 = vmatprep.subr.mxu0 0.0
    %2852 = vmatpush1.msra.mxu0 %v52
    %2853 = vmatprep.subr.mxu0 0.0
    %2854 = vmatpush1.msra.mxu0 %v53
    %2855 = vmatprep.subr.mxu0 0.0
    %2856 = vmatpush1.msra.mxu0 %v54
    %2857 = vmatprep.subr.mxu0 0.0
    %2858 = vmatpush1.msra.mxu0 %v55
    %2859 = vmatprep.subr.mxu0 0.0
    %2860 = vmatpush1.msra.mxu0 0.0
    %2861 = vmatprep.subr.mxu0 0.0
    %2862 = vmatpush1.msra.mxu0 0.0
    %2863 = vmatprep.subr.mxu0 0.0
    %2864 = vmatpush1.msra.mxu0 0.0
    %2865 = vmatprep.subr.mxu0 0.0
    %2866 = vmatpush1.msra.mxu0 0.0
    %2867 = vmatprep.subr.mxu0 0.0
    %2868 = vmatpush1.msra.mxu0 0.0
    %2869 = vmatprep.subr.mxu0 0.0
    %2870 = vmatpush1.msra.mxu0 0.0
    %2871 = vmatprep.subr.mxu0 0.0
    %2872 = vmatpush1.msra.mxu0 0.0
    %2873 = vmatprep.subr.mxu0 0.0
    %2874 = vmatpush1.msra.mxu0 0.0
    %2875 = vmatprep.subr.mxu0 0.0
    %2876 = vmatpush1.msra.mxu0 0.0
    %2877 = vmatprep.subr.mxu0 0.0
    %2878 = vmatpush1.msra.mxu0 0.0
    %2879 = vmatprep.subr.mxu0 0.0
    %2880 = vmatpush1.msra.mxu0 0.0
    %2881 = vmatprep.subr.mxu0 0.0
    %2882 = vmatpush1.msra.mxu0 0.0
    %2883 = vmatprep.subr.mxu0 0.0
    %2884 = vmatpush1.msra.mxu0 0.0
    %2885 = vmatprep.subr.mxu0 0.0
    %2886 = vmatpush1.msra.mxu0 0.0
    %2887 = vmatprep.subr.mxu0 0.0
    %2888 = vmatpush1.msra.mxu0 0.0
    %2889 = vmatprep.subr.mxu0 0.0
    %2890 = vmatpush1.msra.mxu0 0.0
    %2891 = vmatprep.subr.mxu0 0.0
    %2892 = vmatpush1.msra.mxu0 0.0
    %2893 = vmatprep.subr.mxu0 0.0
    %2894 = vmatpush1.msra.mxu0 0.0
    %2895 = vmatprep.subr.mxu0 0.0
    %2896 = vmatpush1.msra.mxu0 0.0
    %2897 = vmatprep.subr.mxu0 0.0
    %2898 = vmatpush1.msra.mxu0 0.0
    %2899 = vmatprep.subr.mxu0 0.0
    %2900 = vmatpush1.msra.mxu0 0.0
    %2901 = vmatprep.subr.mxu0 0.0
    %2902 = vmatpush1.msra.mxu0 0.0
    %2903 = vmatprep.subr.mxu0 0.0
    %2904 = vmatpush1.msra.mxu0 0.0
    %2905 = vmatprep.subr.mxu0 0.0
    %2906 = vmatpush1.msra.mxu0 0.0
    %2907 = vmatprep.subr.mxu0 0.0
    %2908 = vmatpush1.msra.mxu0 0.0
    %2909 = vmatprep.subr.mxu0 0.0
    %2910 = vmatpush1.msra.mxu0 0.0
    %2911 = vmatprep.subr.mxu0 0.0
    %2912 = vmatpush1.msra.mxu0 0.0
    %2913 = vmatprep.subr.mxu0 0.0
    %2914 = vmatpush1.msra.mxu0 0.0
    %2915 = vmatprep.mubr.f32.mxu0 0.0
    %2916 = vmatmul.mubr.f32.gmra.mrb[0].mxu0 %v2849
    %v2917 = vpop.f32.mrb[0].mxu0
    %v2918 = vadd.f32 %v2843, %v2917
    %v2919 = vpop.f32.mrb[0].mxu0
    %2920 = vdwg.mxu0
    %v2921 = vadd.f32 %v2918, %v407
    %v2922 = vxor.u32 %v2921, 2147483648
    %v2923 = vmul.f32 %v2922, 1.442695
    %v2924 = vpow.pop %v2923
    %v2925 = vadd.f32 %v2924, 1.0
    %v2926 = vrcp.pop %v2925
    %v2927 = vmul.f32 1.0, %v2926
    %v2928 = vtanh.pop %v2921
    %v2929 = vmul.f32 %v2927, %v2522
    %2931 = vrot.lane.b32.xlu0 %v2928, 64
    %v2932 = vpop.permute.xlu0 %2931
    %v2934 = vmul.f32 %v2927, %v2932
    %2936 = vrot.lane.b32.xlu0 %v2934, 32
    %v2937 = vpop.permute.xlu0 %2936
    %v2939 = vadd.f32 %v2929, %v2937
    %v2940 = vtanh.pop %v2939
    %2942 = vrot.lane.b32.xlu0 %v2940, 64
    %v2943 = vpop.permute.xlu0 %2942
    %v2945 = vmul.f32 %v2927, %v2943
    %2947 = vrot.lane.b32.xlu0 %v2945, 32
    %v2948 = vpop.permute.xlu0 %2947
    %v2949 = vsel %vm73, %v2948, 0
    %2951 = vmatprep.subr.mxu0 0.0
    %2952 = vmatpush1.msra.mxu0 %v61
    %2953 = vmatprep.subr.mxu0 0.0
    %2954 = vmatpush1.msra.mxu0 %v62
    %2955 = vmatprep.subr.mxu0 0.0
    %2956 = vmatpush1.msra.mxu0 %v63
    %2957 = vmatprep.subr.mxu0 0.0
    %2958 = vmatpush1.msra.mxu0 %v64
    %2959 = vmatprep.subr.mxu0 0.0
    %2960 = vmatpush1.msra.mxu0 0.0
    %2961 = vmatprep.subr.mxu0 0.0
    %2962 = vmatpush1.msra.mxu0 0.0
    %2963 = vmatprep.subr.mxu0 0.0
    %2964 = vmatpush1.msra.mxu0 0.0
    %2965 = vmatprep.subr.mxu0 0.0
    %2966 = vmatpush1.msra.mxu0 0.0
    %2967 = vmatprep.subr.mxu0 0.0
    %2968 = vmatpush1.msra.mxu0 0.0
    %2969 = vmatprep.subr.mxu0 0.0
    %2970 = vmatpush1.msra.mxu0 0.0
    %2971 = vmatprep.subr.mxu0 0.0
    %2972 = vmatpush1.msra.mxu0 0.0
    %2973 = vmatprep.subr.mxu0 0.0
    %2974 = vmatpush1.msra.mxu0 0.0
    %2975 = vmatprep.subr.mxu0 0.0
    %2976 = vmatpush1.msra.mxu0 0.0
    %2977 = vmatprep.subr.mxu0 0.0
    %2978 = vmatpush1.msra.mxu0 0.0
    %2979 = vmatprep.subr.mxu0 0.0
    %2980 = vmatpush1.msra.mxu0 0.0
    %2981 = vmatprep.subr.mxu0 0.0
    %2982 = vmatpush1.msra.mxu0 0.0
    %2983 = vmatprep.subr.mxu0 0.0
    %2984 = vmatpush1.msra.mxu0 0.0
    %2985 = vmatprep.subr.mxu0 0.0
    %2986 = vmatpush1.msra.mxu0 0.0
    %2987 = vmatprep.subr.mxu0 0.0
    %2988 = vmatpush1.msra.mxu0 0.0
    %2989 = vmatprep.subr.mxu0 0.0
    %2990 = vmatpush1.msra.mxu0 0.0
    %2991 = vmatprep.subr.mxu0 0.0
    %2992 = vmatpush1.msra.mxu0 0.0
    %2993 = vmatprep.subr.mxu0 0.0
    %2994 = vmatpush1.msra.mxu0 0.0
    %2995 = vmatprep.subr.mxu0 0.0
    %2996 = vmatpush1.msra.mxu0 0.0
    %2997 = vmatprep.subr.mxu0 0.0
    %2998 = vmatpush1.msra.mxu0 0.0
    %2999 = vmatprep.subr.mxu0 0.0
    %3000 = vmatpush1.msra.mxu0 0.0
    %3001 = vmatprep.subr.mxu0 0.0
    %3002 = vmatpush1.msra.mxu0 0.0
    %3003 = vmatprep.subr.mxu0 0.0
    %3004 = vmatpush1.msra.mxu0 0.0
    %3005 = vmatprep.subr.mxu0 0.0
    %3006 = vmatpush1.msra.mxu0 0.0
    %3007 = vmatprep.subr.mxu0 0.0
    %3008 = vmatpush1.msra.mxu0 0.0
    %3009 = vmatprep.subr.mxu0 0.0
    %3010 = vmatpush1.msra.mxu0 0.0
    %3011 = vmatprep.subr.mxu0 0.0
    %3012 = vmatpush1.msra.mxu0 0.0
    %3013 = vmatprep.subr.mxu0 0.0
    %3014 = vmatpush1.msra.mxu0 0.0
    %3015 = vmatprep.mubr.f32.mxu0 0.0
    %3016 = vmatmul.mubr.f32.gmra.mrb[0].mxu0 %v2949
    %v3017 = vpop.f32.mrb[0].mxu0
    %v3018 = vadd.f32 %v442, %v3017
    %v3019 = vpop.f32.mrb[0].mxu0
    %3020 = vdwg.mxu0
    %s3021 = scalar_lea.vmem %s11, 12
    %3022 = vst.msk [vmem:[%s3021] sm:$0x3] %vm519, %v3018
    %s3023 = scalar_lea.vmem %s0, 14
    %v3024 = vld [vmem:[%s3023] sm:$0x3]
    %3025 = vmatprep.subr.mxu0 0.0
    %3026 = vmatpush1.msra.mxu0 %v47
    %3027 = vmatprep.subr.mxu0 0.0
    %3028 = vmatpush1.msra.mxu0 %v48
    %3029 = vmatprep.subr.mxu0 0.0
    %3030 = vmatpush1.msra.mxu0 %v49
    %3031 = vmatprep.subr.mxu0 0.0
    %3032 = vmatpush1.msra.mxu0 %v50
    %3033 = vmatprep.subr.mxu0 0.0
    %3034 = vmatpush1.msra.mxu0 0.0
    %3035 = vmatprep.subr.mxu0 0.0
    %3036 = vmatpush1.msra.mxu0 0.0
    %3037 = vmatprep.subr.mxu0 0.0
    %3038 = vmatpush1.msra.mxu0 0.0
    %3039 = vmatprep.subr.mxu0 0.0
    %3040 = vmatpush1.msra.mxu0 0.0
    %3041 = vmatprep.subr.mxu0 0.0
    %3042 = vmatpush1.msra.mxu0 0.0
    %3043 = vmatprep.subr.mxu0 0.0
    %3044 = vmatpush1.msra.mxu0 0.0
    %3045 = vmatprep.subr.mxu0 0.0
    %3046 = vmatpush1.msra.mxu0 0.0
    %3047 = vmatprep.subr.mxu0 0.0
    %3048 = vmatpush1.msra.mxu0 0.0
    %3049 = vmatprep.subr.mxu0 0.0
    %3050 = vmatpush1.msra.mxu0 0.0
    %3051 = vmatprep.subr.mxu0 0.0
    %3052 = vmatpush1.msra.mxu0 0.0
    %3053 = vmatprep.subr.mxu0 0.0
    %3054 = vmatpush1.msra.mxu0 0.0
    %3055 = vmatprep.subr.mxu0 0.0
    %3056 = vmatpush1.msra.mxu0 0.0
    %3057 = vmatprep.subr.mxu0 0.0
    %3058 = vmatpush1.msra.mxu0 0.0
    %3059 = vmatprep.subr.mxu0 0.0
    %3060 = vmatpush1.msra.mxu0 0.0
    %3061 = vmatprep.subr.mxu0 0.0
    %3062 = vmatpush1.msra.mxu0 0.0
    %3063 = vmatprep.subr.mxu0 0.0
    %3064 = vmatpush1.msra.mxu0 0.0
    %3065 = vmatprep.subr.mxu0 0.0
    %3066 = vmatpush1.msra.mxu0 0.0
    %3067 = vmatprep.subr.mxu0 0.0
    %3068 = vmatpush1.msra.mxu0 0.0
    %3069 = vmatprep.subr.mxu0 0.0
    %3070 = vmatpush1.msra.mxu0 0.0
    %3071 = vmatprep.subr.mxu0 0.0
    %3072 = vmatpush1.msra.mxu0 0.0
    %3073 = vmatprep.subr.mxu0 0.0
    %3074 = vmatpush1.msra.mxu0 0.0
    %3075 = vmatprep.subr.mxu0 0.0
    %3076 = vmatpush1.msra.mxu0 0.0
    %3077 = vmatprep.subr.mxu0 0.0
    %3078 = vmatpush1.msra.mxu0 0.0
    %3079 = vmatprep.subr.mxu0 0.0
    %3080 = vmatpush1.msra.mxu0 0.0
    %3081 = vmatprep.subr.mxu0 0.0
    %3082 = vmatpush1.msra.mxu0 0.0
    %3083 = vmatprep.subr.mxu0 0.0
    %3084 = vmatpush1.msra.mxu0 0.0
    %3085 = vmatprep.subr.mxu0 0.0
    %3086 = vmatpush1.msra.mxu0 0.0
    %3087 = vmatprep.subr.mxu0 0.0
    %3088 = vmatpush1.msra.mxu0 0.0
    %3089 = vmatprep.mubr.f32.mxu0 0.0
    %3090 = vmatmul.mubr.f32.gmra.mrb[0].mxu0 %v2849
    %v3091 = vpop.f32.mrb[0].mxu0
    %v3092 = vadd.f32 0.0, %v3091
    %v3093 = vpop.f32.mrb[0].mxu0
    %3094 = vdwg.mxu0
    %v3096 = vsel %vm73, %v3024, 0
    %3098 = vmatprep.subr.mxu0 0.0
    %3099 = vmatpush1.msra.mxu0 %v43
    %3100 = vmatprep.subr.mxu0 0.0
    %3101 = vmatpush1.msra.mxu0 %v44
    %3102 = vmatprep.subr.mxu0 0.0
    %3103 = vmatpush1.msra.mxu0 %v45
    %3104 = vmatprep.subr.mxu0 0.0
    %3105 = vmatpush1.msra.mxu0 %v46
    %3106 = vmatprep.subr.mxu0 0.0
    %3107 = vmatpush1.msra.mxu0 0.0
    %3108 = vmatprep.subr.mxu0 0.0
    %3109 = vmatpush1.msra.mxu0 0.0
    %3110 = vmatprep.subr.mxu0 0.0
    %3111 = vmatpush1.msra.mxu0 0.0
    %3112 = vmatprep.subr.mxu0 0.0
    %3113 = vmatpush1.msra.mxu0 0.0
    %3114 = vmatprep.subr.mxu0 0.0
    %3115 = vmatpush1.msra.mxu0 0.0
    %3116 = vmatprep.subr.mxu0 0.0
    %3117 = vmatpush1.msra.mxu0 0.0
    %3118 = vmatprep.subr.mxu0 0.0
    %3119 = vmatpush1.msra.mxu0 0.0
    %3120 = vmatprep.subr.mxu0 0.0
    %3121 = vmatpush1.msra.mxu0 0.0
    %3122 = vmatprep.subr.mxu0 0.0
    %3123 = vmatpush1.msra.mxu0 0.0
    %3124 = vmatprep.subr.mxu0 0.0
    %3125 = vmatpush1.msra.mxu0 0.0
    %3126 = vmatprep.subr.mxu0 0.0
    %3127 = vmatpush1.msra.mxu0 0.0
    %3128 = vmatprep.subr.mxu0 0.0
    %3129 = vmatpush1.msra.mxu0 0.0
    %3130 = vmatprep.subr.mxu0 0.0
    %3131 = vmatpush1.msra.mxu0 0.0
    %3132 = vmatprep.subr.mxu0 0.0
    %3133 = vmatpush1.msra.mxu0 0.0
    %3134 = vmatprep.subr.mxu0 0.0
    %3135 = vmatpush1.msra.mxu0 0.0
    %3136 = vmatprep.subr.mxu0 0.0
    %3137 = vmatpush1.msra.mxu0 0.0
    %3138 = vmatprep.subr.mxu0 0.0
    %3139 = vmatpush1.msra.mxu0 0.0
    %3140 = vmatprep.subr.mxu0 0.0
    %3141 = vmatpush1.msra.mxu0 0.0
    %3142 = vmatprep.subr.mxu0 0.0
    %3143 = vmatpush1.msra.mxu0 0.0
    %3144 = vmatprep.subr.mxu0 0.0
    %3145 = vmatpush1.msra.mxu0 0.0
    %3146 = vmatprep.subr.mxu0 0.0
    %3147 = vmatpush1.msra.mxu0 0.0
    %3148 = vmatprep.subr.mxu0 0.0
    %3149 = vmatpush1.msra.mxu0 0.0
    %3150 = vmatprep.subr.mxu0 0.0
    %3151 = vmatpush1.msra.mxu0 0.0
    %3152 = vmatprep.subr.mxu0 0.0
    %3153 = vmatpush1.msra.mxu0 0.0
    %3154 = vmatprep.subr.mxu0 0.0
    %3155 = vmatpush1.msra.mxu0 0.0
    %3156 = vmatprep.subr.mxu0 0.0
    %3157 = vmatpush1.msra.mxu0 0.0
    %3158 = vmatprep.subr.mxu0 0.0
    %3159 = vmatpush1.msra.mxu0 0.0
    %3160 = vmatprep.subr.mxu0 0.0
    %3161 = vmatpush1.msra.mxu0 0.0
    %3162 = vmatprep.mubr.f32.mxu0 0.0
    %3163 = vmatmul.mubr.f32.gmra.mrb[0].mxu0 %v3096
    %v3164 = vpop.f32.mrb[0].mxu0
    %v3165 = vadd.f32 %v3092, %v3164
    %v3166 = vpop.f32.mrb[0].mxu0
    %3167 = vdwg.mxu0
    %v3168 = vadd.f32 %v3165, %v224
    %v3169 = vxor.u32 %v3168, 2147483648
    %v3170 = vmul.f32 %v3169, 1.442695
    %v3171 = vpow.pop %v3170
    %v3172 = vadd.f32 %v3171, 1.0
    %v3173 = vrcp.pop %v3172
    %v3174 = vmul.f32 1.0, %v3173
    %v3175 = vtanh.pop %v3168
    %v3176 = vmul.f32 %v3174, %v2769
    %3178 = vrot.lane.b32.xlu0 %v3175, 64
    %v3179 = vpop.permute.xlu0 %3178
    %v3181 = vmul.f32 %v3174, %v3179
    %3183 = vrot.lane.b32.xlu0 %v3181, 32
    %v3184 = vpop.permute.xlu0 %3183
    %v3186 = vadd.f32 %v3176, %v3184
    %v3187 = vtanh.pop %v3186
    %3189 = vrot.lane.b32.xlu0 %v3187, 64
    %v3190 = vpop.permute.xlu0 %3189
    %v3192 = vmul.f32 %v3174, %v3190
    %3193 = vmatprep.subr.mxu0 0.0
    %3194 = vmatpush1.msra.mxu0 %v56
    %3195 = vmatprep.subr.mxu0 0.0
    %3196 = vmatpush1.msra.mxu0 %v57
    %3197 = vmatprep.subr.mxu0 0.0
    %3198 = vmatpush1.msra.mxu0 %v58
    %3199 = vmatprep.subr.mxu0 0.0
    %3200 = vmatpush1.msra.mxu0 %v59
    %3201 = vmatprep.subr.mxu0 0.0
    %3202 = vmatpush1.msra.mxu0 0.0
    %3203 = vmatprep.subr.mxu0 0.0
    %3204 = vmatpush1.msra.mxu0 0.0
    %3205 = vmatprep.subr.mxu0 0.0
    %3206 = vmatpush1.msra.mxu0 0.0
    %3207 = vmatprep.subr.mxu0 0.0
    %3208 = vmatpush1.msra.mxu0 0.0
    %3209 = vmatprep.subr.mxu0 0.0
    %3210 = vmatpush1.msra.mxu0 0.0
    %3211 = vmatprep.subr.mxu0 0.0
    %3212 = vmatpush1.msra.mxu0 0.0
    %3213 = vmatprep.subr.mxu0 0.0
    %3214 = vmatpush1.msra.mxu0 0.0
    %3215 = vmatprep.subr.mxu0 0.0
    %3216 = vmatpush1.msra.mxu0 0.0
    %3217 = vmatprep.subr.mxu0 0.0
    %3218 = vmatpush1.msra.mxu0 0.0
    %3219 = vmatprep.subr.mxu0 0.0
    %3220 = vmatpush1.msra.mxu0 0.0
    %3221 = vmatprep.subr.mxu0 0.0
    %3222 = vmatpush1.msra.mxu0 0.0
    %3223 = vmatprep.subr.mxu0 0.0
    %3224 = vmatpush1.msra.mxu0 0.0
    %3225 = vmatprep.subr.mxu0 0.0
    %3226 = vmatpush1.msra.mxu0 0.0
    %3227 = vmatprep.subr.mxu0 0.0
    %3228 = vmatpush1.msra.mxu0 0.0
    %3229 = vmatprep.subr.mxu0 0.0
    %3230 = vmatpush1.msra.mxu0 0.0
    %3231 = vmatprep.subr.mxu0 0.0
    %3232 = vmatpush1.msra.mxu0 0.0
    %3233 = vmatprep.subr.mxu0 0.0
    %3234 = vmatpush1.msra.mxu0 0.0
    %3235 = vmatprep.subr.mxu0 0.0
    %3236 = vmatpush1.msra.mxu0 0.0
    %3237 = vmatprep.subr.mxu0 0.0
    %3238 = vmatpush1.msra.mxu0 0.0
    %3239 = vmatprep.subr.mxu0 0.0
    %3240 = vmatpush1.msra.mxu0 0.0
    %3241 = vmatprep.subr.mxu0 0.0
    %3242 = vmatpush1.msra.mxu0 0.0
    %3243 = vmatprep.subr.mxu0 0.0
    %3244 = vmatpush1.msra.mxu0 0.0
    %3245 = vmatprep.subr.mxu0 0.0
    %3246 = vmatpush1.msra.mxu0 0.0
    %3247 = vmatprep.subr.mxu0 0.0
    %3248 = vmatpush1.msra.mxu0 0.0
    %3249 = vmatprep.subr.mxu0 0.0
    %3250 = vmatpush1.msra.mxu0 0.0
    %3251 = vmatprep.subr.mxu0 0.0
    %3252 = vmatpush1.msra.mxu0 0.0
    %3253 = vmatprep.subr.mxu0 0.0
    %3254 = vmatpush1.msra.mxu0 0.0
    %3255 = vmatprep.subr.mxu0 0.0
    %3256 = vmatpush1.msra.mxu0 0.0
    %3257 = vmatprep.mubr.f32.mxu0 0.0
    %3258 = vmatmul.mubr.f32.gmra.mrb[0].mxu0 %v2949
    %v3259 = vpop.f32.mrb[0].mxu0
    %v3260 = vadd.f32 0.0, %v3259
    %v3261 = vpop.f32.mrb[0].mxu0
    %3262 = vdwg.mxu0
    %3264 = vrot.lane.b32.xlu0 %v3192, 32
    %v3265 = vpop.permute.xlu0 %3264
    %v3266 = vsel %vm73, %v3265, 0
    %3268 = vmatprep.subr.mxu0 0.0
    %3269 = vmatpush1.msra.mxu0 %v52
    %3270 = vmatprep.subr.mxu0 0.0
    %3271 = vmatpush1.msra.mxu0 %v53
    %3272 = vmatprep.subr.mxu0 0.0
    %3273 = vmatpush1.msra.mxu0 %v54
    %3274 = vmatprep.subr.mxu0 0.0
    %3275 = vmatpush1.msra.mxu0 %v55
    %3276 = vmatprep.subr.mxu0 0.0
    %3277 = vmatpush1.msra.mxu0 0.0
    %3278 = vmatprep.subr.mxu0 0.0
    %3279 = vmatpush1.msra.mxu0 0.0
    %3280 = vmatprep.subr.mxu0 0.0
    %3281 = vmatpush1.msra.mxu0 0.0
    %3282 = vmatprep.subr.mxu0 0.0
    %3283 = vmatpush1.msra.mxu0 0.0
    %3284 = vmatprep.subr.mxu0 0.0
    %3285 = vmatpush1.msra.mxu0 0.0
    %3286 = vmatprep.subr.mxu0 0.0
    %3287 = vmatpush1.msra.mxu0 0.0
    %3288 = vmatprep.subr.mxu0 0.0
    %3289 = vmatpush1.msra.mxu0 0.0
    %3290 = vmatprep.subr.mxu0 0.0
    %3291 = vmatpush1.msra.mxu0 0.0
    %3292 = vmatprep.subr.mxu0 0.0
    %3293 = vmatpush1.msra.mxu0 0.0
    %3294 = vmatprep.subr.mxu0 0.0
    %3295 = vmatpush1.msra.mxu0 0.0
    %3296 = vmatprep.subr.mxu0 0.0
    %3297 = vmatpush1.msra.mxu0 0.0
    %3298 = vmatprep.subr.mxu0 0.0
    %3299 = vmatpush1.msra.mxu0 0.0
    %3300 = vmatprep.subr.mxu0 0.0
    %3301 = vmatpush1.msra.mxu0 0.0
    %3302 = vmatprep.subr.mxu0 0.0
    %3303 = vmatpush1.msra.mxu0 0.0
    %3304 = vmatprep.subr.mxu0 0.0
    %3305 = vmatpush1.msra.mxu0 0.0
    %3306 = vmatprep.subr.mxu0 0.0
    %3307 = vmatpush1.msra.mxu0 0.0
    %3308 = vmatprep.subr.mxu0 0.0
    %3309 = vmatpush1.msra.mxu0 0.0
    %3310 = vmatprep.subr.mxu0 0.0
    %3311 = vmatpush1.msra.mxu0 0.0
    %3312 = vmatprep.subr.mxu0 0.0
    %3313 = vmatpush1.msra.mxu0 0.0
    %3314 = vmatprep.subr.mxu0 0.0
    %3315 = vmatpush1.msra.mxu0 0.0
    %3316 = vmatprep.subr.mxu0 0.0
    %3317 = vmatpush1.msra.mxu0 0.0
    %3318 = vmatprep.subr.mxu0 0.0
    %3319 = vmatpush1.msra.mxu0 0.0
    %3320 = vmatprep.subr.mxu0 0.0
    %3321 = vmatpush1.msra.mxu0 0.0
    %3322 = vmatprep.subr.mxu0 0.0
    %3323 = vmatpush1.msra.mxu0 0.0
    %3324 = vmatprep.subr.mxu0 0.0
    %3325 = vmatpush1.msra.mxu0 0.0
    %3326 = vmatprep.subr.mxu0 0.0
    %3327 = vmatpush1.msra.mxu0 0.0
    %3328 = vmatprep.subr.mxu0 0.0
    %3329 = vmatpush1.msra.mxu0 0.0
    %3330 = vmatprep.subr.mxu0 0.0
    %3331 = vmatpush1.msra.mxu0 0.0
    %3332 = vmatprep.mubr.f32.mxu0 0.0
    %3333 = vmatmul.mubr.f32.gmra.mrb[0].mxu0 %v3266
    %v3334 = vpop.f32.mrb[0].mxu0
    %v3335 = vadd.f32 %v3260, %v3334
    %v3336 = vpop.f32.mrb[0].mxu0
    %3337 = vdwg.mxu0
    %v3338 = vadd.f32 %v3335, %v407
    %v3339 = vxor.u32 %v3338, 2147483648
    %v3340 = vmul.f32 %v3339, 1.442695
    %v3341 = vpow.pop %v3340
    %v3342 = vadd.f32 %v3341, 1.0
    %v3343 = vrcp.pop %v3342
    %v3344 = vmul.f32 1.0, %v3343
    %v3345 = vtanh.pop %v3338
    %v3346 = vmul.f32 %v3344, %v2939
    %3348 = vrot.lane.b32.xlu0 %v3345, 64
    %v3349 = vpop.permute.xlu0 %3348
    %v3351 = vmul.f32 %v3344, %v3349
    %3353 = vrot.lane.b32.xlu0 %v3351, 32
    %v3354 = vpop.permute.xlu0 %3353
    %v3356 = vadd.f32 %v3346, %v3354
    %v3357 = vtanh.pop %v3356
    %3359 = vrot.lane.b32.xlu0 %v3357, 64
    %v3360 = vpop.permute.xlu0 %3359
    %v3362 = vmul.f32 %v3344, %v3360
    %3364 = vrot.lane.b32.xlu0 %v3362, 32
    %v3365 = vpop.permute.xlu0 %3364
    %v3366 = vsel %vm73, %v3365, 0
    %3368 = vmatprep.subr.mxu0 0.0
    %3369 = vmatpush1.msra.mxu0 %v61
    %3370 = vmatprep.subr.mxu0 0.0
    %3371 = vmatpush1.msra.mxu0 %v62
    %3372 = vmatprep.subr.mxu0 0.0
    %3373 = vmatpush1.msra.mxu0 %v63
    %3374 = vmatprep.subr.mxu0 0.0
    %3375 = vmatpush1.msra.mxu0 %v64
    %3376 = vmatprep.subr.mxu0 0.0
    %3377 = vmatpush1.msra.mxu0 0.0
    %3378 = vmatprep.subr.mxu0 0.0
    %3379 = vmatpush1.msra.mxu0 0.0
    %3380 = vmatprep.subr.mxu0 0.0
    %3381 = vmatpush1.msra.mxu0 0.0
    %3382 = vmatprep.subr.mxu0 0.0
    %3383 = vmatpush1.msra.mxu0 0.0
    %3384 = vmatprep.subr.mxu0 0.0
    %3385 = vmatpush1.msra.mxu0 0.0
    %3386 = vmatprep.subr.mxu0 0.0
    %3387 = vmatpush1.msra.mxu0 0.0
    %3388 = vmatprep.subr.mxu0 0.0
    %3389 = vmatpush1.msra.mxu0 0.0
    %3390 = vmatprep.subr.mxu0 0.0
    %3391 = vmatpush1.msra.mxu0 0.0
    %3392 = vmatprep.subr.mxu0 0.0
    %3393 = vmatpush1.msra.mxu0 0.0
    %3394 = vmatprep.subr.mxu0 0.0
    %3395 = vmatpush1.msra.mxu0 0.0
    %3396 = vmatprep.subr.mxu0 0.0
    %3397 = vmatpush1.msra.mxu0 0.0
    %3398 = vmatprep.subr.mxu0 0.0
    %3399 = vmatpush1.msra.mxu0 0.0
    %3400 = vmatprep.subr.mxu0 0.0
    %3401 = vmatpush1.msra.mxu0 0.0
    %3402 = vmatprep.subr.mxu0 0.0
    %3403 = vmatpush1.msra.mxu0 0.0
    %3404 = vmatprep.subr.mxu0 0.0
    %3405 = vmatpush1.msra.mxu0 0.0
    %3406 = vmatprep.subr.mxu0 0.0
    %3407 = vmatpush1.msra.mxu0 0.0
    %3408 = vmatprep.subr.mxu0 0.0
    %3409 = vmatpush1.msra.mxu0 0.0
    %3410 = vmatprep.subr.mxu0 0.0
    %3411 = vmatpush1.msra.mxu0 0.0
    %3412 = vmatprep.subr.mxu0 0.0
    %3413 = vmatpush1.msra.mxu0 0.0
    %3414 = vmatprep.subr.mxu0 0.0
    %3415 = vmatpush1.msra.mxu0 0.0
    %3416 = vmatprep.subr.mxu0 0.0
    %3417 = vmatpush1.msra.mxu0 0.0
    %3418 = vmatprep.subr.mxu0 0.0
    %3419 = vmatpush1.msra.mxu0 0.0
    %3420 = vmatprep.subr.mxu0 0.0
    %3421 = vmatpush1.msra.mxu0 0.0
    %3422 = vmatprep.subr.mxu0 0.0
    %3423 = vmatpush1.msra.mxu0 0.0
    %3424 = vmatprep.subr.mxu0 0.0
    %3425 = vmatpush1.msra.mxu0 0.0
    %3426 = vmatprep.subr.mxu0 0.0
    %3427 = vmatpush1.msra.mxu0 0.0
    %3428 = vmatprep.subr.mxu0 0.0
    %3429 = vmatpush1.msra.mxu0 0.0
    %3430 = vmatprep.subr.mxu0 0.0
    %3431 = vmatpush1.msra.mxu0 0.0
    %3432 = vmatprep.mubr.f32.mxu0 0.0
    %3433 = vmatmul.mubr.f32.gmra.mrb[0].mxu0 %v3366
    %v3434 = vpop.f32.mrb[0].mxu0
    %v3435 = vadd.f32 %v442, %v3434
    %v3436 = vpop.f32.mrb[0].mxu0
    %3437 = vdwg.mxu0
    %s3438 = scalar_lea.vmem %s11, 14
    %3439 = vst.msk [vmem:[%s3438] sm:$0x3] %vm519, %v3435
    %3441 = vst.msk [vmem:[#allocation2] sm:$0x3] %vm519, %v3265
    %3443 = vrot.lane.b32.xlu0 %v3186, 96
    %v3444 = vpop.permute.xlu0 %3443
    %3446 = vst.msk [vmem:[#allocation4] sm:$0x3] %vm519, %v3444
    %s3448 = scalar_lea.vmem [#allocation2], 2
    %3449 = vst.msk [vmem:[%s3448] sm:$0x3] %vm519, %v3365
    %3451 = vrot.lane.b32.xlu0 %v3356, 96
    %v3452 = vpop.permute.xlu0 %3451
    %s3454 = scalar_lea.vmem [#allocation4], 2
    %3455 = vst.msk [vmem:[%s3454] sm:$0x3] %vm519, %v3452
    // Predicated region
    $region46: #{molecule_rnn_forward.1} parent=1 // pred_check
      _
    $region47: #{molecule_rnn_forward.1} parent=1 // pred_check_branch
      %3457 = sbr.rel (0) target = $region49
    $region48: #{molecule_rnn_forward.1} parent=1 // pred_region
      _
    $region49: #{molecule_rnn_forward.1} parent=1 // pred_fallthru
      _
    // Predicated region
    $region50: #{molecule_rnn_forward.1} parent=1 // pred_check
      _
    $region51: #{molecule_rnn_forward.1} parent=1 // pred_check_branch
      %3459 = sbr.rel (0) target = $region53
    $region52: #{molecule_rnn_forward.1} parent=1 // pred_region
      %s3461 = ssub.s32 64, 64
      %3462 = vsyncadd [#allocation3], %s3461
      %s3463 = sshll.u32 [#allocation2], 4
      %s3464 = int_to_ptr.vmem [resolvable:$true] %s3463
      %3469 = dma.vmem_to_hbm [thread:$0]  %s3464, 64, %s12, [#allocation3], 32, 32, 2
    $region53: #{molecule_rnn_forward.1} parent=1 // pred_fallthru
      _
    // Predicated region
    $region54: #{molecule_rnn_forward.1} parent=1 // pred_check
      _
    $region55: #{molecule_rnn_forward.1} parent=1 // pred_check_branch
      %3471 = sbr.rel (0) target = $region57
    $region56: #{molecule_rnn_forward.1} parent=1 // pred_region
      %s3473 = ssub.s32 64, 64
      %3474 = vsyncadd [#allocation5], %s3473
      %s3475 = sshll.u32 [#allocation4], 4
      %s3476 = int_to_ptr.vmem [resolvable:$true] %s3475
      %3481 = dma.vmem_to_hbm [thread:$0]  %s3476, 64, %s13, [#allocation5], 32, 32, 2
    $region57: #{molecule_rnn_forward.1} parent=1 // pred_fallthru
      _
    // Predicated region
    $region58: #{molecule_rnn_forward.1} parent=1 // pred_check
      _
    $region59: #{molecule_rnn_forward.1} parent=1 // pred_check_branch
      %3483 = sbr.rel (0) target = $region61
    $region60: #{molecule_rnn_forward.1} parent=1 // pred_region
      _
    $region61: #{molecule_rnn_forward.1} parent=1 // pred_fallthru
      _
    // Predicated region
    $region62: #{molecule_rnn_forward.1} parent=1 // pred_check
      _
    $region63: #{molecule_rnn_forward.1} parent=1 // pred_check_branch
      %3485 = sbr.rel (0) target = $region65
    $region64: #{molecule_rnn_forward.1} parent=1 // pred_region
      %3486 = dma.done [#allocation3], 64
    $region65: #{molecule_rnn_forward.1} parent=1 // pred_fallthru
      _
    // Predicated region
    $region66: #{molecule_rnn_forward.1} parent=1 // pred_check
      _
    $region67: #{molecule_rnn_forward.1} parent=1 // pred_check_branch
      %3488 = sbr.rel (0) target = $region69
    $region68: #{molecule_rnn_forward.1} parent=1 // pred_region
      %3489 = dma.done [#allocation5], 64
    $region69: #{molecule_rnn_forward.1} parent=1 // pred_fallthru
      _
    %3490 = vsyncpa [#allocation3], 1
    %3491 = vsyncpa [#allocation5], 1

</llo_original>
